<compile_context>
chip_gen: v7x
topology: tpu7x:2x2x1
jax: 0.10.0
libtpu: 0.0.40
codegen_flags: <defaults>
</compile_context>

<pallas_src>
import functools
import math

import jax
import jax.numpy as jnp
import numpy as np
from jax import lax
from jax.experimental import pallas as pl
from jax.experimental.pallas import tpu as pltpu


def _tpu_hw_params():
    """(physical VMEM bytes per TensorCore, TensorCores per chip) — best effort."""
    vmem_bytes = 64 * 1024 * 1024  # conservative default (v7x per-TC VMEM)
    try:
        info = pltpu.get_tpu_info()
        vmem_bytes = int(getattr(info, "vmem_capacity_bytes", vmem_bytes))
    except Exception:
        pass
    num_tc = 1
    try:
        dev = jax.devices()[0]
        kind = str(getattr(dev, "device_kind", "")).lower().replace(" ", "")
        n = getattr(dev, "num_cores", None)
        if isinstance(n, int) and n > 0:
            num_tc = n
        elif "lite" not in kind and any(m in kind for m in ("v4", "v5p", "7x", "v7")):
            num_tc = 2  # megacore / dual-TensorCore parts
    except Exception:
        pass
    return vmem_bytes, num_tc


def _pick_group(bh, lq, lk, d, in_itemsize, out_itemsize, budget, num_tc):
    """Largest divisor G of `bh` whose double-buffered per-step working set fits
    `budget`.  On multi-TensorCore chips prefer a G whose number of grid steps
    divides evenly across the cores (avoids a 2:1 core imbalance)."""

    def step_bytes(g):
        per_head = ((lq * d + 2 * lk * d) * in_itemsize   # q, k, v tiles
                    + lk * 4                               # f32 bias row
                    + lq * d * out_itemsize                # values slab share
                    + lq * lk * 4)                         # logits slab share (f32)
        return 2 * g * per_head                            # x2: double buffering

    divisors = [g for g in range(1, bh + 1) if bh % g == 0]
    fitting = [g for g in divisors if step_bytes(g) <= budget] or [1]
    if num_tc > 1:
        balanced = [g for g in fitting if (bh // g) % num_tc == 0]
        if balanced:
            g = max(balanced)
            return g, step_bytes(g)
    g = max(fitting)
    return g, step_bytes(g)


def _lane_chunk(per_width, group):
    """Heads per store so that each store width is a multiple of 128 lanes;
    falls back to one full-slab store if no aligned chunking divides `group`."""
    c = 1
    while c < group and (c * per_width) % 128 != 0:
        c += 1
    if (c * per_width) % 128 != 0 or group % c != 0:
        c = group
    return c


def _sda_group_kernel(*refs, group, scale, has_bias, vals_chunk, logits_chunk):
    """One grid step: `group` (batch*head) attention slices.

    Ref layout:
      q_ref:      (G, Lq, D)
      k_ref:      (G, Lk, D)
      v_ref:      (G, Lk, D)
      [bias_ref:  (G, 1, Lk) f32 additive key bias (0 / -inf)]   (if has_bias)
      vals_ref:   (1, Lq, G*D)   lane-dense values slab (input dtype)
      logits_ref: (1, Lq, G*Lk)  lane-dense logits slab (f32)
    """
    if has_bias:
        q_ref, k_ref, v_ref, bias_ref, vals_ref, logits_ref = refs
    else:
        q_ref, k_ref, v_ref, vals_ref, logits_ref = refs
        bias_ref = None

    d = q_ref.shape[-1]
    lk = k_ref.shape[-2]

    vals_parts = []
    logit_parts = []
    for g in range(group):  # static unroll; `group` is a small compile-time int
        # Fold 1/sqrt(d_k) into q (Lq*D multiplies instead of Lq*Lk).
        qg = q_ref[g] * scale            # (Lq, D), stays in input dtype
        kg = k_ref[g]                    # (Lk, D)
        vg = v_ref[g]                    # (Lk, D)

        # q @ k^T without materializing k.T: contract the D axis of both.
        logits = lax.dot_general(
            qg, kg,
            dimension_numbers=(((1,), (1,)), ((), ())),
            preferred_element_type=jnp.float32,
        )                                # (Lq, Lk) f32

        if bias_ref is not None:
            # Additive 0 / -inf bias, broadcast over queries.  Identical
            # semantics to masked_fill(-inf)+softmax (incl. NaN rows when a
            # whole key row is masked).
            logits = logits + bias_ref[g]

        # Numerically-stabilized softmax along keys.  Denominator reciprocal on
        # the EUP (approx) + one Newton step keeps ~1e-7 relative error.
        mx = jnp.max(logits, axis=-1, keepdims=True)
        p = jnp.exp(logits - mx)
        denom = jnp.sum(p, axis=-1, keepdims=True)
        r = pl.reciprocal(denom, approx=True)
        r = r * (2.0 - denom * r)
        attn = p * r

        # attention @ v; feed the MXU in the input dtype, accumulate in f32.
        vals = jnp.dot(attn.astype(vg.dtype), vg,
                       preferred_element_type=jnp.float32)

        vals_parts.append(vals.astype(vals_ref.dtype))
        logit_parts.append(logits)

        # 128-lane-aligned chunked stores: bound live vregs while keeping
        # full-width (unmasked) vst on the writeback path.
        if len(vals_parts) == vals_chunk:
            start = (g + 1 - vals_chunk) * d
            chunk = (vals_parts[0] if vals_chunk == 1
                     else jnp.concatenate(vals_parts, axis=-1))
            vals_ref[0, :, start:start + vals_chunk * d] = chunk
            vals_parts = []
        if len(logit_parts) == logits_chunk:
            start = (g + 1 - logits_chunk) * lk
            chunk = (logit_parts[0] if logits_chunk == 1
                     else jnp.concatenate(logit_parts, axis=-1))
            logits_ref[0, :, start:start + logits_chunk * lk] = (
                chunk.astype(logits_ref.dtype))
            logit_parts = []


def _prepare_key_bias(key_padding_mask, B, H, Lk):
    """Collapse a key-padding mask to a (B*H, 1, Lk) f32 additive bias (0/-inf)."""
    if key_padding_mask is None:
        return None
    m = jnp.asarray(key_padding_mask)
    if m.ndim == 4:
        if m.shape[-2] != 1:
            # TODO(synk): per-query attention masks (shape (..., Lq, Lk)) are
            # not supported; the module only ever passes key-padding masks.
            raise NotImplementedError("per-query masks are not supported")
        m = m[..., 0, :]                 # -> (B?, H?, Lk)
    if m.ndim == 1:
        m = m[None, None, :]
    elif m.ndim == 2:
        m = m[:, None, :]
    elif m.ndim != 3:
        raise NotImplementedError(f"unsupported mask rank {m.ndim}")
    m = jnp.broadcast_to(m.astype(jnp.bool_), (B, H, Lk))
    bias = jnp.where(m, jnp.float32(-jnp.inf), jnp.float32(0.0))
    return bias.reshape(B * H, 1, Lk)


def sda_layer(q, k, v, attn_mask=None, key_padding_mask=None):
    """Pallas equivalent of SDALayer.forward.

    q: (B, H, Lq, D), k/v: (B, H, Lk, D)
    key_padding_mask: bool, broadcastable over heads/queries, True == masked.
    Returns (values, attn_logits) exactly like the PyTorch module.
    """
    if attn_mask is not None:
        # Mirrors `assert False` in the PyTorch module.
        raise AssertionError("attn_mask is not supported by SDALayer")

    B, H, Lq, D = q.shape
    Lk = k.shape[-2]
    BH = B * H

    qf = q.reshape(BH, Lq, D)
    kf = k.reshape(BH, Lk, D)
    vf = v.reshape(BH, Lk, D)

    bias = _prepare_key_bias(key_padding_mask, B, H, Lk)
    has_bias = bias is not None

    vmem_bytes, num_tc = _tpu_hw_params()
    # Per-step working-set budget: generous fraction of physical VMEM, capped so
    # double-buffered slabs leave headroom for compiler scratch on every gen.
    budget = min(int(vmem_bytes * 0.4), 28 * 1024 * 1024)
    G, est_step_bytes = _pick_group(BH, Lq, Lk, D, q.dtype.itemsize,
                                    q.dtype.itemsize, budget, num_tc)
    n_blocks = BH // G

    vals_chunk = _lane_chunk(D, G)
    logits_chunk = _lane_chunk(Lk, G)

    # TODO(synk): add an Lk-tiled online-softmax (flash-style) path for long
    # sequences where the f32 (Lq, G*Lk) logits slab no longer fits VMEM even at
    # G=1 (binds first on v7x's 64 MiB VMEM); the module returns full
    # attn_logits, so logits would be streamed out per Lk tile while only the
    # values accumulation uses the online softmax.

    in_specs = [
        pl.BlockSpec((G, Lq, D), lambda i: (i, 0, 0)),
        pl.BlockSpec((G, Lk, D), lambda i: (i, 0, 0)),
        pl.BlockSpec((G, Lk, D), lambda i: (i, 0, 0)),
    ]
    inputs = [qf, kf, vf]
    if has_bias:
        in_specs.append(pl.BlockSpec((G, 1, Lk), lambda i: (i, 0, 0)))
        inputs.append(bias)

    kernel = functools.partial(
        _sda_group_kernel,
        group=G,
        scale=1.0 / math.sqrt(D),
        has_bias=has_bias,
        vals_chunk=vals_chunk,
        logits_chunk=logits_chunk,
    )

    vmem_limit_bytes = int(min(vmem_bytes * 3 // 4,
                               max(est_step_bytes + (4 << 20), 16 << 20)))

    vals_slab, logits_slab = pl.pallas_call(
        kernel,
        grid=(n_blocks,),
        in_specs=in_specs,
        out_specs=[
            pl.BlockSpec((1, Lq, G * D), lambda i: (i, 0, 0)),
            pl.BlockSpec((1, Lq, G * Lk), lambda i: (i, 0, 0)),
        ],
        out_shape=[
            jax.ShapeDtypeStruct((n_blocks, Lq, G * D), q.dtype),
            jax.ShapeDtypeStruct((n_blocks, Lq, G * Lk), jnp.float32),
        ],
        compiler_params=pltpu.CompilerParams(
            dimension_semantics=("parallel",),
            vmem_limit_bytes=vmem_limit_bytes,
        ),
    )(*inputs)

    # Un-interleave the lane-dense slabs back to (B, H, Lq, .) layout.
    # TODO(synk): at production sizes fuse this layout change into the consumer
    # (or accept the slab layout / bf16 logits) to avoid an extra HBM round trip
    # of the f32 logits; kept here for API parity with the PyTorch module.
    values = (vals_slab.reshape(n_blocks, Lq, G, D)
              .transpose(0, 2, 1, 3)
              .reshape(B, H, Lq, D))
    attn_logits = (logits_slab.reshape(n_blocks, Lq, G, Lk)
                   .transpose(0, 2, 1, 3)
                   .reshape(B, H, Lq, Lk))
    return values, attn_logits


def _reference(q, k, v, key_padding_mask):
    d_k = q.shape[-1]
    logits = jnp.einsum("bhqd,bhkd->bhqk", q, k) / math.sqrt(d_k)
    if key_padding_mask is not None:
        logits = jnp.where(
            jnp.broadcast_to(key_padding_mask, logits.shape),
            -jnp.inf,
            logits,
        )
    attn = jax.nn.softmax(logits, axis=-1)
    vals = jnp.einsum("bhqk,bhkd->bhqd", attn, v)
    return vals, logits


if __name__ == "__main__":
    # Shapes consistent with ConvAttention(input_dim=256): num_heads=4,
    # head_dim=32; a 16x16 feature map with att_stride=2 gives h*w = 64 tokens.
    B, H, L, D = 2, 4, 64, 32

    key = jax.random.PRNGKey(0)
    kq, kk, kv = jax.random.split(key, 3)
    q = jax.random.normal(kq, (B, H, L, D), dtype=jnp.float32)
    k = jax.random.normal(kk, (B, H, L, D), dtype=jnp.float32)
    v = jax.random.normal(kv, (B, H, L, D), dtype=jnp.float32)

    # Key-padding mask of shape (B, 1, 1, Lk): mask the last 5 keys of batch 1
    # (never masks an entire row, so no NaN rows in the check).
    key_padding_mask = jnp.zeros((B, 1, 1, L), dtype=jnp.bool_)
    key_padding_mask = key_padding_mask.at[1, 0, 0, -5:].set(True)

    values, attn_logits = sda_layer(
        q, k, v, attn_mask=None, key_padding_mask=key_padding_mask
    )
    jax.block_until_ready((values, attn_logits))

    ref_vals, ref_logits = _reference(q, k, v, key_padding_mask)
    np.testing.assert_allclose(np.asarray(values), np.asarray(ref_vals),
                               rtol=2e-5, atol=2e-5)
    np.testing.assert_allclose(np.asarray(attn_logits), np.asarray(ref_logits),
                               rtol=2e-5, atol=2e-5)

    # No-mask path (separate kernel variant with no bias input at all).
    values_nm, logits_nm = sda_layer(
        q, k, v, attn_mask=None, key_padding_mask=None
    )
    jax.block_until_ready((values_nm, logits_nm))
    ref_vals_nm, ref_logits_nm = _reference(q, k, v, None)
    np.testing.assert_allclose(np.asarray(values_nm), np.asarray(ref_vals_nm),
                               rtol=2e-5, atol=2e-5)
    np.testing.assert_allclose(np.asarray(logits_nm), np.asarray(ref_logits_nm),
                               rtol=2e-5, atol=2e-5)

    print("KERNEL_OK")
</pallas_src>

<mosaic_0001>
module attributes {stable_mosaic.version = 11 : i64} {
  func.func @_sda_group_kernel(%arg0: i32, %arg1: memref<8x64x32xf32, #tpu.memory_space<vmem>>, %arg2: memref<8x64x32xf32, #tpu.memory_space<vmem>>, %arg3: memref<8x64x32xf32, #tpu.memory_space<vmem>>, %arg4: memref<8x1x64xf32, #tpu.memory_space<vmem>>, %arg5: memref<1x64x256xf32, #tpu.memory_space<vmem>>, %arg6: memref<1x64x512xf32, #tpu.memory_space<vmem>>) attributes {dimension_semantics = [#tpu.dimension_semantics<parallel>], iteration_bounds = array<i64: 1>, scalar_prefetch = 0 : i64, scratch_operands = 0 : i64, tpu.core_type = #tpu.core_type<tc>, window_params = [{transform_indices = @transform_0, window_bounds = array<i64: 8, 64, 32>}, {transform_indices = @transform_1, window_bounds = array<i64: 8, 64, 32>}, {transform_indices = @transform_2, window_bounds = array<i64: 8, 64, 32>}, {transform_indices = @transform_3, window_bounds = array<i64: 8, 1, 64>}, {transform_indices = @transform_4, window_bounds = array<i64: 1, 64, 256>}, {transform_indices = @transform_5, window_bounds = array<i64: 1, 64, 512>}]} {
    %c0 = arith.constant 0 : index
    %c0_0 = arith.constant 0 : index
    %c0_1 = arith.constant 0 : index
    %0 = vector.load %arg1[%c0, %c0_0, %c0_1] : memref<8x64x32xf32, #tpu.memory_space<vmem>>, vector<1x64x32xf32>
    %1 = vector.shape_cast %0 : vector<1x64x32xf32> to vector<64x32xf32>
    %cst = arith.constant 0.176776692 : f32
    %2 = vector.broadcast %cst : f32 to vector<64x32xf32>
    %3 = arith.mulf %1, %2 : vector<64x32xf32>
    %c0_2 = arith.constant 0 : index
    %c0_3 = arith.constant 0 : index
    %c0_4 = arith.constant 0 : index
    %4 = vector.load %arg2[%c0_2, %c0_3, %c0_4] : memref<8x64x32xf32, #tpu.memory_space<vmem>>, vector<1x64x32xf32>
    %5 = vector.shape_cast %4 : vector<1x64x32xf32> to vector<64x32xf32>
    %c0_5 = arith.constant 0 : index
    %c0_6 = arith.constant 0 : index
    %c0_7 = arith.constant 0 : index
    %6 = vector.load %arg3[%c0_5, %c0_6, %c0_7] : memref<8x64x32xf32, #tpu.memory_space<vmem>>, vector<1x64x32xf32>
    %7 = vector.shape_cast %6 : vector<1x64x32xf32> to vector<64x32xf32>
    %cst_8 = arith.constant dense<0.000000e+00> : vector<64x64xf32>
    %8 = tpu.matmul %3, %5, %cst_8 {dimension_numbers = #tpu.dot_dimension_numbers<[1], [1], [0], [0], [0, 0, 1, 0], [], []>} : vector<64x32xf32>, vector<64x32xf32>, vector<64x64xf32> -> vector<64x64xf32>
    %c0_9 = arith.constant 0 : index
    %c0_10 = arith.constant 0 : index
    %c0_11 = arith.constant 0 : index
    %9 = vector.load %arg4[%c0_9, %c0_10, %c0_11] : memref<8x1x64xf32, #tpu.memory_space<vmem>>, vector<1x1x64xf32>
    %10 = vector.shape_cast %9 : vector<1x1x64xf32> to vector<1x64xf32>
    %11 = vector.broadcast %10 : vector<1x64xf32> to vector<64x64xf32>
    %12 = arith.addf %8, %11 : vector<64x64xf32>
    %cst_12 = arith.constant dense<0xFF800000> : vector<64xf32>
    %13 = vector.multi_reduction <maximumf>, %12, %cst_12 [1] : vector<64x64xf32> to vector<64xf32>
    %14 = vector.shape_cast %13 : vector<64xf32> to vector<64x1xf32>
    %15 = vector.broadcast %14 : vector<64x1xf32> to vector<64x64xf32>
    %16 = arith.subf %12, %15 : vector<64x64xf32>
    %17 = math.exp %16 : vector<64x64xf32>
    %cst_13 = arith.constant dense<0.000000e+00> : vector<64xf32>
    %18 = vector.multi_reduction <add>, %17, %cst_13 [1] : vector<64x64xf32> to vector<64xf32>
    %19 = vector.shape_cast %18 : vector<64xf32> to vector<64x1xf32>
    %20 = tpu.reciprocal %19 {approx = true} : vector<64x1xf32> -> vector<64x1xf32>
    %21 = arith.mulf %19, %20 : vector<64x1xf32>
    %cst_14 = arith.constant 2.000000e+00 : f32
    %22 = vector.broadcast %cst_14 : f32 to vector<64x1xf32>
    %23 = arith.subf %22, %21 : vector<64x1xf32>
    %24 = arith.mulf %20, %23 : vector<64x1xf32>
    %25 = vector.broadcast %24 : vector<64x1xf32> to vector<64x64xf32>
    %26 = arith.mulf %17, %25 : vector<64x64xf32>
    %cst_15 = arith.constant dense<0.000000e+00> : vector<64x32xf32>
    %27 = tpu.matmul %26, %7, %cst_15 {dimension_numbers = #tpu.dot_dimension_numbers<[1], [0], [0], [1], [0, 0, 1, 1], [], []>} : vector<64x64xf32>, vector<64x32xf32>, vector<64x32xf32> -> vector<64x32xf32>
    %c1 = arith.constant 1 : index
    %c0_16 = arith.constant 0 : index
    %c0_17 = arith.constant 0 : index
    %28 = vector.load %arg1[%c1, %c0_16, %c0_17] : memref<8x64x32xf32, #tpu.memory_space<vmem>>, vector<1x64x32xf32>
    %29 = vector.shape_cast %28 : vector<1x64x32xf32> to vector<64x32xf32>
    %cst_18 = arith.constant 0.176776692 : f32
    %30 = vector.broadcast %cst_18 : f32 to vector<64x32xf32>
    %31 = arith.mulf %29, %30 : vector<64x32xf32>
    %c1_19 = arith.constant 1 : index
    %c0_20 = arith.constant 0 : index
    %c0_21 = arith.constant 0 : index
    %32 = vector.load %arg2[%c1_19, %c0_20, %c0_21] : memref<8x64x32xf32, #tpu.memory_space<vmem>>, vector<1x64x32xf32>
    %33 = vector.shape_cast %32 : vector<1x64x32xf32> to vector<64x32xf32>
    %c1_22 = arith.constant 1 : index
    %c0_23 = arith.constant 0 : index
    %c0_24 = arith.constant 0 : index
    %34 = vector.load %arg3[%c1_22, %c0_23, %c0_24] : memref<8x64x32xf32, #tpu.memory_space<vmem>>, vector<1x64x32xf32>
    %35 = vector.shape_cast %34 : vector<1x64x32xf32> to vector<64x32xf32>
    %cst_25 = arith.constant dense<0.000000e+00> : vector<64x64xf32>
    %36 = tpu.matmul %31, %33, %cst_25 {dimension_numbers = #tpu.dot_dimension_numbers<[1], [1], [0], [0], [0, 0, 1, 0], [], []>} : vector<64x32xf32>, vector<64x32xf32>, vector<64x64xf32> -> vector<64x64xf32>
    %c1_26 = arith.constant 1 : index
    %c0_27 = arith.constant 0 : index
    %c0_28 = arith.constant 0 : index
    %37 = vector.load %arg4[%c1_26, %c0_27, %c0_28] : memref<8x1x64xf32, #tpu.memory_space<vmem>>, vector<1x1x64xf32>
    %38 = vector.shape_cast %37 : vector<1x1x64xf32> to vector<1x64xf32>
    %39 = vector.broadcast %38 : vector<1x64xf32> to vector<64x64xf32>
    %40 = arith.addf %36, %39 : vector<64x64xf32>
    %cst_29 = arith.constant dense<0xFF800000> : vector<64xf32>
    %41 = vector.multi_reduction <maximumf>, %40, %cst_29 [1] : vector<64x64xf32> to vector<64xf32>
    %42 = vector.shape_cast %41 : vector<64xf32> to vector<64x1xf32>
    %43 = vector.broadcast %42 : vector<64x1xf32> to vector<64x64xf32>
    %44 = arith.subf %40, %43 : vector<64x64xf32>
    %45 = math.exp %44 : vector<64x64xf32>
    %cst_30 = arith.constant dense<0.000000e+00> : vector<64xf32>
    %46 = vector.multi_reduction <add>, %45, %cst_30 [1] : vector<64x64xf32> to vector<64xf32>
    %47 = vector.shape_cast %46 : vector<64xf32> to vector<64x1xf32>
    %48 = tpu.reciprocal %47 {approx = true} : vector<64x1xf32> -> vector<64x1xf32>
    %49 = arith.mulf %47, %48 : vector<64x1xf32>
    %cst_31 = arith.constant 2.000000e+00 : f32
    %50 = vector.broadcast %cst_31 : f32 to vector<64x1xf32>
    %51 = arith.subf %50, %49 : vector<64x1xf32>
    %52 = arith.mulf %48, %51 : vector<64x1xf32>
    %53 = vector.broadcast %52 : vector<64x1xf32> to vector<64x64xf32>
    %54 = arith.mulf %45, %53 : vector<64x64xf32>
    %cst_32 = arith.constant dense<0.000000e+00> : vector<64x32xf32>
    %55 = tpu.matmul %54, %35, %cst_32 {dimension_numbers = #tpu.dot_dimension_numbers<[1], [0], [0], [1], [0, 0, 1, 1], [], []>} : vector<64x64xf32>, vector<64x32xf32>, vector<64x32xf32> -> vector<64x32xf32>
    %56 = tpu.concatenate %12, %40 in 1 : vector<64x64xf32>, vector<64x64xf32> -> vector<64x128xf32>
    %c0_33 = arith.constant 0 : index
    %c0_34 = arith.constant 0 : index
    %c0_35 = arith.constant 0 : index
    %57 = vector.load %arg6[%c0_33, %c0_34, %c0_35] : memref<1x64x512xf32, #tpu.memory_space<vmem>>, vector<1x64x128xf32>
    %58 = vector.shape_cast %57 : vector<1x64x128xf32> to vector<64x128xf32>
    %59 = vector.shape_cast %56 : vector<64x128xf32> to vector<1x64x128xf32>
    tpu.vector_store %arg6[%c0_33, %c0_34, %c0_35], %59 {strides = array<i32>} : memref<1x64x512xf32, #tpu.memory_space<vmem>>, vector<1x64x128xf32>,
    %c2 = arith.constant 2 : index
    %c0_36 = arith.constant 0 : index
    %c0_37 = arith.constant 0 : index
    %60 = vector.load %arg1[%c2, %c0_36, %c0_37] : memref<8x64x32xf32, #tpu.memory_space<vmem>>, vector<1x64x32xf32>
    %61 = vector.shape_cast %60 : vector<1x64x32xf32> to vector<64x32xf32>
    %cst_38 = arith.constant 0.176776692 : f32
    %62 = vector.broadcast %cst_38 : f32 to vector<64x32xf32>
    %63 = arith.mulf %61, %62 : vector<64x32xf32>
    %c2_39 = arith.constant 2 : index
    %c0_40 = arith.constant 0 : index
    %c0_41 = arith.constant 0 : index
    %64 = vector.load %arg2[%c2_39, %c0_40, %c0_41] : memref<8x64x32xf32, #tpu.memory_space<vmem>>, vector<1x64x32xf32>
    %65 = vector.shape_cast %64 : vector<1x64x32xf32> to vector<64x32xf32>
    %c2_42 = arith.constant 2 : index
    %c0_43 = arith.constant 0 : index
    %c0_44 = arith.constant 0 : index
    %66 = vector.load %arg3[%c2_42, %c0_43, %c0_44] : memref<8x64x32xf32, #tpu.memory_space<vmem>>, vector<1x64x32xf32>
    %67 = vector.shape_cast %66 : vector<1x64x32xf32> to vector<64x32xf32>
    %cst_45 = arith.constant dense<0.000000e+00> : vector<64x64xf32>
    %68 = tpu.matmul %63, %65, %cst_45 {dimension_numbers = #tpu.dot_dimension_numbers<[1], [1], [0], [0], [0, 0, 1, 0], [], []>} : vector<64x32xf32>, vector<64x32xf32>, vector<64x64xf32> -> vector<64x64xf32>
    %c2_46 = arith.constant 2 : index
    %c0_47 = arith.constant 0 : index
    %c0_48 = arith.constant 0 : index
    %69 = vector.load %arg4[%c2_46, %c0_47, %c0_48] : memref<8x1x64xf32, #tpu.memory_space<vmem>>, vector<1x1x64xf32>
    %70 = vector.shape_cast %69 : vector<1x1x64xf32> to vector<1x64xf32>
    %71 = vector.broadcast %70 : vector<1x64xf32> to vector<64x64xf32>
    %72 = arith.addf %68, %71 : vector<64x64xf32>
    %cst_49 = arith.constant dense<0xFF800000> : vector<64xf32>
    %73 = vector.multi_reduction <maximumf>, %72, %cst_49 [1] : vector<64x64xf32> to vector<64xf32>
    %74 = vector.shape_cast %73 : vector<64xf32> to vector<64x1xf32>
    %75 = vector.broadcast %74 : vector<64x1xf32> to vector<64x64xf32>
    %76 = arith.subf %72, %75 : vector<64x64xf32>
    %77 = math.exp %76 : vector<64x64xf32>
    %cst_50 = arith.constant dense<0.000000e+00> : vector<64xf32>
    %78 = vector.multi_reduction <add>, %77, %cst_50 [1] : vector<64x64xf32> to vector<64xf32>
    %79 = vector.shape_cast %78 : vector<64xf32> to vector<64x1xf32>
    %80 = tpu.reciprocal %79 {approx = true} : vector<64x1xf32> -> vector<64x1xf32>
    %81 = arith.mulf %79, %80 : vector<64x1xf32>
    %cst_51 = arith.constant 2.000000e+00 : f32
    %82 = vector.broadcast %cst_51 : f32 to vector<64x1xf32>
    %83 = arith.subf %82, %81 : vector<64x1xf32>
    %84 = arith.mulf %80, %83 : vector<64x1xf32>
    %85 = vector.broadcast %84 : vector<64x1xf32> to vector<64x64xf32>
    %86 = arith.mulf %77, %85 : vector<64x64xf32>
    %cst_52 = arith.constant dense<0.000000e+00> : vector<64x32xf32>
    %87 = tpu.matmul %86, %67, %cst_52 {dimension_numbers = #tpu.dot_dimension_numbers<[1], [0], [0], [1], [0, 0, 1, 1], [], []>} : vector<64x64xf32>, vector<64x32xf32>, vector<64x32xf32> -> vector<64x32xf32>
    %c3 = arith.constant 3 : index
    %c0_53 = arith.constant 0 : index
    %c0_54 = arith.constant 0 : index
    %88 = vector.load %arg1[%c3, %c0_53, %c0_54] : memref<8x64x32xf32, #tpu.memory_space<vmem>>, vector<1x64x32xf32>
    %89 = vector.shape_cast %88 : vector<1x64x32xf32> to vector<64x32xf32>
    %cst_55 = arith.constant 0.176776692 : f32
    %90 = vector.broadcast %cst_55 : f32 to vector<64x32xf32>
    %91 = arith.mulf %89, %90 : vector<64x32xf32>
    %c3_56 = arith.constant 3 : index
    %c0_57 = arith.constant 0 : index
    %c0_58 = arith.constant 0 : index
    %92 = vector.load %arg2[%c3_56, %c0_57, %c0_58] : memref<8x64x32xf32, #tpu.memory_space<vmem>>, vector<1x64x32xf32>
    %93 = vector.shape_cast %92 : vector<1x64x32xf32> to vector<64x32xf32>
    %c3_59 = arith.constant 3 : index
    %c0_60 = arith.constant 0 : index
    %c0_61 = arith.constant 0 : index
    %94 = vector.load %arg3[%c3_59, %c0_60, %c0_61] : memref<8x64x32xf32, #tpu.memory_space<vmem>>, vector<1x64x32xf32>
    %95 = vector.shape_cast %94 : vector<1x64x32xf32> to vector<64x32xf32>
    %cst_62 = arith.constant dense<0.000000e+00> : vector<64x64xf32>
    %96 = tpu.matmul %91, %93, %cst_62 {dimension_numbers = #tpu.dot_dimension_numbers<[1], [1], [0], [0], [0, 0, 1, 0], [], []>} : vector<64x32xf32>, vector<64x32xf32>, vector<64x64xf32> -> vector<64x64xf32>
    %c3_63 = arith.constant 3 : index
    %c0_64 = arith.constant 0 : index
    %c0_65 = arith.constant 0 : index
    %97 = vector.load %arg4[%c3_63, %c0_64, %c0_65] : memref<8x1x64xf32, #tpu.memory_space<vmem>>, vector<1x1x64xf32>
    %98 = vector.shape_cast %97 : vector<1x1x64xf32> to vector<1x64xf32>
    %99 = vector.broadcast %98 : vector<1x64xf32> to vector<64x64xf32>
    %100 = arith.addf %96, %99 : vector<64x64xf32>
    %cst_66 = arith.constant dense<0xFF800000> : vector<64xf32>
    %101 = vector.multi_reduction <maximumf>, %100, %cst_66 [1] : vector<64x64xf32> to vector<64xf32>
    %102 = vector.shape_cast %101 : vector<64xf32> to vector<64x1xf32>
    %103 = vector.broadcast %102 : vector<64x1xf32> to vector<64x64xf32>
    %104 = arith.subf %100, %103 : vector<64x64xf32>
    %105 = math.exp %104 : vector<64x64xf32>
    %cst_67 = arith.constant dense<0.000000e+00> : vector<64xf32>
    %106 = vector.multi_reduction <add>, %105, %cst_67 [1] : vector<64x64xf32> to vector<64xf32>
    %107 = vector.shape_cast %106 : vector<64xf32> to vector<64x1xf32>
    %108 = tpu.reciprocal %107 {approx = true} : vector<64x1xf32> -> vector<64x1xf32>
    %109 = arith.mulf %107, %108 : vector<64x1xf32>
    %cst_68 = arith.constant 2.000000e+00 : f32
    %110 = vector.broadcast %cst_68 : f32 to vector<64x1xf32>
    %111 = arith.subf %110, %109 : vector<64x1xf32>
    %112 = arith.mulf %108, %111 : vector<64x1xf32>
    %113 = vector.broadcast %112 : vector<64x1xf32> to vector<64x64xf32>
    %114 = arith.mulf %105, %113 : vector<64x64xf32>
    %cst_69 = arith.constant dense<0.000000e+00> : vector<64x32xf32>
    %115 = tpu.matmul %114, %95, %cst_69 {dimension_numbers = #tpu.dot_dimension_numbers<[1], [0], [0], [1], [0, 0, 1, 1], [], []>} : vector<64x64xf32>, vector<64x32xf32>, vector<64x32xf32> -> vector<64x32xf32>
    %116 = tpu.concatenate %27, %55, %87, %115 in 1 : vector<64x32xf32>, vector<64x32xf32>, vector<64x32xf32>, vector<64x32xf32> -> vector<64x128xf32>
    %c0_70 = arith.constant 0 : index
    %c0_71 = arith.constant 0 : index
    %c0_72 = arith.constant 0 : index
    %117 = vector.load %arg5[%c0_70, %c0_71, %c0_72] : memref<1x64x256xf32, #tpu.memory_space<vmem>>, vector<1x64x128xf32>
    %118 = vector.shape_cast %117 : vector<1x64x128xf32> to vector<64x128xf32>
    %119 = vector.shape_cast %116 : vector<64x128xf32> to vector<1x64x128xf32>
    tpu.vector_store %arg5[%c0_70, %c0_71, %c0_72], %119 {strides = array<i32>} : memref<1x64x256xf32, #tpu.memory_space<vmem>>, vector<1x64x128xf32>,
    %120 = tpu.concatenate %72, %100 in 1 : vector<64x64xf32>, vector<64x64xf32> -> vector<64x128xf32>
    %c0_73 = arith.constant 0 : index
    %c0_74 = arith.constant 0 : index
    %c128 = arith.constant 128 : index
    %121 = vector.load %arg6[%c0_73, %c0_74, %c128] : memref<1x64x512xf32, #tpu.memory_space<vmem>>, vector<1x64x128xf32>
    %122 = vector.shape_cast %121 : vector<1x64x128xf32> to vector<64x128xf32>
    %123 = vector.shape_cast %120 : vector<64x128xf32> to vector<1x64x128xf32>
    tpu.vector_store %arg6[%c0_73, %c0_74, %c128], %123 {strides = array<i32>} : memref<1x64x512xf32, #tpu.memory_space<vmem>>, vector<1x64x128xf32>,
    %c4 = arith.constant 4 : index
    %c0_75 = arith.constant 0 : index
    %c0_76 = arith.constant 0 : index
    %124 = vector.load %arg1[%c4, %c0_75, %c0_76] : memref<8x64x32xf32, #tpu.memory_space<vmem>>, vector<1x64x32xf32>
    %125 = vector.shape_cast %124 : vector<1x64x32xf32> to vector<64x32xf32>
    %cst_77 = arith.constant 0.176776692 : f32
    %126 = vector.broadcast %cst_77 : f32 to vector<64x32xf32>
    %127 = arith.mulf %125, %126 : vector<64x32xf32>
    %c4_78 = arith.constant 4 : index
    %c0_79 = arith.constant 0 : index
    %c0_80 = arith.constant 0 : index
    %128 = vector.load %arg2[%c4_78, %c0_79, %c0_80] : memref<8x64x32xf32, #tpu.memory_space<vmem>>, vector<1x64x32xf32>
    %129 = vector.shape_cast %128 : vector<1x64x32xf32> to vector<64x32xf32>
    %c4_81 = arith.constant 4 : index
    %c0_82 = arith.constant 0 : index
    %c0_83 = arith.constant 0 : index
    %130 = vector.load %arg3[%c4_81, %c0_82, %c0_83] : memref<8x64x32xf32, #tpu.memory_space<vmem>>, vector<1x64x32xf32>
    %131 = vector.shape_cast %130 : vector<1x64x32xf32> to vector<64x32xf32>
    %cst_84 = arith.constant dense<0.000000e+00> : vector<64x64xf32>
    %132 = tpu.matmul %127, %129, %cst_84 {dimension_numbers = #tpu.dot_dimension_numbers<[1], [1], [0], [0], [0, 0, 1, 0], [], []>} : vector<64x32xf32>, vector<64x32xf32>, vector<64x64xf32> -> vector<64x64xf32>
    %c4_85 = arith.constant 4 : index
    %c0_86 = arith.constant 0 : index
    %c0_87 = arith.constant 0 : index
    %133 = vector.load %arg4[%c4_85, %c0_86, %c0_87] : memref<8x1x64xf32, #tpu.memory_space<vmem>>, vector<1x1x64xf32>
    %134 = vector.shape_cast %133 : vector<1x1x64xf32> to vector<1x64xf32>
    %135 = vector.broadcast %134 : vector<1x64xf32> to vector<64x64xf32>
    %136 = arith.addf %132, %135 : vector<64x64xf32>
    %cst_88 = arith.constant dense<0xFF800000> : vector<64xf32>
    %137 = vector.multi_reduction <maximumf>, %136, %cst_88 [1] : vector<64x64xf32> to vector<64xf32>
    %138 = vector.shape_cast %137 : vector<64xf32> to vector<64x1xf32>
    %139 = vector.broadcast %138 : vector<64x1xf32> to vector<64x64xf32>
    %140 = arith.subf %136, %139 : vector<64x64xf32>
    %141 = math.exp %140 : vector<64x64xf32>
    %cst_89 = arith.constant dense<0.000000e+00> : vector<64xf32>
    %142 = vector.multi_reduction <add>, %141, %cst_89 [1] : vector<64x64xf32> to vector<64xf32>
    %143 = vector.shape_cast %142 : vector<64xf32> to vector<64x1xf32>
    %144 = tpu.reciprocal %143 {approx = true} : vector<64x1xf32> -> vector<64x1xf32>
    %145 = arith.mulf %143, %144 : vector<64x1xf32>
    %cst_90 = arith.constant 2.000000e+00 : f32
    %146 = vector.broadcast %cst_90 : f32 to vector<64x1xf32>
    %147 = arith.subf %146, %145 : vector<64x1xf32>
    %148 = arith.mulf %144, %147 : vector<64x1xf32>
    %149 = vector.broadcast %148 : vector<64x1xf32> to vector<64x64xf32>
    %150 = arith.mulf %141, %149 : vector<64x64xf32>
    %cst_91 = arith.constant dense<0.000000e+00> : vector<64x32xf32>
    %151 = tpu.matmul %150, %131, %cst_91 {dimension_numbers = #tpu.dot_dimension_numbers<[1], [0], [0], [1], [0, 0, 1, 1], [], []>} : vector<64x64xf32>, vector<64x32xf32>, vector<64x32xf32> -> vector<64x32xf32>
    %c5 = arith.constant 5 : index
    %c0_92 = arith.constant 0 : index
    %c0_93 = arith.constant 0 : index
    %152 = vector.load %arg1[%c5, %c0_92, %c0_93] : memref<8x64x32xf32, #tpu.memory_space<vmem>>, vector<1x64x32xf32>
    %153 = vector.shape_cast %152 : vector<1x64x32xf32> to vector<64x32xf32>
    %cst_94 = arith.constant 0.176776692 : f32
    %154 = vector.broadcast %cst_94 : f32 to vector<64x32xf32>
    %155 = arith.mulf %153, %154 : vector<64x32xf32>
    %c5_95 = arith.constant 5 : index
    %c0_96 = arith.constant 0 : index
    %c0_97 = arith.constant 0 : index
    %156 = vector.load %arg2[%c5_95, %c0_96, %c0_97] : memref<8x64x32xf32, #tpu.memory_space<vmem>>, vector<1x64x32xf32>
    %157 = vector.shape_cast %156 : vector<1x64x32xf32> to vector<64x32xf32>
    %c5_98 = arith.constant 5 : index
    %c0_99 = arith.constant 0 : index
    %c0_100 = arith.constant 0 : index
    %158 = vector.load %arg3[%c5_98, %c0_99, %c0_100] : memref<8x64x32xf32, #tpu.memory_space<vmem>>, vector<1x64x32xf32>
    %159 = vector.shape_cast %158 : vector<1x64x32xf32> to vector<64x32xf32>
    %cst_101 = arith.constant dense<0.000000e+00> : vector<64x64xf32>
    %160 = tpu.matmul %155, %157, %cst_101 {dimension_numbers = #tpu.dot_dimension_numbers<[1], [1], [0], [0], [0, 0, 1, 0], [], []>} : vector<64x32xf32>, vector<64x32xf32>, vector<64x64xf32> -> vector<64x64xf32>
    %c5_102 = arith.constant 5 : index
    %c0_103 = arith.constant 0 : index
    %c0_104 = arith.constant 0 : index
    %161 = vector.load %arg4[%c5_102, %c0_103, %c0_104] : memref<8x1x64xf32, #tpu.memory_space<vmem>>, vector<1x1x64xf32>
    %162 = vector.shape_cast %161 : vector<1x1x64xf32> to vector<1x64xf32>
    %163 = vector.broadcast %162 : vector<1x64xf32> to vector<64x64xf32>
    %164 = arith.addf %160, %163 : vector<64x64xf32>
    %cst_105 = arith.constant dense<0xFF800000> : vector<64xf32>
    %165 = vector.multi_reduction <maximumf>, %164, %cst_105 [1] : vector<64x64xf32> to vector<64xf32>
    %166 = vector.shape_cast %165 : vector<64xf32> to vector<64x1xf32>
    %167 = vector.broadcast %166 : vector<64x1xf32> to vector<64x64xf32>
    %168 = arith.subf %164, %167 : vector<64x64xf32>
    %169 = math.exp %168 : vector<64x64xf32>
    %cst_106 = arith.constant dense<0.000000e+00> : vector<64xf32>
    %170 = vector.multi_reduction <add>, %169, %cst_106 [1] : vector<64x64xf32> to vector<64xf32>
    %171 = vector.shape_cast %170 : vector<64xf32> to vector<64x1xf32>
    %172 = tpu.reciprocal %171 {approx = true} : vector<64x1xf32> -> vector<64x1xf32>
    %173 = arith.mulf %171, %172 : vector<64x1xf32>
    %cst_107 = arith.constant 2.000000e+00 : f32
    %174 = vector.broadcast %cst_107 : f32 to vector<64x1xf32>
    %175 = arith.subf %174, %173 : vector<64x1xf32>
    %176 = arith.mulf %172, %175 : vector<64x1xf32>
    %177 = vector.broadcast %176 : vector<64x1xf32> to vector<64x64xf32>
    %178 = arith.mulf %169, %177 : vector<64x64xf32>
    %cst_108 = arith.constant dense<0.000000e+00> : vector<64x32xf32>
    %179 = tpu.matmul %178, %159, %cst_108 {dimension_numbers = #tpu.dot_dimension_numbers<[1], [0], [0], [1], [0, 0, 1, 1], [], []>} : vector<64x64xf32>, vector<64x32xf32>, vector<64x32xf32> -> vector<64x32xf32>
    %180 = tpu.concatenate %136, %164 in 1 : vector<64x64xf32>, vector<64x64xf32> -> vector<64x128xf32>
    %c0_109 = arith.constant 0 : index
    %c0_110 = arith.constant 0 : index
    %c256 = arith.constant 256 : index
    %181 = vector.load %arg6[%c0_109, %c0_110, %c256] : memref<1x64x512xf32, #tpu.memory_space<vmem>>, vector<1x64x128xf32>
    %182 = vector.shape_cast %181 : vector<1x64x128xf32> to vector<64x128xf32>
    %183 = vector.shape_cast %180 : vector<64x128xf32> to vector<1x64x128xf32>
    tpu.vector_store %arg6[%c0_109, %c0_110, %c256], %183 {strides = array<i32>} : memref<1x64x512xf32, #tpu.memory_space<vmem>>, vector<1x64x128xf32>,
    %c6 = arith.constant 6 : index
    %c0_111 = arith.constant 0 : index
    %c0_112 = arith.constant 0 : index
    %184 = vector.load %arg1[%c6, %c0_111, %c0_112] : memref<8x64x32xf32, #tpu.memory_space<vmem>>, vector<1x64x32xf32>
    %185 = vector.shape_cast %184 : vector<1x64x32xf32> to vector<64x32xf32>
    %cst_113 = arith.constant 0.176776692 : f32
    %186 = vector.broadcast %cst_113 : f32 to vector<64x32xf32>
    %187 = arith.mulf %185, %186 : vector<64x32xf32>
    %c6_114 = arith.constant 6 : index
    %c0_115 = arith.constant 0 : index
    %c0_116 = arith.constant 0 : index
    %188 = vector.load %arg2[%c6_114, %c0_115, %c0_116] : memref<8x64x32xf32, #tpu.memory_space<vmem>>, vector<1x64x32xf32>
    %189 = vector.shape_cast %188 : vector<1x64x32xf32> to vector<64x32xf32>
    %c6_117 = arith.constant 6 : index
    %c0_118 = arith.constant 0 : index
    %c0_119 = arith.constant 0 : index
    %190 = vector.load %arg3[%c6_117, %c0_118, %c0_119] : memref<8x64x32xf32, #tpu.memory_space<vmem>>, vector<1x64x32xf32>
    %191 = vector.shape_cast %190 : vector<1x64x32xf32> to vector<64x32xf32>
    %cst_120 = arith.constant dense<0.000000e+00> : vector<64x64xf32>
    %192 = tpu.matmul %187, %189, %cst_120 {dimension_numbers = #tpu.dot_dimension_numbers<[1], [1], [0], [0], [0, 0, 1, 0], [], []>} : vector<64x32xf32>, vector<64x32xf32>, vector<64x64xf32> -> vector<64x64xf32>
    %c6_121 = arith.constant 6 : index
    %c0_122 = arith.constant 0 : index
    %c0_123 = arith.constant 0 : index
    %193 = vector.load %arg4[%c6_121, %c0_122, %c0_123] : memref<8x1x64xf32, #tpu.memory_space<vmem>>, vector<1x1x64xf32>
    %194 = vector.shape_cast %193 : vector<1x1x64xf32> to vector<1x64xf32>
    %195 = vector.broadcast %194 : vector<1x64xf32> to vector<64x64xf32>
    %196 = arith.addf %192, %195 : vector<64x64xf32>
    %cst_124 = arith.constant dense<0xFF800000> : vector<64xf32>
    %197 = vector.multi_reduction <maximumf>, %196, %cst_124 [1] : vector<64x64xf32> to vector<64xf32>
    %198 = vector.shape_cast %197 : vector<64xf32> to vector<64x1xf32>
    %199 = vector.broadcast %198 : vector<64x1xf32> to vector<64x64xf32>
    %200 = arith.subf %196, %199 : vector<64x64xf32>
    %201 = math.exp %200 : vector<64x64xf32>
    %cst_125 = arith.constant dense<0.000000e+00> : vector<64xf32>
    %202 = vector.multi_reduction <add>, %201, %cst_125 [1] : vector<64x64xf32> to vector<64xf32>
    %203 = vector.shape_cast %202 : vector<64xf32> to vector<64x1xf32>
    %204 = tpu.reciprocal %203 {approx = true} : vector<64x1xf32> -> vector<64x1xf32>
    %205 = arith.mulf %203, %204 : vector<64x1xf32>
    %cst_126 = arith.constant 2.000000e+00 : f32
    %206 = vector.broadcast %cst_126 : f32 to vector<64x1xf32>
    %207 = arith.subf %206, %205 : vector<64x1xf32>
    %208 = arith.mulf %204, %207 : vector<64x1xf32>
    %209 = vector.broadcast %208 : vector<64x1xf32> to vector<64x64xf32>
    %210 = arith.mulf %201, %209 : vector<64x64xf32>
    %cst_127 = arith.constant dense<0.000000e+00> : vector<64x32xf32>
    %211 = tpu.matmul %210, %191, %cst_127 {dimension_numbers = #tpu.dot_dimension_numbers<[1], [0], [0], [1], [0, 0, 1, 1], [], []>} : vector<64x64xf32>, vector<64x32xf32>, vector<64x32xf32> -> vector<64x32xf32>
    %c7 = arith.constant 7 : index
    %c0_128 = arith.constant 0 : index
    %c0_129 = arith.constant 0 : index
    %212 = vector.load %arg1[%c7, %c0_128, %c0_129] : memref<8x64x32xf32, #tpu.memory_space<vmem>>, vector<1x64x32xf32>
    %213 = vector.shape_cast %212 : vector<1x64x32xf32> to vector<64x32xf32>
    %cst_130 = arith.constant 0.176776692 : f32
    %214 = vector.broadcast %cst_130 : f32 to vector<64x32xf32>
    %215 = arith.mulf %213, %214 : vector<64x32xf32>
    %c7_131 = arith.constant 7 : index
    %c0_132 = arith.constant 0 : index
    %c0_133 = arith.constant 0 : index
    %216 = vector.load %arg2[%c7_131, %c0_132, %c0_133] : memref<8x64x32xf32, #tpu.memory_space<vmem>>, vector<1x64x32xf32>
    %217 = vector.shape_cast %216 : vector<1x64x32xf32> to vector<64x32xf32>
    %c7_134 = arith.constant 7 : index
    %c0_135 = arith.constant 0 : index
    %c0_136 = arith.constant 0 : index
    %218 = vector.load %arg3[%c7_134, %c0_135, %c0_136] : memref<8x64x32xf32, #tpu.memory_space<vmem>>, vector<1x64x32xf32>
    %219 = vector.shape_cast %218 : vector<1x64x32xf32> to vector<64x32xf32>
    %cst_137 = arith.constant dense<0.000000e+00> : vector<64x64xf32>
    %220 = tpu.matmul %215, %217, %cst_137 {dimension_numbers = #tpu.dot_dimension_numbers<[1], [1], [0], [0], [0, 0, 1, 0], [], []>} : vector<64x32xf32>, vector<64x32xf32>, vector<64x64xf32> -> vector<64x64xf32>
    %c7_138 = arith.constant 7 : index
    %c0_139 = arith.constant 0 : index
    %c0_140 = arith.constant 0 : index
    %221 = vector.load %arg4[%c7_138, %c0_139, %c0_140] : memref<8x1x64xf32, #tpu.memory_space<vmem>>, vector<1x1x64xf32>
    %222 = vector.shape_cast %221 : vector<1x1x64xf32> to vector<1x64xf32>
    %223 = vector.broadcast %222 : vector<1x64xf32> to vector<64x64xf32>
    %224 = arith.addf %220, %223 : vector<64x64xf32>
    %cst_141 = arith.constant dense<0xFF800000> : vector<64xf32>
    %225 = vector.multi_reduction <maximumf>, %224, %cst_141 [1] : vector<64x64xf32> to vector<64xf32>
    %226 = vector.shape_cast %225 : vector<64xf32> to vector<64x1xf32>
    %227 = vector.broadcast %226 : vector<64x1xf32> to vector<64x64xf32>
    %228 = arith.subf %224, %227 : vector<64x64xf32>
    %229 = math.exp %228 : vector<64x64xf32>
    %cst_142 = arith.constant dense<0.000000e+00> : vector<64xf32>
    %230 = vector.multi_reduction <add>, %229, %cst_142 [1] : vector<64x64xf32> to vector<64xf32>
    %231 = vector.shape_cast %230 : vector<64xf32> to vector<64x1xf32>
    %232 = tpu.reciprocal %231 {approx = true} : vector<64x1xf32> -> vector<64x1xf32>
    %233 = arith.mulf %231, %232 : vector<64x1xf32>
    %cst_143 = arith.constant 2.000000e+00 : f32
    %234 = vector.broadcast %cst_143 : f32 to vector<64x1xf32>
    %235 = arith.subf %234, %233 : vector<64x1xf32>
    %236 = arith.mulf %232, %235 : vector<64x1xf32>
    %237 = vector.broadcast %236 : vector<64x1xf32> to vector<64x64xf32>
    %238 = arith.mulf %229, %237 : vector<64x64xf32>
    %cst_144 = arith.constant dense<0.000000e+00> : vector<64x32xf32>
    %239 = tpu.matmul %238, %219, %cst_144 {dimension_numbers = #tpu.dot_dimension_numbers<[1], [0], [0], [1], [0, 0, 1, 1], [], []>} : vector<64x64xf32>, vector<64x32xf32>, vector<64x32xf32> -> vector<64x32xf32>
    %240 = tpu.concatenate %151, %179, %211, %239 in 1 : vector<64x32xf32>, vector<64x32xf32>, vector<64x32xf32>, vector<64x32xf32> -> vector<64x128xf32>
    %c0_145 = arith.constant 0 : index
    %c0_146 = arith.constant 0 : index
    %c128_147 = arith.constant 128 : index
    %241 = vector.load %arg5[%c0_145, %c0_146, %c128_147] : memref<1x64x256xf32, #tpu.memory_space<vmem>>, vector<1x64x128xf32>
    %242 = vector.shape_cast %241 : vector<1x64x128xf32> to vector<64x128xf32>
    %243 = vector.shape_cast %240 : vector<64x128xf32> to vector<1x64x128xf32>
    tpu.vector_store %arg5[%c0_145, %c0_146, %c128_147], %243 {strides = array<i32>} : memref<1x64x256xf32, #tpu.memory_space<vmem>>, vector<1x64x128xf32>,
    %244 = tpu.concatenate %196, %224 in 1 : vector<64x64xf32>, vector<64x64xf32> -> vector<64x128xf32>
    %c0_148 = arith.constant 0 : index
    %c0_149 = arith.constant 0 : index
    %c384 = arith.constant 384 : index
    %245 = vector.load %arg6[%c0_148, %c0_149, %c384] : memref<1x64x512xf32, #tpu.memory_space<vmem>>, vector<1x64x128xf32>
    %246 = vector.shape_cast %245 : vector<1x64x128xf32> to vector<64x128xf32>
    %247 = vector.shape_cast %244 : vector<64x128xf32> to vector<1x64x128xf32>
    tpu.vector_store %arg6[%c0_148, %c0_149, %c384], %247 {strides = array<i32>} : memref<1x64x512xf32, #tpu.memory_space<vmem>>, vector<1x64x128xf32>,
    return
  }
  func.func @transform_0(%arg0: i32) -> (i32, i32, i32) {
    %c0_i32 = arith.constant 0 : i32
    %c0_i32_0 = arith.constant 0 : i32
    %c0_i32_1 = arith.constant 0 : i32
    return %arg0, %c0_i32, %c0_i32_0 : i32, i32, i32
  }
  func.func @transform_1(%arg0: i32) -> (i32, i32, i32) {
    %c0_i32 = arith.constant 0 : i32
    %c0_i32_0 = arith.constant 0 : i32
    %c0_i32_1 = arith.constant 0 : i32
    return %arg0, %c0_i32, %c0_i32_0 : i32, i32, i32
  }
  func.func @transform_2(%arg0: i32) -> (i32, i32, i32) {
    %c0_i32 = arith.constant 0 : i32
    %c0_i32_0 = arith.constant 0 : i32
    %c0_i32_1 = arith.constant 0 : i32
    return %arg0, %c0_i32, %c0_i32_0 : i32, i32, i32
  }
  func.func @transform_3(%arg0: i32) -> (i32, i32, i32) {
    %c0_i32 = arith.constant 0 : i32
    %c0_i32_0 = arith.constant 0 : i32
    %c0_i32_1 = arith.constant 0 : i32
    return %arg0, %c0_i32, %c0_i32_0 : i32, i32, i32
  }
  func.func @transform_4(%arg0: i32) -> (i32, i32, i32) {
    %c0_i32 = arith.constant 0 : i32
    %c0_i32_0 = arith.constant 0 : i32
    %c0_i32_1 = arith.constant 0 : i32
    return %arg0, %c0_i32, %c0_i32_0 : i32, i32, i32
  }
  func.func @transform_5(%arg0: i32) -> (i32, i32, i32) {
    %c0_i32 = arith.constant 0 : i32
    %c0_i32_0 = arith.constant 0 : i32
    %c0_i32_1 = arith.constant 0 : i32
    return %arg0, %c0_i32, %c0_i32_0 : i32, i32, i32
  }
}

</mosaic_0001>

<llo_original>
// kernel: tpu_custom_call.1
$region0: #{tpu_custom_call.1}
  #allocation0 [shape = 'u32[]', space=smem, size = 0x4, offset = 0x4, fixed_abs, tag = 'smem constant byte address 0x4 - core index']
  #allocation1 [shape = 'u32[144,128]{1,0:T(1,128)}', space=vmem, size = 0x12000, scoped, tag = 'internal scratch']
  %s0 = inlined_call_operand.vmem [shape: f32[8,64,32], index: 0, kind: input, shape index: {}]
  %s1 = inlined_call_operand.vmem [shape: f32[8,64,32], index: 1, kind: input, shape index: {}]
  %s2 = inlined_call_operand.vmem [shape: f32[8,64,32], index: 2, kind: input, shape index: {}]
  %s3 = inlined_call_operand.vmem [shape: f32[8,1,64], index: 3, kind: input, shape index: {}]
  %s4 = inlined_call_operand.hbm [shape: f32[1,64,256], index: 4, kind: output, shape index: {0}]
  %s5 = inlined_call_operand.hbm [shape: f32[1,64,512], index: 5, kind: output, shape index: {1}]
  %6 = xla_tuple %s4, %s5
  %s7 = sld [smem:[#allocation0]]
  $region34: #{tpu_custom_call.1} parent=0
    _
  %s9 = ssub.s32 1, %s7
  %s10 = scalar_select 0, %s9, %s7
  $region1: #{tpu_custom_call.1} parent=0
    #allocation2 [shape = 'u8[65536]{0}', space=vmem, size = 0x10000, scoped, tag = 'output window, operand 0, single buffered']
    #allocation3 [shape = 's32[1]{0}', space=sflag, size = 0x4, scoped, tag = 'scoped memory for tpu_custom_call.1']
    #allocation4 [shape = 'u8[131072]{0}', space=vmem, size = 0x20000, scoped, tag = 'output window, operand 1, single buffered']
    #allocation5 [shape = 's32[1]{0}', space=sflag, size = 0x4, scoped, tag = 'scoped memory for tpu_custom_call.1']
    %11 = vsyncpa [#allocation3], 0
    %12 = vsyncpa [#allocation5], 0
    // Predicated region
    $region2: #{tpu_custom_call.1} parent=1 // pred_check
      _
    $region3: #{tpu_custom_call.1} parent=1 // pred_check_branch
      %14 = sbr.rel (0) target = $region5
    $region4: #{tpu_custom_call.1} parent=1 // pred_region
      _
    $region5: #{tpu_custom_call.1} parent=1 // pred_fallthru
      _
    // Predicated region
    $region6: #{tpu_custom_call.1} parent=1 // pred_check
      _
    $region7: #{tpu_custom_call.1} parent=1 // pred_check_branch
      %16 = sbr.rel (0) target = $region9
    $region8: #{tpu_custom_call.1} parent=1 // pred_region
      _
    $region9: #{tpu_custom_call.1} parent=1 // pred_fallthru
      _
    // Predicated region
    $region10: #{tpu_custom_call.1} parent=1 // pred_check
      _
    $region11: #{tpu_custom_call.1} parent=1 // pred_check_branch
      %18 = sbr.rel (0) target = $region13
    $region12: #{tpu_custom_call.1} parent=1 // pred_region
      _
    $region13: #{tpu_custom_call.1} parent=1 // pred_fallthru
      _
    // Predicated region
    $region14: #{tpu_custom_call.1} parent=1 // pred_check
      _
    $region15: #{tpu_custom_call.1} parent=1 // pred_check_branch
      %20 = sbr.rel (0) target = $region17
    $region16: #{tpu_custom_call.1} parent=1 // pred_region
      _
    $region17: #{tpu_custom_call.1} parent=1 // pred_fallthru
      _
    %v21 = vld [vmem:[%s0] sm:$0xff]
    %v22 = vld [vmem:[%s0 + $0x8] sm:$0xff]
    %v23 = vld [vmem:[%s0 + $0x10] sm:$0xff]
    %v24 = vld [vmem:[%s0 + $0x18] sm:$0xff]
    %v25 = vld [vmem:[%s0 + $0x20] sm:$0xff]
    %v26 = vld [vmem:[%s0 + $0x28] sm:$0xff]
    %v27 = vld [vmem:[%s0 + $0x30] sm:$0xff]
    %v28 = vld [vmem:[%s0 + $0x38] sm:$0xff]
    %v29 = vmul.f32 %v21, 0.17677669
    %v30 = vmul.f32 %v22, 0.17677669
    %v31 = vmul.f32 %v23, 0.17677669
    %v32 = vmul.f32 %v24, 0.17677669
    %v33 = vmul.f32 %v25, 0.17677669
    %v34 = vmul.f32 %v26, 0.17677669
    %v35 = vmul.f32 %v27, 0.17677669
    %v36 = vmul.f32 %v28, 0.17677669
    %v37 = vld [vmem:[%s1] sm:$0xff]
    %v38 = vld [vmem:[%s1 + $0x8] sm:$0xff]
    %v39 = vld [vmem:[%s1 + $0x10] sm:$0xff]
    %v40 = vld [vmem:[%s1 + $0x18] sm:$0xff]
    %v41 = vld [vmem:[%s1 + $0x20] sm:$0xff]
    %v42 = vld [vmem:[%s1 + $0x28] sm:$0xff]
    %v43 = vld [vmem:[%s1 + $0x30] sm:$0xff]
    %v44 = vld [vmem:[%s1 + $0x38] sm:$0xff]
    %v45 = vld [vmem:[%s2] sm:$0xff]
    %v46 = vld [vmem:[%s2 + $0x8] sm:$0xff]
    %v47 = vld [vmem:[%s2 + $0x10] sm:$0xff]
    %v48 = vld [vmem:[%s2 + $0x18] sm:$0xff]
    %v49 = vld [vmem:[%s2 + $0x20] sm:$0xff]
    %v50 = vld [vmem:[%s2 + $0x28] sm:$0xff]
    %v51 = vld [vmem:[%s2 + $0x30] sm:$0xff]
    %v52 = vld [vmem:[%s2 + $0x38] sm:$0xff]
    %v53 = vld [vmem:[%s3] sm:$0x1]
    %v55 = vlaneseq
    %v56 = vshrl.u32 %v55, 7
    %v57 = vsub.s32 0, %v56
    %v58 = vrot.slane %v53, %v57
    %vm60 = vcmask 261120
    %v62 = vsel %vm60, %v29, 0
    %v65 = vsel %vm60, %v30, 0
    %v68 = vsel %vm60, %v31, 0
    %v71 = vsel %vm60, %v32, 0
    %v74 = vsel %vm60, %v33, 0
    %v77 = vsel %vm60, %v34, 0
    %v80 = vsel %vm60, %v35, 0
    %v83 = vsel %vm60, %v36, 0
    %v86 = vsel %vm60, %v37, 0
    %v89 = vsel %vm60, %v38, 0
    %v92 = vsel %vm60, %v39, 0
    %v95 = vsel %vm60, %v40, 0
    %v98 = vsel %vm60, %v41, 0
    %v101 = vsel %vm60, %v42, 0
    %v104 = vsel %vm60, %v43, 0
    %v107 = vsel %vm60, %v44, 0
    %109 = vmatprep.subr.mxu0 0.0
    %110 = vmatpush1.xpose.msra.mxu0 %v86
    %111 = vmatprep.subr.mxu0 0.0
    %112 = vmatpush1.xpose.msra.mxu0 %v89
    %113 = vmatprep.subr.mxu0 0.0
    %114 = vmatpush1.xpose.msra.mxu0 %v92
    %115 = vmatprep.subr.mxu0 0.0
    %116 = vmatpush1.xpose.msra.mxu0 %v95
    %117 = vmatprep.subr.mxu0 0.0
    %118 = vmatpush1.xpose.msra.mxu0 %v98
    %119 = vmatprep.subr.mxu0 0.0
    %120 = vmatpush1.xpose.msra.mxu0 %v101
    %121 = vmatprep.subr.mxu0 0.0
    %122 = vmatpush1.xpose.msra.mxu0 %v104
    %123 = vmatprep.subr.mxu0 0.0
    %124 = vmatpush1.xpose.msra.mxu0 %v107
    %125 = vmatprep.subr.mxu0 0.0
    %126 = vmatpush1.xpose.msra.mxu0 0.0
    %127 = vmatprep.subr.mxu0 0.0
    %128 = vmatpush1.xpose.msra.mxu0 0.0
    %129 = vmatprep.subr.mxu0 0.0
    %130 = vmatpush1.xpose.msra.mxu0 0.0
    %131 = vmatprep.subr.mxu0 0.0
    %132 = vmatpush1.xpose.msra.mxu0 0.0
    %133 = vmatprep.subr.mxu0 0.0
    %134 = vmatpush1.xpose.msra.mxu0 0.0
    %135 = vmatprep.subr.mxu0 0.0
    %136 = vmatpush1.xpose.msra.mxu0 0.0
    %137 = vmatprep.subr.mxu0 0.0
    %138 = vmatpush1.xpose.msra.mxu0 0.0
    %139 = vmatprep.subr.mxu0 0.0
    %140 = vmatpush1.xpose.msra.mxu0 0.0
    %141 = vmatprep.subr.mxu0 0.0
    %142 = vmatpush1.xpose.msra.mxu0 0.0
    %143 = vmatprep.subr.mxu0 0.0
    %144 = vmatpush1.xpose.msra.mxu0 0.0
    %145 = vmatprep.subr.mxu0 0.0
    %146 = vmatpush1.xpose.msra.mxu0 0.0
    %147 = vmatprep.subr.mxu0 0.0
    %148 = vmatpush1.xpose.msra.mxu0 0.0
    %149 = vmatprep.subr.mxu0 0.0
    %150 = vmatpush1.xpose.msra.mxu0 0.0
    %151 = vmatprep.subr.mxu0 0.0
    %152 = vmatpush1.xpose.msra.mxu0 0.0
    %153 = vmatprep.subr.mxu0 0.0
    %154 = vmatpush1.xpose.msra.mxu0 0.0
    %155 = vmatprep.subr.mxu0 0.0
    %156 = vmatpush1.xpose.msra.mxu0 0.0
    %157 = vmatprep.subr.mxu0 0.0
    %158 = vmatpush1.xpose.msra.mxu0 0.0
    %159 = vmatprep.subr.mxu0 0.0
    %160 = vmatpush1.xpose.msra.mxu0 0.0
    %161 = vmatprep.subr.mxu0 0.0
    %162 = vmatpush1.xpose.msra.mxu0 0.0
    %163 = vmatprep.subr.mxu0 0.0
    %164 = vmatpush1.xpose.msra.mxu0 0.0
    %165 = vmatprep.subr.mxu0 0.0
    %166 = vmatpush1.xpose.msra.mxu0 0.0
    %167 = vmatprep.subr.mxu0 0.0
    %168 = vmatpush1.xpose.msra.mxu0 0.0
    %169 = vmatprep.subr.mxu0 0.0
    %170 = vmatpush1.xpose.msra.mxu0 0.0
    %171 = vmatprep.subr.mxu0 0.0
    %172 = vmatpush1.xpose.msra.mxu0 0.0
    %173 = vmatprep.mubr.f32.mxu0 0.0
    %174 = vmatmul.mubr.f32.gmra.mrb[0].mxu0 %v62
    %v175 = vpop.f32.mrb[0].mxu0
    %v176 = vadd.f32 %v58, %v175
    %v177 = vpop.f32.mrb[0].mxu0
    %178 = vmatprep.mubr.f32.mxu0 0.0
    %179 = vmatmul.mubr.f32.gmra.mrb[0].mxu0 %v65
    %v180 = vpop.f32.mrb[0].mxu0
    %v181 = vadd.f32 %v58, %v180
    %v182 = vpop.f32.mrb[0].mxu0
    %183 = vmatprep.mubr.f32.mxu0 0.0
    %184 = vmatmul.mubr.f32.gmra.mrb[0].mxu0 %v68
    %v185 = vpop.f32.mrb[0].mxu0
    %v186 = vadd.f32 %v58, %v185
    %v187 = vpop.f32.mrb[0].mxu0
    %188 = vmatprep.mubr.f32.mxu0 0.0
    %189 = vmatmul.mubr.f32.gmra.mrb[0].mxu0 %v71
    %v190 = vpop.f32.mrb[0].mxu0
    %v191 = vadd.f32 %v58, %v190
    %v192 = vpop.f32.mrb[0].mxu0
    %193 = vmatprep.mubr.f32.mxu0 0.0
    %194 = vmatmul.mubr.f32.gmra.mrb[0].mxu0 %v74
    %v195 = vpop.f32.mrb[0].mxu0
    %v196 = vadd.f32 %v58, %v195
    %v197 = vpop.f32.mrb[0].mxu0
    %198 = vmatprep.mubr.f32.mxu0 0.0
    %199 = vmatmul.mubr.f32.gmra.mrb[0].mxu0 %v77
    %v200 = vpop.f32.mrb[0].mxu0
    %v201 = vadd.f32 %v58, %v200
    %v202 = vpop.f32.mrb[0].mxu0
    %203 = vmatprep.mubr.f32.mxu0 0.0
    %204 = vmatmul.mubr.f32.gmra.mrb[0].mxu0 %v80
    %v205 = vpop.f32.mrb[0].mxu0
    %v206 = vadd.f32 %v58, %v205
    %v207 = vpop.f32.mrb[0].mxu0
    %208 = vmatprep.mubr.f32.mxu0 0.0
    %209 = vmatmul.mubr.f32.gmra.mrb[0].mxu0 %v83
    %v210 = vpop.f32.mrb[0].mxu0
    %v211 = vadd.f32 %v58, %v210
    %v212 = vpop.f32.mrb[0].mxu0
    %213 = vdwg.mxu0
    %vm214 = vcmask 523264
    %v215 = vsel %vm214, %v176, -inf
    %216 = vmax.xlane.f32.xlu0 %v215
    %v217 = vpop.xlane.xlu0 %216
    %v218 = vsel %vm214, %v181, -inf
    %219 = vmax.xlane.f32.xlu0 %v218
    %v220 = vpop.xlane.xlu0 %219
    %v221 = vsel %vm214, %v186, -inf
    %222 = vmax.xlane.f32.xlu0 %v221
    %v223 = vpop.xlane.xlu0 %222
    %v224 = vsel %vm214, %v191, -inf
    %225 = vmax.xlane.f32.xlu0 %v224
    %v226 = vpop.xlane.xlu0 %225
    %v227 = vsel %vm214, %v196, -inf
    %228 = vmax.xlane.f32.xlu0 %v227
    %v229 = vpop.xlane.xlu0 %228
    %v230 = vsel %vm214, %v201, -inf
    %231 = vmax.xlane.f32.xlu0 %v230
    %v232 = vpop.xlane.xlu0 %231
    %v233 = vsel %vm214, %v206, -inf
    %234 = vmax.xlane.f32.xlu0 %v233
    %v235 = vpop.xlane.xlu0 %234
    %v236 = vsel %vm214, %v211, -inf
    %237 = vmax.xlane.f32.xlu0 %v236
    %v238 = vpop.xlane.xlu0 %237
    %v239 = vsub.f32 %v176, %v217
    %v240 = vsub.f32 %v181, %v220
    %v241 = vsub.f32 %v186, %v223
    %v242 = vsub.f32 %v191, %v226
    %v243 = vsub.f32 %v196, %v229
    %v244 = vsub.f32 %v201, %v232
    %v245 = vsub.f32 %v206, %v235
    %v246 = vsub.f32 %v211, %v238
    %v247 = vmul.f32 %v239, 1.442695
    %v248 = vpow.pop %v247
    %v249 = vmul.f32 %v240, 1.442695
    %v250 = vpow.pop %v249
    %v251 = vmul.f32 %v241, 1.442695
    %v252 = vpow.pop %v251
    %v253 = vmul.f32 %v242, 1.442695
    %v254 = vpow.pop %v253
    %v255 = vmul.f32 %v243, 1.442695
    %v256 = vpow.pop %v255
    %v257 = vmul.f32 %v244, 1.442695
    %v258 = vpow.pop %v257
    %v259 = vmul.f32 %v245, 1.442695
    %v260 = vpow.pop %v259
    %v261 = vmul.f32 %v246, 1.442695
    %v262 = vpow.pop %v261
    %v263 = vsel %vm214, %v248, 0.0
    %264 = vadd.xlane.f32.xlu0 %v263
    %v265 = vpop.xlane.xlu0 %264
    %v266 = vsel %vm214, %v250, 0.0
    %267 = vadd.xlane.f32.xlu0 %v266
    %v268 = vpop.xlane.xlu0 %267
    %v269 = vsel %vm214, %v252, 0.0
    %270 = vadd.xlane.f32.xlu0 %v269
    %v271 = vpop.xlane.xlu0 %270
    %v272 = vsel %vm214, %v254, 0.0
    %273 = vadd.xlane.f32.xlu0 %v272
    %v274 = vpop.xlane.xlu0 %273
    %v275 = vsel %vm214, %v256, 0.0
    %276 = vadd.xlane.f32.xlu0 %v275
    %v277 = vpop.xlane.xlu0 %276
    %v278 = vsel %vm214, %v258, 0.0
    %279 = vadd.xlane.f32.xlu0 %v278
    %v280 = vpop.xlane.xlu0 %279
    %v281 = vsel %vm214, %v260, 0.0
    %282 = vadd.xlane.f32.xlu0 %v281
    %v283 = vpop.xlane.xlu0 %282
    %v284 = vsel %vm214, %v262, 0.0
    %285 = vadd.xlane.f32.xlu0 %v284
    %v286 = vpop.xlane.xlu0 %285
    %v287 = vrcp.pop %v265
    %v288 = vrcp.pop %v268
    %v289 = vrcp.pop %v271
    %v290 = vrcp.pop %v274
    %v291 = vrcp.pop %v277
    %v292 = vrcp.pop %v280
    %v293 = vrcp.pop %v283
    %v294 = vrcp.pop %v286
    %v295 = vmul.f32 %v265, %v287
    %v296 = vmul.f32 %v268, %v288
    %v297 = vmul.f32 %v271, %v289
    %v298 = vmul.f32 %v274, %v290
    %v299 = vmul.f32 %v277, %v291
    %v300 = vmul.f32 %v280, %v292
    %v301 = vmul.f32 %v283, %v293
    %v302 = vmul.f32 %v286, %v294
    %v303 = vsub.f32 2.0, %v295
    %v304 = vsub.f32 2.0, %v296
    %v305 = vsub.f32 2.0, %v297
    %v306 = vsub.f32 2.0, %v298
    %v307 = vsub.f32 2.0, %v299
    %v308 = vsub.f32 2.0, %v300
    %v309 = vsub.f32 2.0, %v301
    %v310 = vsub.f32 2.0, %v302
    %v311 = vmul.f32 %v287, %v303
    %v312 = vmul.f32 %v288, %v304
    %v313 = vmul.f32 %v289, %v305
    %v314 = vmul.f32 %v290, %v306
    %v315 = vmul.f32 %v291, %v307
    %v316 = vmul.f32 %v292, %v308
    %v317 = vmul.f32 %v293, %v309
    %v318 = vmul.f32 %v294, %v310
    %v319 = vmul.f32 %v248, %v311
    %v320 = vmul.f32 %v250, %v312
    %v321 = vmul.f32 %v252, %v313
    %v322 = vmul.f32 %v254, %v314
    %v323 = vmul.f32 %v256, %v315
    %v324 = vmul.f32 %v258, %v316
    %v325 = vmul.f32 %v260, %v317
    %v326 = vmul.f32 %v262, %v318
    %v328 = vsel %vm214, %v319, 0
    %v331 = vsel %vm214, %v320, 0
    %v334 = vsel %vm214, %v321, 0
    %v337 = vsel %vm214, %v322, 0
    %v340 = vsel %vm214, %v323, 0
    %v343 = vsel %vm214, %v324, 0
    %v346 = vsel %vm214, %v325, 0
    %v349 = vsel %vm214, %v326, 0
    %351 = vmatprep.subr.mxu0 0.0
    %352 = vmatpush1.msra.mxu0 %v45
    %353 = vmatprep.subr.mxu0 0.0
    %354 = vmatpush1.msra.mxu0 %v46
    %355 = vmatprep.subr.mxu0 0.0
    %356 = vmatpush1.msra.mxu0 %v47
    %357 = vmatprep.subr.mxu0 0.0
    %358 = vmatpush1.msra.mxu0 %v48
    %359 = vmatprep.subr.mxu0 0.0
    %360 = vmatpush1.msra.mxu0 %v49
    %361 = vmatprep.subr.mxu0 0.0
    %362 = vmatpush1.msra.mxu0 %v50
    %363 = vmatprep.subr.mxu0 0.0
    %364 = vmatpush1.msra.mxu0 %v51
    %365 = vmatprep.subr.mxu0 0.0
    %366 = vmatpush1.msra.mxu0 %v52
    %367 = vmatprep.subr.mxu0 0.0
    %368 = vmatpush1.msra.mxu0 0.0
    %369 = vmatprep.subr.mxu0 0.0
    %370 = vmatpush1.msra.mxu0 0.0
    %371 = vmatprep.subr.mxu0 0.0
    %372 = vmatpush1.msra.mxu0 0.0
    %373 = vmatprep.subr.mxu0 0.0
    %374 = vmatpush1.msra.mxu0 0.0
    %375 = vmatprep.subr.mxu0 0.0
    %376 = vmatpush1.msra.mxu0 0.0
    %377 = vmatprep.subr.mxu0 0.0
    %378 = vmatpush1.msra.mxu0 0.0
    %379 = vmatprep.subr.mxu0 0.0
    %380 = vmatpush1.msra.mxu0 0.0
    %381 = vmatprep.subr.mxu0 0.0
    %382 = vmatpush1.msra.mxu0 0.0
    %383 = vmatprep.subr.mxu0 0.0
    %384 = vmatpush1.msra.mxu0 0.0
    %385 = vmatprep.subr.mxu0 0.0
    %386 = vmatpush1.msra.mxu0 0.0
    %387 = vmatprep.subr.mxu0 0.0
    %388 = vmatpush1.msra.mxu0 0.0
    %389 = vmatprep.subr.mxu0 0.0
    %390 = vmatpush1.msra.mxu0 0.0
    %391 = vmatprep.subr.mxu0 0.0
    %392 = vmatpush1.msra.mxu0 0.0
    %393 = vmatprep.subr.mxu0 0.0
    %394 = vmatpush1.msra.mxu0 0.0
    %395 = vmatprep.subr.mxu0 0.0
    %396 = vmatpush1.msra.mxu0 0.0
    %397 = vmatprep.subr.mxu0 0.0
    %398 = vmatpush1.msra.mxu0 0.0
    %399 = vmatprep.subr.mxu0 0.0
    %400 = vmatpush1.msra.mxu0 0.0
    %401 = vmatprep.subr.mxu0 0.0
    %402 = vmatpush1.msra.mxu0 0.0
    %403 = vmatprep.subr.mxu0 0.0
    %404 = vmatpush1.msra.mxu0 0.0
    %405 = vmatprep.subr.mxu0 0.0
    %406 = vmatpush1.msra.mxu0 0.0
    %407 = vmatprep.subr.mxu0 0.0
    %408 = vmatpush1.msra.mxu0 0.0
    %409 = vmatprep.subr.mxu0 0.0
    %410 = vmatpush1.msra.mxu0 0.0
    %411 = vmatprep.subr.mxu0 0.0
    %412 = vmatpush1.msra.mxu0 0.0
    %413 = vmatprep.subr.mxu0 0.0
    %414 = vmatpush1.msra.mxu0 0.0
    %415 = vmatprep.mubr.f32.mxu0 0.0
    %416 = vmatmul.mubr.f32.gmra.mrb[0].mxu0 %v328
    %v417 = vpop.f32.mrb[0].mxu0
    %v418 = vadd.f32 0.0, %v417
    %v419 = vpop.f32.mrb[0].mxu0
    %420 = vmatprep.mubr.f32.mxu0 0.0
    %421 = vmatmul.mubr.f32.gmra.mrb[0].mxu0 %v331
    %v422 = vpop.f32.mrb[0].mxu0
    %v423 = vadd.f32 0.0, %v422
    %v424 = vpop.f32.mrb[0].mxu0
    %425 = vmatprep.mubr.f32.mxu0 0.0
    %426 = vmatmul.mubr.f32.gmra.mrb[0].mxu0 %v334
    %v427 = vpop.f32.mrb[0].mxu0
    %v428 = vadd.f32 0.0, %v427
    %v429 = vpop.f32.mrb[0].mxu0
    %430 = vmatprep.mubr.f32.mxu0 0.0
    %431 = vmatmul.mubr.f32.gmra.mrb[0].mxu0 %v337
    %v432 = vpop.f32.mrb[0].mxu0
    %v433 = vadd.f32 0.0, %v432
    %v434 = vpop.f32.mrb[0].mxu0
    %435 = vmatprep.mubr.f32.mxu0 0.0
    %436 = vmatmul.mubr.f32.gmra.mrb[0].mxu0 %v340
    %v437 = vpop.f32.mrb[0].mxu0
    %v438 = vadd.f32 0.0, %v437
    %v439 = vpop.f32.mrb[0].mxu0
    %440 = vmatprep.mubr.f32.mxu0 0.0
    %441 = vmatmul.mubr.f32.gmra.mrb[0].mxu0 %v343
    %v442 = vpop.f32.mrb[0].mxu0
    %v443 = vadd.f32 0.0, %v442
    %v444 = vpop.f32.mrb[0].mxu0
    %445 = vmatprep.mubr.f32.mxu0 0.0
    %446 = vmatmul.mubr.f32.gmra.mrb[0].mxu0 %v346
    %v447 = vpop.f32.mrb[0].mxu0
    %v448 = vadd.f32 0.0, %v447
    %v449 = vpop.f32.mrb[0].mxu0
    %450 = vmatprep.mubr.f32.mxu0 0.0
    %451 = vmatmul.mubr.f32.gmra.mrb[0].mxu0 %v349
    %v452 = vpop.f32.mrb[0].mxu0
    %v453 = vadd.f32 0.0, %v452
    %v454 = vpop.f32.mrb[0].mxu0
    %455 = vdwg.mxu0
    %s456 = scalar_lea.vmem %s0, 64
    %v457 = vld [vmem:[%s456] sm:$0xff]
    %v458 = vld [vmem:[%s456 + $0x8] sm:$0xff]
    %v459 = vld [vmem:[%s456 + $0x10] sm:$0xff]
    %v460 = vld [vmem:[%s456 + $0x18] sm:$0xff]
    %v461 = vld [vmem:[%s456 + $0x20] sm:$0xff]
    %v462 = vld [vmem:[%s456 + $0x28] sm:$0xff]
    %v463 = vld [vmem:[%s456 + $0x30] sm:$0xff]
    %v464 = vld [vmem:[%s456 + $0x38] sm:$0xff]
    %v465 = vmul.f32 %v457, 0.17677669
    %v466 = vmul.f32 %v458, 0.17677669
    %v467 = vmul.f32 %v459, 0.17677669
    %v468 = vmul.f32 %v460, 0.17677669
    %v469 = vmul.f32 %v461, 0.17677669
    %v470 = vmul.f32 %v462, 0.17677669
    %v471 = vmul.f32 %v463, 0.17677669
    %v472 = vmul.f32 %v464, 0.17677669
    %s473 = scalar_lea.vmem %s1, 64
    %v474 = vld [vmem:[%s473] sm:$0xff]
    %v475 = vld [vmem:[%s473 + $0x8] sm:$0xff]
    %v476 = vld [vmem:[%s473 + $0x10] sm:$0xff]
    %v477 = vld [vmem:[%s473 + $0x18] sm:$0xff]
    %v478 = vld [vmem:[%s473 + $0x20] sm:$0xff]
    %v479 = vld [vmem:[%s473 + $0x28] sm:$0xff]
    %v480 = vld [vmem:[%s473 + $0x30] sm:$0xff]
    %v481 = vld [vmem:[%s473 + $0x38] sm:$0xff]
    %s482 = scalar_lea.vmem %s2, 64
    %v483 = vld [vmem:[%s482] sm:$0xff]
    %v484 = vld [vmem:[%s482 + $0x8] sm:$0xff]
    %v485 = vld [vmem:[%s482 + $0x10] sm:$0xff]
    %v486 = vld [vmem:[%s482 + $0x18] sm:$0xff]
    %v487 = vld [vmem:[%s482 + $0x20] sm:$0xff]
    %v488 = vld [vmem:[%s482 + $0x28] sm:$0xff]
    %v489 = vld [vmem:[%s482 + $0x30] sm:$0xff]
    %v490 = vld [vmem:[%s482 + $0x38] sm:$0xff]
    %s491 = scalar_lea.vmem %s3, 1
    %v492 = vld [vmem:[%s491] sm:$0x1]
    %v494 = vlaneseq
    %v495 = vshrl.u32 %v494, 7
    %v496 = vsub.s32 0, %v495
    %v497 = vrot.slane %v492, %v496
    %v500 = vsel %vm60, %v465, 0
    %v503 = vsel %vm60, %v466, 0
    %v506 = vsel %vm60, %v467, 0
    %v509 = vsel %vm60, %v468, 0
    %v512 = vsel %vm60, %v469, 0
    %v515 = vsel %vm60, %v470, 0
    %v518 = vsel %vm60, %v471, 0
    %v521 = vsel %vm60, %v472, 0
    %v524 = vsel %vm60, %v474, 0
    %v527 = vsel %vm60, %v475, 0
    %v530 = vsel %vm60, %v476, 0
    %v533 = vsel %vm60, %v477, 0
    %v536 = vsel %vm60, %v478, 0
    %v539 = vsel %vm60, %v479, 0
    %v542 = vsel %vm60, %v480, 0
    %v545 = vsel %vm60, %v481, 0
    %547 = vmatprep.subr.mxu0 0.0
    %548 = vmatpush1.xpose.msra.mxu0 %v524
    %549 = vmatprep.subr.mxu0 0.0
    %550 = vmatpush1.xpose.msra.mxu0 %v527
    %551 = vmatprep.subr.mxu0 0.0
    %552 = vmatpush1.xpose.msra.mxu0 %v530
    %553 = vmatprep.subr.mxu0 0.0
    %554 = vmatpush1.xpose.msra.mxu0 %v533
    %555 = vmatprep.subr.mxu0 0.0
    %556 = vmatpush1.xpose.msra.mxu0 %v536
    %557 = vmatprep.subr.mxu0 0.0
    %558 = vmatpush1.xpose.msra.mxu0 %v539
    %559 = vmatprep.subr.mxu0 0.0
    %560 = vmatpush1.xpose.msra.mxu0 %v542
    %561 = vmatprep.subr.mxu0 0.0
    %562 = vmatpush1.xpose.msra.mxu0 %v545
    %563 = vmatprep.subr.mxu0 0.0
    %564 = vmatpush1.xpose.msra.mxu0 0.0
    %565 = vmatprep.subr.mxu0 0.0
    %566 = vmatpush1.xpose.msra.mxu0 0.0
    %567 = vmatprep.subr.mxu0 0.0
    %568 = vmatpush1.xpose.msra.mxu0 0.0
    %569 = vmatprep.subr.mxu0 0.0
    %570 = vmatpush1.xpose.msra.mxu0 0.0
    %571 = vmatprep.subr.mxu0 0.0
    %572 = vmatpush1.xpose.msra.mxu0 0.0
    %573 = vmatprep.subr.mxu0 0.0
    %574 = vmatpush1.xpose.msra.mxu0 0.0
    %575 = vmatprep.subr.mxu0 0.0
    %576 = vmatpush1.xpose.msra.mxu0 0.0
    %577 = vmatprep.subr.mxu0 0.0
    %578 = vmatpush1.xpose.msra.mxu0 0.0
    %579 = vmatprep.subr.mxu0 0.0
    %580 = vmatpush1.xpose.msra.mxu0 0.0
    %581 = vmatprep.subr.mxu0 0.0
    %582 = vmatpush1.xpose.msra.mxu0 0.0
    %583 = vmatprep.subr.mxu0 0.0
    %584 = vmatpush1.xpose.msra.mxu0 0.0
    %585 = vmatprep.subr.mxu0 0.0
    %586 = vmatpush1.xpose.msra.mxu0 0.0
    %587 = vmatprep.subr.mxu0 0.0
    %588 = vmatpush1.xpose.msra.mxu0 0.0
    %589 = vmatprep.subr.mxu0 0.0
    %590 = vmatpush1.xpose.msra.mxu0 0.0
    %591 = vmatprep.subr.mxu0 0.0
    %592 = vmatpush1.xpose.msra.mxu0 0.0
    %593 = vmatprep.subr.mxu0 0.0
    %594 = vmatpush1.xpose.msra.mxu0 0.0
    %595 = vmatprep.subr.mxu0 0.0
    %596 = vmatpush1.xpose.msra.mxu0 0.0
    %597 = vmatprep.subr.mxu0 0.0
    %598 = vmatpush1.xpose.msra.mxu0 0.0
    %599 = vmatprep.subr.mxu0 0.0
    %600 = vmatpush1.xpose.msra.mxu0 0.0
    %601 = vmatprep.subr.mxu0 0.0
    %602 = vmatpush1.xpose.msra.mxu0 0.0
    %603 = vmatprep.subr.mxu0 0.0
    %604 = vmatpush1.xpose.msra.mxu0 0.0
    %605 = vmatprep.subr.mxu0 0.0
    %606 = vmatpush1.xpose.msra.mxu0 0.0
    %607 = vmatprep.subr.mxu0 0.0
    %608 = vmatpush1.xpose.msra.mxu0 0.0
    %609 = vmatprep.subr.mxu0 0.0
    %610 = vmatpush1.xpose.msra.mxu0 0.0
    %611 = vmatprep.mubr.f32.mxu0 0.0
    %612 = vmatmul.mubr.f32.gmra.mrb[0].mxu0 %v500
    %v613 = vpop.f32.mrb[0].mxu0
    %v614 = vadd.f32 %v497, %v613
    %v615 = vpop.f32.mrb[0].mxu0
    %616 = vmatprep.mubr.f32.mxu0 0.0
    %617 = vmatmul.mubr.f32.gmra.mrb[0].mxu0 %v503
    %v618 = vpop.f32.mrb[0].mxu0
    %v619 = vadd.f32 %v497, %v618
    %v620 = vpop.f32.mrb[0].mxu0
    %621 = vmatprep.mubr.f32.mxu0 0.0
    %622 = vmatmul.mubr.f32.gmra.mrb[0].mxu0 %v506
    %v623 = vpop.f32.mrb[0].mxu0
    %v624 = vadd.f32 %v497, %v623
    %v625 = vpop.f32.mrb[0].mxu0
    %626 = vmatprep.mubr.f32.mxu0 0.0
    %627 = vmatmul.mubr.f32.gmra.mrb[0].mxu0 %v509
    %v628 = vpop.f32.mrb[0].mxu0
    %v629 = vadd.f32 %v497, %v628
    %v630 = vpop.f32.mrb[0].mxu0
    %631 = vmatprep.mubr.f32.mxu0 0.0
    %632 = vmatmul.mubr.f32.gmra.mrb[0].mxu0 %v512
    %v633 = vpop.f32.mrb[0].mxu0
    %v634 = vadd.f32 %v497, %v633
    %v635 = vpop.f32.mrb[0].mxu0
    %636 = vmatprep.mubr.f32.mxu0 0.0
    %637 = vmatmul.mubr.f32.gmra.mrb[0].mxu0 %v515
    %v638 = vpop.f32.mrb[0].mxu0
    %v639 = vadd.f32 %v497, %v638
    %v640 = vpop.f32.mrb[0].mxu0
    %641 = vmatprep.mubr.f32.mxu0 0.0
    %642 = vmatmul.mubr.f32.gmra.mrb[0].mxu0 %v518
    %v643 = vpop.f32.mrb[0].mxu0
    %v644 = vadd.f32 %v497, %v643
    %v645 = vpop.f32.mrb[0].mxu0
    %646 = vmatprep.mubr.f32.mxu0 0.0
    %647 = vmatmul.mubr.f32.gmra.mrb[0].mxu0 %v521
    %v648 = vpop.f32.mrb[0].mxu0
    %v649 = vadd.f32 %v497, %v648
    %v650 = vpop.f32.mrb[0].mxu0
    %651 = vdwg.mxu0
    %v652 = vsel %vm214, %v614, -inf
    %653 = vmax.xlane.f32.xlu0 %v652
    %v654 = vpop.xlane.xlu0 %653
    %v655 = vsel %vm214, %v619, -inf
    %656 = vmax.xlane.f32.xlu0 %v655
    %v657 = vpop.xlane.xlu0 %656
    %v658 = vsel %vm214, %v624, -inf
    %659 = vmax.xlane.f32.xlu0 %v658
    %v660 = vpop.xlane.xlu0 %659
    %v661 = vsel %vm214, %v629, -inf
    %662 = vmax.xlane.f32.xlu0 %v661
    %v663 = vpop.xlane.xlu0 %662
    %v664 = vsel %vm214, %v634, -inf
    %665 = vmax.xlane.f32.xlu0 %v664
    %v666 = vpop.xlane.xlu0 %665
    %v667 = vsel %vm214, %v639, -inf
    %668 = vmax.xlane.f32.xlu0 %v667
    %v669 = vpop.xlane.xlu0 %668
    %v670 = vsel %vm214, %v644, -inf
    %671 = vmax.xlane.f32.xlu0 %v670
    %v672 = vpop.xlane.xlu0 %671
    %v673 = vsel %vm214, %v649, -inf
    %674 = vmax.xlane.f32.xlu0 %v673
    %v675 = vpop.xlane.xlu0 %674
    %v676 = vsub.f32 %v614, %v654
    %v677 = vsub.f32 %v619, %v657
    %v678 = vsub.f32 %v624, %v660
    %v679 = vsub.f32 %v629, %v663
    %v680 = vsub.f32 %v634, %v666
    %v681 = vsub.f32 %v639, %v669
    %v682 = vsub.f32 %v644, %v672
    %v683 = vsub.f32 %v649, %v675
    %v684 = vmul.f32 %v676, 1.442695
    %v685 = vpow.pop %v684
    %v686 = vmul.f32 %v677, 1.442695
    %v687 = vpow.pop %v686
    %v688 = vmul.f32 %v678, 1.442695
    %v689 = vpow.pop %v688
    %v690 = vmul.f32 %v679, 1.442695
    %v691 = vpow.pop %v690
    %v692 = vmul.f32 %v680, 1.442695
    %v693 = vpow.pop %v692
    %v694 = vmul.f32 %v681, 1.442695
    %v695 = vpow.pop %v694
    %v696 = vmul.f32 %v682, 1.442695
    %v697 = vpow.pop %v696
    %v698 = vmul.f32 %v683, 1.442695
    %v699 = vpow.pop %v698
    %v700 = vsel %vm214, %v685, 0.0
    %701 = vadd.xlane.f32.xlu0 %v700
    %v702 = vpop.xlane.xlu0 %701
    %v703 = vsel %vm214, %v687, 0.0
    %704 = vadd.xlane.f32.xlu0 %v703
    %v705 = vpop.xlane.xlu0 %704
    %v706 = vsel %vm214, %v689, 0.0
    %707 = vadd.xlane.f32.xlu0 %v706
    %v708 = vpop.xlane.xlu0 %707
    %v709 = vsel %vm214, %v691, 0.0
    %710 = vadd.xlane.f32.xlu0 %v709
    %v711 = vpop.xlane.xlu0 %710
    %v712 = vsel %vm214, %v693, 0.0
    %713 = vadd.xlane.f32.xlu0 %v712
    %v714 = vpop.xlane.xlu0 %713
    %v715 = vsel %vm214, %v695, 0.0
    %716 = vadd.xlane.f32.xlu0 %v715
    %v717 = vpop.xlane.xlu0 %716
    %v718 = vsel %vm214, %v697, 0.0
    %719 = vadd.xlane.f32.xlu0 %v718
    %v720 = vpop.xlane.xlu0 %719
    %v721 = vsel %vm214, %v699, 0.0
    %722 = vadd.xlane.f32.xlu0 %v721
    %v723 = vpop.xlane.xlu0 %722
    %v724 = vrcp.pop %v702
    %v725 = vrcp.pop %v705
    %v726 = vrcp.pop %v708
    %v727 = vrcp.pop %v711
    %v728 = vrcp.pop %v714
    %v729 = vrcp.pop %v717
    %v730 = vrcp.pop %v720
    %v731 = vrcp.pop %v723
    %v732 = vmul.f32 %v702, %v724
    %v733 = vmul.f32 %v705, %v725
    %v734 = vmul.f32 %v708, %v726
    %v735 = vmul.f32 %v711, %v727
    %v736 = vmul.f32 %v714, %v728
    %v737 = vmul.f32 %v717, %v729
    %v738 = vmul.f32 %v720, %v730
    %v739 = vmul.f32 %v723, %v731
    %v740 = vsub.f32 2.0, %v732
    %v741 = vsub.f32 2.0, %v733
    %v742 = vsub.f32 2.0, %v734
    %v743 = vsub.f32 2.0, %v735
    %v744 = vsub.f32 2.0, %v736
    %v745 = vsub.f32 2.0, %v737
    %v746 = vsub.f32 2.0, %v738
    %v747 = vsub.f32 2.0, %v739
    %v748 = vmul.f32 %v724, %v740
    %v749 = vmul.f32 %v725, %v741
    %v750 = vmul.f32 %v726, %v742
    %v751 = vmul.f32 %v727, %v743
    %v752 = vmul.f32 %v728, %v744
    %v753 = vmul.f32 %v729, %v745
    %v754 = vmul.f32 %v730, %v746
    %v755 = vmul.f32 %v731, %v747
    %v756 = vmul.f32 %v685, %v748
    %v757 = vmul.f32 %v687, %v749
    %v758 = vmul.f32 %v689, %v750
    %v759 = vmul.f32 %v691, %v751
    %v760 = vmul.f32 %v693, %v752
    %v761 = vmul.f32 %v695, %v753
    %v762 = vmul.f32 %v697, %v754
    %v763 = vmul.f32 %v699, %v755
    %v765 = vsel %vm214, %v756, 0
    %v768 = vsel %vm214, %v757, 0
    %v771 = vsel %vm214, %v758, 0
    %v774 = vsel %vm214, %v759, 0
    %v777 = vsel %vm214, %v760, 0
    %v780 = vsel %vm214, %v761, 0
    %v783 = vsel %vm214, %v762, 0
    %v786 = vsel %vm214, %v763, 0
    %788 = vmatprep.subr.mxu0 0.0
    %789 = vmatpush1.msra.mxu0 %v483
    %790 = vmatprep.subr.mxu0 0.0
    %791 = vmatpush1.msra.mxu0 %v484
    %792 = vmatprep.subr.mxu0 0.0
    %793 = vmatpush1.msra.mxu0 %v485
    %794 = vmatprep.subr.mxu0 0.0
    %795 = vmatpush1.msra.mxu0 %v486
    %796 = vmatprep.subr.mxu0 0.0
    %797 = vmatpush1.msra.mxu0 %v487
    %798 = vmatprep.subr.mxu0 0.0
    %799 = vmatpush1.msra.mxu0 %v488
    %800 = vmatprep.subr.mxu0 0.0
    %801 = vmatpush1.msra.mxu0 %v489
    %802 = vmatprep.subr.mxu0 0.0
    %803 = vmatpush1.msra.mxu0 %v490
    %804 = vmatprep.subr.mxu0 0.0
    %805 = vmatpush1.msra.mxu0 0.0
    %806 = vmatprep.subr.mxu0 0.0
    %807 = vmatpush1.msra.mxu0 0.0
    %808 = vmatprep.subr.mxu0 0.0
    %809 = vmatpush1.msra.mxu0 0.0
    %810 = vmatprep.subr.mxu0 0.0
    %811 = vmatpush1.msra.mxu0 0.0
    %812 = vmatprep.subr.mxu0 0.0
    %813 = vmatpush1.msra.mxu0 0.0
    %814 = vmatprep.subr.mxu0 0.0
    %815 = vmatpush1.msra.mxu0 0.0
    %816 = vmatprep.subr.mxu0 0.0
    %817 = vmatpush1.msra.mxu0 0.0
    %818 = vmatprep.subr.mxu0 0.0
    %819 = vmatpush1.msra.mxu0 0.0
    %820 = vmatprep.subr.mxu0 0.0
    %821 = vmatpush1.msra.mxu0 0.0
    %822 = vmatprep.subr.mxu0 0.0
    %823 = vmatpush1.msra.mxu0 0.0
    %824 = vmatprep.subr.mxu0 0.0
    %825 = vmatpush1.msra.mxu0 0.0
    %826 = vmatprep.subr.mxu0 0.0
    %827 = vmatpush1.msra.mxu0 0.0
    %828 = vmatprep.subr.mxu0 0.0
    %829 = vmatpush1.msra.mxu0 0.0
    %830 = vmatprep.subr.mxu0 0.0
    %831 = vmatpush1.msra.mxu0 0.0
    %832 = vmatprep.subr.mxu0 0.0
    %833 = vmatpush1.msra.mxu0 0.0
    %834 = vmatprep.subr.mxu0 0.0
    %835 = vmatpush1.msra.mxu0 0.0
    %836 = vmatprep.subr.mxu0 0.0
    %837 = vmatpush1.msra.mxu0 0.0
    %838 = vmatprep.subr.mxu0 0.0
    %839 = vmatpush1.msra.mxu0 0.0
    %840 = vmatprep.subr.mxu0 0.0
    %841 = vmatpush1.msra.mxu0 0.0
    %842 = vmatprep.subr.mxu0 0.0
    %843 = vmatpush1.msra.mxu0 0.0
    %844 = vmatprep.subr.mxu0 0.0
    %845 = vmatpush1.msra.mxu0 0.0
    %846 = vmatprep.subr.mxu0 0.0
    %847 = vmatpush1.msra.mxu0 0.0
    %848 = vmatprep.subr.mxu0 0.0
    %849 = vmatpush1.msra.mxu0 0.0
    %850 = vmatprep.subr.mxu0 0.0
    %851 = vmatpush1.msra.mxu0 0.0
    %852 = vmatprep.mubr.f32.mxu0 0.0
    %853 = vmatmul.mubr.f32.gmra.mrb[0].mxu0 %v765
    %v854 = vpop.f32.mrb[0].mxu0
    %v855 = vadd.f32 0.0, %v854
    %v856 = vpop.f32.mrb[0].mxu0
    %857 = vmatprep.mubr.f32.mxu0 0.0
    %858 = vmatmul.mubr.f32.gmra.mrb[0].mxu0 %v768
    %v859 = vpop.f32.mrb[0].mxu0
    %v860 = vadd.f32 0.0, %v859
    %v861 = vpop.f32.mrb[0].mxu0
    %862 = vmatprep.mubr.f32.mxu0 0.0
    %863 = vmatmul.mubr.f32.gmra.mrb[0].mxu0 %v771
    %v864 = vpop.f32.mrb[0].mxu0
    %v865 = vadd.f32 0.0, %v864
    %v866 = vpop.f32.mrb[0].mxu0
    %867 = vmatprep.mubr.f32.mxu0 0.0
    %868 = vmatmul.mubr.f32.gmra.mrb[0].mxu0 %v774
    %v869 = vpop.f32.mrb[0].mxu0
    %v870 = vadd.f32 0.0, %v869
    %v871 = vpop.f32.mrb[0].mxu0
    %872 = vmatprep.mubr.f32.mxu0 0.0
    %873 = vmatmul.mubr.f32.gmra.mrb[0].mxu0 %v777
    %v874 = vpop.f32.mrb[0].mxu0
    %v875 = vadd.f32 0.0, %v874
    %v876 = vpop.f32.mrb[0].mxu0
    %877 = vmatprep.mubr.f32.mxu0 0.0
    %878 = vmatmul.mubr.f32.gmra.mrb[0].mxu0 %v780
    %v879 = vpop.f32.mrb[0].mxu0
    %v880 = vadd.f32 0.0, %v879
    %v881 = vpop.f32.mrb[0].mxu0
    %882 = vmatprep.mubr.f32.mxu0 0.0
    %883 = vmatmul.mubr.f32.gmra.mrb[0].mxu0 %v783
    %v884 = vpop.f32.mrb[0].mxu0
    %v885 = vadd.f32 0.0, %v884
    %v886 = vpop.f32.mrb[0].mxu0
    %887 = vmatprep.mubr.f32.mxu0 0.0
    %888 = vmatmul.mubr.f32.gmra.mrb[0].mxu0 %v786
    %v889 = vpop.f32.mrb[0].mxu0
    %v890 = vadd.f32 0.0, %v889
    %v891 = vpop.f32.mrb[0].mxu0
    %892 = vdwg.mxu0
    %901 = vrot.lane.b32.xlu0 %v614, 64
    %v902 = vpop.permute.xlu0 %901
    %903 = vrot.lane.b32.xlu0 %v619, 64
    %v904 = vpop.permute.xlu0 %903
    %905 = vrot.lane.b32.xlu0 %v624, 64
    %v906 = vpop.permute.xlu0 %905
    %907 = vrot.lane.b32.xlu0 %v629, 64
    %v908 = vpop.permute.xlu0 %907
    %909 = vrot.lane.b32.xlu0 %v634, 64
    %v910 = vpop.permute.xlu0 %909
    %911 = vrot.lane.b32.xlu0 %v639, 64
    %v912 = vpop.permute.xlu0 %911
    %913 = vrot.lane.b32.xlu0 %v644, 64
    %v914 = vpop.permute.xlu0 %913
    %915 = vrot.lane.b32.xlu0 %v649, 64
    %v916 = vpop.permute.xlu0 %915
    %v925 = vsel %vm214, %v176, %v902
    %v926 = vsel %vm214, %v181, %v904
    %v927 = vsel %vm214, %v186, %v906
    %v928 = vsel %vm214, %v191, %v908
    %v929 = vsel %vm214, %v196, %v910
    %v930 = vsel %vm214, %v201, %v912
    %v931 = vsel %vm214, %v206, %v914
    %v932 = vsel %vm214, %v211, %v916
    %933 = vst [vmem:[#allocation4] sm:$0xff] %v925
    %934 = vst [vmem:[#allocation4 + $0x20] sm:$0xff] %v926
    %935 = vst [vmem:[#allocation4 + $0x40] sm:$0xff] %v927
    %936 = vst [vmem:[#allocation4 + $0x60] sm:$0xff] %v928
    %937 = vst [vmem:[#allocation4 + $0x80] sm:$0xff] %v929
    %938 = vst [vmem:[#allocation4 + $0xa0] sm:$0xff] %v930
    %939 = vst [vmem:[#allocation4 + $0xc0] sm:$0xff] %v931
    %940 = vst [vmem:[#allocation4 + $0xe0] sm:$0xff] %v932
    %s941 = scalar_lea.vmem %s0, 128
    %v942 = vld [vmem:[%s941] sm:$0xff]
    %v943 = vld [vmem:[%s941 + $0x8] sm:$0xff]
    %v944 = vld [vmem:[%s941 + $0x10] sm:$0xff]
    %v945 = vld [vmem:[%s941 + $0x18] sm:$0xff]
    %v946 = vld [vmem:[%s941 + $0x20] sm:$0xff]
    %v947 = vld [vmem:[%s941 + $0x28] sm:$0xff]
    %v948 = vld [vmem:[%s941 + $0x30] sm:$0xff]
    %v949 = vld [vmem:[%s941 + $0x38] sm:$0xff]
    %v950 = vmul.f32 %v942, 0.17677669
    %v951 = vmul.f32 %v943, 0.17677669
    %v952 = vmul.f32 %v944, 0.17677669
    %v953 = vmul.f32 %v945, 0.17677669
    %v954 = vmul.f32 %v946, 0.17677669
    %v955 = vmul.f32 %v947, 0.17677669
    %v956 = vmul.f32 %v948, 0.17677669
    %v957 = vmul.f32 %v949, 0.17677669
    %s958 = scalar_lea.vmem %s1, 128
    %v959 = vld [vmem:[%s958] sm:$0xff]
    %v960 = vld [vmem:[%s958 + $0x8] sm:$0xff]
    %v961 = vld [vmem:[%s958 + $0x10] sm:$0xff]
    %v962 = vld [vmem:[%s958 + $0x18] sm:$0xff]
    %v963 = vld [vmem:[%s958 + $0x20] sm:$0xff]
    %v964 = vld [vmem:[%s958 + $0x28] sm:$0xff]
    %v965 = vld [vmem:[%s958 + $0x30] sm:$0xff]
    %v966 = vld [vmem:[%s958 + $0x38] sm:$0xff]
    %s967 = scalar_lea.vmem %s2, 128
    %v968 = vld [vmem:[%s967] sm:$0xff]
    %v969 = vld [vmem:[%s967 + $0x8] sm:$0xff]
    %v970 = vld [vmem:[%s967 + $0x10] sm:$0xff]
    %v971 = vld [vmem:[%s967 + $0x18] sm:$0xff]
    %v972 = vld [vmem:[%s967 + $0x20] sm:$0xff]
    %v973 = vld [vmem:[%s967 + $0x28] sm:$0xff]
    %v974 = vld [vmem:[%s967 + $0x30] sm:$0xff]
    %v975 = vld [vmem:[%s967 + $0x38] sm:$0xff]
    %s976 = scalar_lea.vmem %s3, 2
    %v977 = vld [vmem:[%s976] sm:$0x1]
    %v979 = vlaneseq
    %v980 = vshrl.u32 %v979, 7
    %v981 = vsub.s32 0, %v980
    %v982 = vrot.slane %v977, %v981
    %v985 = vsel %vm60, %v950, 0
    %v988 = vsel %vm60, %v951, 0
    %v991 = vsel %vm60, %v952, 0
    %v994 = vsel %vm60, %v953, 0
    %v997 = vsel %vm60, %v954, 0
    %v1000 = vsel %vm60, %v955, 0
    %v1003 = vsel %vm60, %v956, 0
    %v1006 = vsel %vm60, %v957, 0
    %v1009 = vsel %vm60, %v959, 0
    %v1012 = vsel %vm60, %v960, 0
    %v1015 = vsel %vm60, %v961, 0
    %v1018 = vsel %vm60, %v962, 0
    %v1021 = vsel %vm60, %v963, 0
    %v1024 = vsel %vm60, %v964, 0
    %v1027 = vsel %vm60, %v965, 0
    %v1030 = vsel %vm60, %v966, 0
    %1032 = vmatprep.subr.mxu0 0.0
    %1033 = vmatpush1.xpose.msra.mxu0 %v1009
    %1034 = vmatprep.subr.mxu0 0.0
    %1035 = vmatpush1.xpose.msra.mxu0 %v1012
    %1036 = vmatprep.subr.mxu0 0.0
    %1037 = vmatpush1.xpose.msra.mxu0 %v1015
    %1038 = vmatprep.subr.mxu0 0.0
    %1039 = vmatpush1.xpose.msra.mxu0 %v1018
    %1040 = vmatprep.subr.mxu0 0.0
    %1041 = vmatpush1.xpose.msra.mxu0 %v1021
    %1042 = vmatprep.subr.mxu0 0.0
    %1043 = vmatpush1.xpose.msra.mxu0 %v1024
    %1044 = vmatprep.subr.mxu0 0.0
    %1045 = vmatpush1.xpose.msra.mxu0 %v1027
    %1046 = vmatprep.subr.mxu0 0.0
    %1047 = vmatpush1.xpose.msra.mxu0 %v1030
    %1048 = vmatprep.subr.mxu0 0.0
    %1049 = vmatpush1.xpose.msra.mxu0 0.0
    %1050 = vmatprep.subr.mxu0 0.0
    %1051 = vmatpush1.xpose.msra.mxu0 0.0
    %1052 = vmatprep.subr.mxu0 0.0
    %1053 = vmatpush1.xpose.msra.mxu0 0.0
    %1054 = vmatprep.subr.mxu0 0.0
    %1055 = vmatpush1.xpose.msra.mxu0 0.0
    %1056 = vmatprep.subr.mxu0 0.0
    %1057 = vmatpush1.xpose.msra.mxu0 0.0
    %1058 = vmatprep.subr.mxu0 0.0
    %1059 = vmatpush1.xpose.msra.mxu0 0.0
    %1060 = vmatprep.subr.mxu0 0.0
    %1061 = vmatpush1.xpose.msra.mxu0 0.0
    %1062 = vmatprep.subr.mxu0 0.0
    %1063 = vmatpush1.xpose.msra.mxu0 0.0
    %1064 = vmatprep.subr.mxu0 0.0
    %1065 = vmatpush1.xpose.msra.mxu0 0.0
    %1066 = vmatprep.subr.mxu0 0.0
    %1067 = vmatpush1.xpose.msra.mxu0 0.0
    %1068 = vmatprep.subr.mxu0 0.0
    %1069 = vmatpush1.xpose.msra.mxu0 0.0
    %1070 = vmatprep.subr.mxu0 0.0
    %1071 = vmatpush1.xpose.msra.mxu0 0.0
    %1072 = vmatprep.subr.mxu0 0.0
    %1073 = vmatpush1.xpose.msra.mxu0 0.0
    %1074 = vmatprep.subr.mxu0 0.0
    %1075 = vmatpush1.xpose.msra.mxu0 0.0
    %1076 = vmatprep.subr.mxu0 0.0
    %1077 = vmatpush1.xpose.msra.mxu0 0.0
    %1078 = vmatprep.subr.mxu0 0.0
    %1079 = vmatpush1.xpose.msra.mxu0 0.0
    %1080 = vmatprep.subr.mxu0 0.0
    %1081 = vmatpush1.xpose.msra.mxu0 0.0
    %1082 = vmatprep.subr.mxu0 0.0
    %1083 = vmatpush1.xpose.msra.mxu0 0.0
    %1084 = vmatprep.subr.mxu0 0.0
    %1085 = vmatpush1.xpose.msra.mxu0 0.0
    %1086 = vmatprep.subr.mxu0 0.0
    %1087 = vmatpush1.xpose.msra.mxu0 0.0
    %1088 = vmatprep.subr.mxu0 0.0
    %1089 = vmatpush1.xpose.msra.mxu0 0.0
    %1090 = vmatprep.subr.mxu0 0.0
    %1091 = vmatpush1.xpose.msra.mxu0 0.0
    %1092 = vmatprep.subr.mxu0 0.0
    %1093 = vmatpush1.xpose.msra.mxu0 0.0
    %1094 = vmatprep.subr.mxu0 0.0
    %1095 = vmatpush1.xpose.msra.mxu0 0.0
    %1096 = vmatprep.mubr.f32.mxu0 0.0
    %1097 = vmatmul.mubr.f32.gmra.mrb[0].mxu0 %v985
    %v1098 = vpop.f32.mrb[0].mxu0
    %v1099 = vadd.f32 %v982, %v1098
    %v1100 = vpop.f32.mrb[0].mxu0
    %1101 = vmatprep.mubr.f32.mxu0 0.0
    %1102 = vmatmul.mubr.f32.gmra.mrb[0].mxu0 %v988
    %v1103 = vpop.f32.mrb[0].mxu0
    %v1104 = vadd.f32 %v982, %v1103
    %v1105 = vpop.f32.mrb[0].mxu0
    %1106 = vmatprep.mubr.f32.mxu0 0.0
    %1107 = vmatmul.mubr.f32.gmra.mrb[0].mxu0 %v991
    %v1108 = vpop.f32.mrb[0].mxu0
    %v1109 = vadd.f32 %v982, %v1108
    %v1110 = vpop.f32.mrb[0].mxu0
    %1111 = vmatprep.mubr.f32.mxu0 0.0
    %1112 = vmatmul.mubr.f32.gmra.mrb[0].mxu0 %v994
    %v1113 = vpop.f32.mrb[0].mxu0
    %v1114 = vadd.f32 %v982, %v1113
    %v1115 = vpop.f32.mrb[0].mxu0
    %1116 = vmatprep.mubr.f32.mxu0 0.0
    %1117 = vmatmul.mubr.f32.gmra.mrb[0].mxu0 %v997
    %v1118 = vpop.f32.mrb[0].mxu0
    %v1119 = vadd.f32 %v982, %v1118
    %v1120 = vpop.f32.mrb[0].mxu0
    %1121 = vmatprep.mubr.f32.mxu0 0.0
    %1122 = vmatmul.mubr.f32.gmra.mrb[0].mxu0 %v1000
    %v1123 = vpop.f32.mrb[0].mxu0
    %v1124 = vadd.f32 %v982, %v1123
    %v1125 = vpop.f32.mrb[0].mxu0
    %1126 = vmatprep.mubr.f32.mxu0 0.0
    %1127 = vmatmul.mubr.f32.gmra.mrb[0].mxu0 %v1003
    %v1128 = vpop.f32.mrb[0].mxu0
    %v1129 = vadd.f32 %v982, %v1128
    %v1130 = vpop.f32.mrb[0].mxu0
    %1131 = vmatprep.mubr.f32.mxu0 0.0
    %1132 = vmatmul.mubr.f32.gmra.mrb[0].mxu0 %v1006
    %v1133 = vpop.f32.mrb[0].mxu0
    %v1134 = vadd.f32 %v982, %v1133
    %v1135 = vpop.f32.mrb[0].mxu0
    %1136 = vdwg.mxu0
    %v1137 = vsel %vm214, %v1099, -inf
    %1138 = vmax.xlane.f32.xlu0 %v1137
    %v1139 = vpop.xlane.xlu0 %1138
    %v1140 = vsel %vm214, %v1104, -inf
    %1141 = vmax.xlane.f32.xlu0 %v1140
    %v1142 = vpop.xlane.xlu0 %1141
    %v1143 = vsel %vm214, %v1109, -inf
    %1144 = vmax.xlane.f32.xlu0 %v1143
    %v1145 = vpop.xlane.xlu0 %1144
    %v1146 = vsel %vm214, %v1114, -inf
    %1147 = vmax.xlane.f32.xlu0 %v1146
    %v1148 = vpop.xlane.xlu0 %1147
    %v1149 = vsel %vm214, %v1119, -inf
    %1150 = vmax.xlane.f32.xlu0 %v1149
    %v1151 = vpop.xlane.xlu0 %1150
    %v1152 = vsel %vm214, %v1124, -inf
    %1153 = vmax.xlane.f32.xlu0 %v1152
    %v1154 = vpop.xlane.xlu0 %1153
    %v1155 = vsel %vm214, %v1129, -inf
    %1156 = vmax.xlane.f32.xlu0 %v1155
    %v1157 = vpop.xlane.xlu0 %1156
    %v1158 = vsel %vm214, %v1134, -inf
    %1159 = vmax.xlane.f32.xlu0 %v1158
    %v1160 = vpop.xlane.xlu0 %1159
    %v1161 = vsub.f32 %v1099, %v1139
    %v1162 = vsub.f32 %v1104, %v1142
    %v1163 = vsub.f32 %v1109, %v1145
    %v1164 = vsub.f32 %v1114, %v1148
    %v1165 = vsub.f32 %v1119, %v1151
    %v1166 = vsub.f32 %v1124, %v1154
    %v1167 = vsub.f32 %v1129, %v1157
    %v1168 = vsub.f32 %v1134, %v1160
    %v1169 = vmul.f32 %v1161, 1.442695
    %v1170 = vpow.pop %v1169
    %v1171 = vmul.f32 %v1162, 1.442695
    %v1172 = vpow.pop %v1171
    %v1173 = vmul.f32 %v1163, 1.442695
    %v1174 = vpow.pop %v1173
    %v1175 = vmul.f32 %v1164, 1.442695
    %v1176 = vpow.pop %v1175
    %v1177 = vmul.f32 %v1165, 1.442695
    %v1178 = vpow.pop %v1177
    %v1179 = vmul.f32 %v1166, 1.442695
    %v1180 = vpow.pop %v1179
    %v1181 = vmul.f32 %v1167, 1.442695
    %v1182 = vpow.pop %v1181
    %v1183 = vmul.f32 %v1168, 1.442695
    %v1184 = vpow.pop %v1183
    %v1185 = vsel %vm214, %v1170, 0.0
    %1186 = vadd.xlane.f32.xlu0 %v1185
    %v1187 = vpop.xlane.xlu0 %1186
    %v1188 = vsel %vm214, %v1172, 0.0
    %1189 = vadd.xlane.f32.xlu0 %v1188
    %v1190 = vpop.xlane.xlu0 %1189
    %v1191 = vsel %vm214, %v1174, 0.0
    %1192 = vadd.xlane.f32.xlu0 %v1191
    %v1193 = vpop.xlane.xlu0 %1192
    %v1194 = vsel %vm214, %v1176, 0.0
    %1195 = vadd.xlane.f32.xlu0 %v1194
    %v1196 = vpop.xlane.xlu0 %1195
    %v1197 = vsel %vm214, %v1178, 0.0
    %1198 = vadd.xlane.f32.xlu0 %v1197
    %v1199 = vpop.xlane.xlu0 %1198
    %v1200 = vsel %vm214, %v1180, 0.0
    %1201 = vadd.xlane.f32.xlu0 %v1200
    %v1202 = vpop.xlane.xlu0 %1201
    %v1203 = vsel %vm214, %v1182, 0.0
    %1204 = vadd.xlane.f32.xlu0 %v1203
    %v1205 = vpop.xlane.xlu0 %1204
    %v1206 = vsel %vm214, %v1184, 0.0
    %1207 = vadd.xlane.f32.xlu0 %v1206
    %v1208 = vpop.xlane.xlu0 %1207
    %v1209 = vrcp.pop %v1187
    %v1210 = vrcp.pop %v1190
    %v1211 = vrcp.pop %v1193
    %v1212 = vrcp.pop %v1196
    %v1213 = vrcp.pop %v1199
    %v1214 = vrcp.pop %v1202
    %v1215 = vrcp.pop %v1205
    %v1216 = vrcp.pop %v1208
    %v1217 = vmul.f32 %v1187, %v1209
    %v1218 = vmul.f32 %v1190, %v1210
    %v1219 = vmul.f32 %v1193, %v1211
    %v1220 = vmul.f32 %v1196, %v1212
    %v1221 = vmul.f32 %v1199, %v1213
    %v1222 = vmul.f32 %v1202, %v1214
    %v1223 = vmul.f32 %v1205, %v1215
    %v1224 = vmul.f32 %v1208, %v1216
    %v1225 = vsub.f32 2.0, %v1217
    %v1226 = vsub.f32 2.0, %v1218
    %v1227 = vsub.f32 2.0, %v1219
    %v1228 = vsub.f32 2.0, %v1220
    %v1229 = vsub.f32 2.0, %v1221
    %v1230 = vsub.f32 2.0, %v1222
    %v1231 = vsub.f32 2.0, %v1223
    %v1232 = vsub.f32 2.0, %v1224
    %v1233 = vmul.f32 %v1209, %v1225
    %v1234 = vmul.f32 %v1210, %v1226
    %v1235 = vmul.f32 %v1211, %v1227
    %v1236 = vmul.f32 %v1212, %v1228
    %v1237 = vmul.f32 %v1213, %v1229
    %v1238 = vmul.f32 %v1214, %v1230
    %v1239 = vmul.f32 %v1215, %v1231
    %v1240 = vmul.f32 %v1216, %v1232
    %v1241 = vmul.f32 %v1170, %v1233
    %v1242 = vmul.f32 %v1172, %v1234
    %v1243 = vmul.f32 %v1174, %v1235
    %v1244 = vmul.f32 %v1176, %v1236
    %v1245 = vmul.f32 %v1178, %v1237
    %v1246 = vmul.f32 %v1180, %v1238
    %v1247 = vmul.f32 %v1182, %v1239
    %v1248 = vmul.f32 %v1184, %v1240
    %v1250 = vsel %vm214, %v1241, 0
    %v1253 = vsel %vm214, %v1242, 0
    %v1256 = vsel %vm214, %v1243, 0
    %v1259 = vsel %vm214, %v1244, 0
    %v1262 = vsel %vm214, %v1245, 0
    %v1265 = vsel %vm214, %v1246, 0
    %v1268 = vsel %vm214, %v1247, 0
    %v1271 = vsel %vm214, %v1248, 0
    %1273 = vmatprep.subr.mxu0 0.0
    %1274 = vmatpush1.msra.mxu0 %v968
    %1275 = vmatprep.subr.mxu0 0.0
    %1276 = vmatpush1.msra.mxu0 %v969
    %1277 = vmatprep.subr.mxu0 0.0
    %1278 = vmatpush1.msra.mxu0 %v970
    %1279 = vmatprep.subr.mxu0 0.0
    %1280 = vmatpush1.msra.mxu0 %v971
    %1281 = vmatprep.subr.mxu0 0.0
    %1282 = vmatpush1.msra.mxu0 %v972
    %1283 = vmatprep.subr.mxu0 0.0
    %1284 = vmatpush1.msra.mxu0 %v973
    %1285 = vmatprep.subr.mxu0 0.0
    %1286 = vmatpush1.msra.mxu0 %v974
    %1287 = vmatprep.subr.mxu0 0.0
    %1288 = vmatpush1.msra.mxu0 %v975
    %1289 = vmatprep.subr.mxu0 0.0
    %1290 = vmatpush1.msra.mxu0 0.0
    %1291 = vmatprep.subr.mxu0 0.0
    %1292 = vmatpush1.msra.mxu0 0.0
    %1293 = vmatprep.subr.mxu0 0.0
    %1294 = vmatpush1.msra.mxu0 0.0
    %1295 = vmatprep.subr.mxu0 0.0
    %1296 = vmatpush1.msra.mxu0 0.0
    %1297 = vmatprep.subr.mxu0 0.0
    %1298 = vmatpush1.msra.mxu0 0.0
    %1299 = vmatprep.subr.mxu0 0.0
    %1300 = vmatpush1.msra.mxu0 0.0
    %1301 = vmatprep.subr.mxu0 0.0
    %1302 = vmatpush1.msra.mxu0 0.0
    %1303 = vmatprep.subr.mxu0 0.0
    %1304 = vmatpush1.msra.mxu0 0.0
    %1305 = vmatprep.subr.mxu0 0.0
    %1306 = vmatpush1.msra.mxu0 0.0
    %1307 = vmatprep.subr.mxu0 0.0
    %1308 = vmatpush1.msra.mxu0 0.0
    %1309 = vmatprep.subr.mxu0 0.0
    %1310 = vmatpush1.msra.mxu0 0.0
    %1311 = vmatprep.subr.mxu0 0.0
    %1312 = vmatpush1.msra.mxu0 0.0
    %1313 = vmatprep.subr.mxu0 0.0
    %1314 = vmatpush1.msra.mxu0 0.0
    %1315 = vmatprep.subr.mxu0 0.0
    %1316 = vmatpush1.msra.mxu0 0.0
    %1317 = vmatprep.subr.mxu0 0.0
    %1318 = vmatpush1.msra.mxu0 0.0
    %1319 = vmatprep.subr.mxu0 0.0
    %1320 = vmatpush1.msra.mxu0 0.0
    %1321 = vmatprep.subr.mxu0 0.0
    %1322 = vmatpush1.msra.mxu0 0.0
    %1323 = vmatprep.subr.mxu0 0.0
    %1324 = vmatpush1.msra.mxu0 0.0
    %1325 = vmatprep.subr.mxu0 0.0
    %1326 = vmatpush1.msra.mxu0 0.0
    %1327 = vmatprep.subr.mxu0 0.0
    %1328 = vmatpush1.msra.mxu0 0.0
    %1329 = vmatprep.subr.mxu0 0.0
    %1330 = vmatpush1.msra.mxu0 0.0
    %1331 = vmatprep.subr.mxu0 0.0
    %1332 = vmatpush1.msra.mxu0 0.0
    %1333 = vmatprep.subr.mxu0 0.0
    %1334 = vmatpush1.msra.mxu0 0.0
    %1335 = vmatprep.subr.mxu0 0.0
    %1336 = vmatpush1.msra.mxu0 0.0
    %1337 = vmatprep.mubr.f32.mxu0 0.0
    %1338 = vmatmul.mubr.f32.gmra.mrb[0].mxu0 %v1250
    %v1339 = vpop.f32.mrb[0].mxu0
    %v1340 = vadd.f32 0.0, %v1339
    %v1341 = vpop.f32.mrb[0].mxu0
    %1342 = vmatprep.mubr.f32.mxu0 0.0
    %1343 = vmatmul.mubr.f32.gmra.mrb[0].mxu0 %v1253
    %v1344 = vpop.f32.mrb[0].mxu0
    %v1345 = vadd.f32 0.0, %v1344
    %v1346 = vpop.f32.mrb[0].mxu0
    %1347 = vmatprep.mubr.f32.mxu0 0.0
    %1348 = vmatmul.mubr.f32.gmra.mrb[0].mxu0 %v1256
    %v1349 = vpop.f32.mrb[0].mxu0
    %v1350 = vadd.f32 0.0, %v1349
    %v1351 = vpop.f32.mrb[0].mxu0
    %1352 = vmatprep.mubr.f32.mxu0 0.0
    %1353 = vmatmul.mubr.f32.gmra.mrb[0].mxu0 %v1259
    %v1354 = vpop.f32.mrb[0].mxu0
    %v1355 = vadd.f32 0.0, %v1354
    %v1356 = vpop.f32.mrb[0].mxu0
    %1357 = vmatprep.mubr.f32.mxu0 0.0
    %1358 = vmatmul.mubr.f32.gmra.mrb[0].mxu0 %v1262
    %v1359 = vpop.f32.mrb[0].mxu0
    %v1360 = vadd.f32 0.0, %v1359
    %v1361 = vpop.f32.mrb[0].mxu0
    %1362 = vmatprep.mubr.f32.mxu0 0.0
    %1363 = vmatmul.mubr.f32.gmra.mrb[0].mxu0 %v1265
    %v1364 = vpop.f32.mrb[0].mxu0
    %v1365 = vadd.f32 0.0, %v1364
    %v1366 = vpop.f32.mrb[0].mxu0
    %1367 = vmatprep.mubr.f32.mxu0 0.0
    %1368 = vmatmul.mubr.f32.gmra.mrb[0].mxu0 %v1268
    %v1369 = vpop.f32.mrb[0].mxu0
    %v1370 = vadd.f32 0.0, %v1369
    %v1371 = vpop.f32.mrb[0].mxu0
    %1372 = vmatprep.mubr.f32.mxu0 0.0
    %1373 = vmatmul.mubr.f32.gmra.mrb[0].mxu0 %v1271
    %v1374 = vpop.f32.mrb[0].mxu0
    %v1375 = vadd.f32 0.0, %v1374
    %v1376 = vpop.f32.mrb[0].mxu0
    %1377 = vdwg.mxu0
    %s1378 = scalar_lea.vmem %s0, 192
    %v1379 = vld [vmem:[%s1378] sm:$0xff]
    %v1380 = vld [vmem:[%s1378 + $0x8] sm:$0xff]
    %v1381 = vld [vmem:[%s1378 + $0x10] sm:$0xff]
    %v1382 = vld [vmem:[%s1378 + $0x18] sm:$0xff]
    %v1383 = vld [vmem:[%s1378 + $0x20] sm:$0xff]
    %v1384 = vld [vmem:[%s1378 + $0x28] sm:$0xff]
    %v1385 = vld [vmem:[%s1378 + $0x30] sm:$0xff]
    %v1386 = vld [vmem:[%s1378 + $0x38] sm:$0xff]
    %v1387 = vmul.f32 %v1379, 0.17677669
    %v1388 = vmul.f32 %v1380, 0.17677669
    %v1389 = vmul.f32 %v1381, 0.17677669
    %v1390 = vmul.f32 %v1382, 0.17677669
    %v1391 = vmul.f32 %v1383, 0.17677669
    %v1392 = vmul.f32 %v1384, 0.17677669
    %v1393 = vmul.f32 %v1385, 0.17677669
    %v1394 = vmul.f32 %v1386, 0.17677669
    %s1395 = scalar_lea.vmem %s1, 192
    %v1396 = vld [vmem:[%s1395] sm:$0xff]
    %v1397 = vld [vmem:[%s1395 + $0x8] sm:$0xff]
    %v1398 = vld [vmem:[%s1395 + $0x10] sm:$0xff]
    %v1399 = vld [vmem:[%s1395 + $0x18] sm:$0xff]
    %v1400 = vld [vmem:[%s1395 + $0x20] sm:$0xff]
    %v1401 = vld [vmem:[%s1395 + $0x28] sm:$0xff]
    %v1402 = vld [vmem:[%s1395 + $0x30] sm:$0xff]
    %v1403 = vld [vmem:[%s1395 + $0x38] sm:$0xff]
    %s1404 = scalar_lea.vmem %s2, 192
    %v1405 = vld [vmem:[%s1404] sm:$0xff]
    %v1406 = vld [vmem:[%s1404 + $0x8] sm:$0xff]
    %v1407 = vld [vmem:[%s1404 + $0x10] sm:$0xff]
    %v1408 = vld [vmem:[%s1404 + $0x18] sm:$0xff]
    %v1409 = vld [vmem:[%s1404 + $0x20] sm:$0xff]
    %v1410 = vld [vmem:[%s1404 + $0x28] sm:$0xff]
    %v1411 = vld [vmem:[%s1404 + $0x30] sm:$0xff]
    %v1412 = vld [vmem:[%s1404 + $0x38] sm:$0xff]
    %s1413 = scalar_lea.vmem %s3, 3
    %v1414 = vld [vmem:[%s1413] sm:$0x1]
    %v1416 = vlaneseq
    %v1417 = vshrl.u32 %v1416, 7
    %v1418 = vsub.s32 0, %v1417
    %v1419 = vrot.slane %v1414, %v1418
    %v1422 = vsel %vm60, %v1387, 0
    %v1425 = vsel %vm60, %v1388, 0
    %v1428 = vsel %vm60, %v1389, 0
    %v1431 = vsel %vm60, %v1390, 0
    %v1434 = vsel %vm60, %v1391, 0
    %v1437 = vsel %vm60, %v1392, 0
    %v1440 = vsel %vm60, %v1393, 0
    %v1443 = vsel %vm60, %v1394, 0
    %v1446 = vsel %vm60, %v1396, 0
    %v1449 = vsel %vm60, %v1397, 0
    %v1452 = vsel %vm60, %v1398, 0
    %v1455 = vsel %vm60, %v1399, 0
    %v1458 = vsel %vm60, %v1400, 0
    %v1461 = vsel %vm60, %v1401, 0
    %v1464 = vsel %vm60, %v1402, 0
    %v1467 = vsel %vm60, %v1403, 0
    %1469 = vmatprep.subr.mxu0 0.0
    %1470 = vmatpush1.xpose.msra.mxu0 %v1446
    %1471 = vmatprep.subr.mxu0 0.0
    %1472 = vmatpush1.xpose.msra.mxu0 %v1449
    %1473 = vmatprep.subr.mxu0 0.0
    %1474 = vmatpush1.xpose.msra.mxu0 %v1452
    %1475 = vmatprep.subr.mxu0 0.0
    %1476 = vmatpush1.xpose.msra.mxu0 %v1455
    %1477 = vmatprep.subr.mxu0 0.0
    %1478 = vmatpush1.xpose.msra.mxu0 %v1458
    %1479 = vmatprep.subr.mxu0 0.0
    %1480 = vmatpush1.xpose.msra.mxu0 %v1461
    %1481 = vmatprep.subr.mxu0 0.0
    %1482 = vmatpush1.xpose.msra.mxu0 %v1464
    %1483 = vmatprep.subr.mxu0 0.0
    %1484 = vmatpush1.xpose.msra.mxu0 %v1467
    %1485 = vmatprep.subr.mxu0 0.0
    %1486 = vmatpush1.xpose.msra.mxu0 0.0
    %1487 = vmatprep.subr.mxu0 0.0
    %1488 = vmatpush1.xpose.msra.mxu0 0.0
    %1489 = vmatprep.subr.mxu0 0.0
    %1490 = vmatpush1.xpose.msra.mxu0 0.0
    %1491 = vmatprep.subr.mxu0 0.0
    %1492 = vmatpush1.xpose.msra.mxu0 0.0
    %1493 = vmatprep.subr.mxu0 0.0
    %1494 = vmatpush1.xpose.msra.mxu0 0.0
    %1495 = vmatprep.subr.mxu0 0.0
    %1496 = vmatpush1.xpose.msra.mxu0 0.0
    %1497 = vmatprep.subr.mxu0 0.0
    %1498 = vmatpush1.xpose.msra.mxu0 0.0
    %1499 = vmatprep.subr.mxu0 0.0
    %1500 = vmatpush1.xpose.msra.mxu0 0.0
    %1501 = vmatprep.subr.mxu0 0.0
    %1502 = vmatpush1.xpose.msra.mxu0 0.0
    %1503 = vmatprep.subr.mxu0 0.0
    %1504 = vmatpush1.xpose.msra.mxu0 0.0
    %1505 = vmatprep.subr.mxu0 0.0
    %1506 = vmatpush1.xpose.msra.mxu0 0.0
    %1507 = vmatprep.subr.mxu0 0.0
    %1508 = vmatpush1.xpose.msra.mxu0 0.0
    %1509 = vmatprep.subr.mxu0 0.0
    %1510 = vmatpush1.xpose.msra.mxu0 0.0
    %1511 = vmatprep.subr.mxu0 0.0
    %1512 = vmatpush1.xpose.msra.mxu0 0.0
    %1513 = vmatprep.subr.mxu0 0.0
    %1514 = vmatpush1.xpose.msra.mxu0 0.0
    %1515 = vmatprep.subr.mxu0 0.0
    %1516 = vmatpush1.xpose.msra.mxu0 0.0
    %1517 = vmatprep.subr.mxu0 0.0
    %1518 = vmatpush1.xpose.msra.mxu0 0.0
    %1519 = vmatprep.subr.mxu0 0.0
    %1520 = vmatpush1.xpose.msra.mxu0 0.0
    %1521 = vmatprep.subr.mxu0 0.0
    %1522 = vmatpush1.xpose.msra.mxu0 0.0
    %1523 = vmatprep.subr.mxu0 0.0
    %1524 = vmatpush1.xpose.msra.mxu0 0.0
    %1525 = vmatprep.subr.mxu0 0.0
    %1526 = vmatpush1.xpose.msra.mxu0 0.0
    %1527 = vmatprep.subr.mxu0 0.0
    %1528 = vmatpush1.xpose.msra.mxu0 0.0
    %1529 = vmatprep.subr.mxu0 0.0
    %1530 = vmatpush1.xpose.msra.mxu0 0.0
    %1531 = vmatprep.subr.mxu0 0.0
    %1532 = vmatpush1.xpose.msra.mxu0 0.0
    %1533 = vmatprep.mubr.f32.mxu0 0.0
    %1534 = vmatmul.mubr.f32.gmra.mrb[0].mxu0 %v1422
    %v1535 = vpop.f32.mrb[0].mxu0
    %v1536 = vadd.f32 %v1419, %v1535
    %v1537 = vpop.f32.mrb[0].mxu0
    %1538 = vmatprep.mubr.f32.mxu0 0.0
    %1539 = vmatmul.mubr.f32.gmra.mrb[0].mxu0 %v1425
    %v1540 = vpop.f32.mrb[0].mxu0
    %v1541 = vadd.f32 %v1419, %v1540
    %v1542 = vpop.f32.mrb[0].mxu0
    %1543 = vmatprep.mubr.f32.mxu0 0.0
    %1544 = vmatmul.mubr.f32.gmra.mrb[0].mxu0 %v1428
    %v1545 = vpop.f32.mrb[0].mxu0
    %v1546 = vadd.f32 %v1419, %v1545
    %v1547 = vpop.f32.mrb[0].mxu0
    %1548 = vmatprep.mubr.f32.mxu0 0.0
    %1549 = vmatmul.mubr.f32.gmra.mrb[0].mxu0 %v1431
    %v1550 = vpop.f32.mrb[0].mxu0
    %v1551 = vadd.f32 %v1419, %v1550
    %v1552 = vpop.f32.mrb[0].mxu0
    %1553 = vmatprep.mubr.f32.mxu0 0.0
    %1554 = vmatmul.mubr.f32.gmra.mrb[0].mxu0 %v1434
    %v1555 = vpop.f32.mrb[0].mxu0
    %v1556 = vadd.f32 %v1419, %v1555
    %v1557 = vpop.f32.mrb[0].mxu0
    %1558 = vmatprep.mubr.f32.mxu0 0.0
    %1559 = vmatmul.mubr.f32.gmra.mrb[0].mxu0 %v1437
    %v1560 = vpop.f32.mrb[0].mxu0
    %v1561 = vadd.f32 %v1419, %v1560
    %v1562 = vpop.f32.mrb[0].mxu0
    %1563 = vmatprep.mubr.f32.mxu0 0.0
    %1564 = vmatmul.mubr.f32.gmra.mrb[0].mxu0 %v1440
    %v1565 = vpop.f32.mrb[0].mxu0
    %v1566 = vadd.f32 %v1419, %v1565
    %v1567 = vpop.f32.mrb[0].mxu0
    %1568 = vmatprep.mubr.f32.mxu0 0.0
    %1569 = vmatmul.mubr.f32.gmra.mrb[0].mxu0 %v1443
    %v1570 = vpop.f32.mrb[0].mxu0
    %v1571 = vadd.f32 %v1419, %v1570
    %v1572 = vpop.f32.mrb[0].mxu0
    %1573 = vdwg.mxu0
    %v1574 = vsel %vm214, %v1536, -inf
    %1575 = vmax.xlane.f32.xlu0 %v1574
    %v1576 = vpop.xlane.xlu0 %1575
    %v1577 = vsel %vm214, %v1541, -inf
    %1578 = vmax.xlane.f32.xlu0 %v1577
    %v1579 = vpop.xlane.xlu0 %1578
    %v1580 = vsel %vm214, %v1546, -inf
    %1581 = vmax.xlane.f32.xlu0 %v1580
    %v1582 = vpop.xlane.xlu0 %1581
    %v1583 = vsel %vm214, %v1551, -inf
    %1584 = vmax.xlane.f32.xlu0 %v1583
    %v1585 = vpop.xlane.xlu0 %1584
    %v1586 = vsel %vm214, %v1556, -inf
    %1587 = vmax.xlane.f32.xlu0 %v1586
    %v1588 = vpop.xlane.xlu0 %1587
    %v1589 = vsel %vm214, %v1561, -inf
    %1590 = vmax.xlane.f32.xlu0 %v1589
    %v1591 = vpop.xlane.xlu0 %1590
    %v1592 = vsel %vm214, %v1566, -inf
    %1593 = vmax.xlane.f32.xlu0 %v1592
    %v1594 = vpop.xlane.xlu0 %1593
    %v1595 = vsel %vm214, %v1571, -inf
    %1596 = vmax.xlane.f32.xlu0 %v1595
    %v1597 = vpop.xlane.xlu0 %1596
    %v1598 = vsub.f32 %v1536, %v1576
    %v1599 = vsub.f32 %v1541, %v1579
    %v1600 = vsub.f32 %v1546, %v1582
    %v1601 = vsub.f32 %v1551, %v1585
    %v1602 = vsub.f32 %v1556, %v1588
    %v1603 = vsub.f32 %v1561, %v1591
    %v1604 = vsub.f32 %v1566, %v1594
    %v1605 = vsub.f32 %v1571, %v1597
    %v1606 = vmul.f32 %v1598, 1.442695
    %v1607 = vpow.pop %v1606
    %v1608 = vmul.f32 %v1599, 1.442695
    %v1609 = vpow.pop %v1608
    %v1610 = vmul.f32 %v1600, 1.442695
    %v1611 = vpow.pop %v1610
    %v1612 = vmul.f32 %v1601, 1.442695
    %v1613 = vpow.pop %v1612
    %v1614 = vmul.f32 %v1602, 1.442695
    %v1615 = vpow.pop %v1614
    %v1616 = vmul.f32 %v1603, 1.442695
    %v1617 = vpow.pop %v1616
    %v1618 = vmul.f32 %v1604, 1.442695
    %v1619 = vpow.pop %v1618
    %v1620 = vmul.f32 %v1605, 1.442695
    %v1621 = vpow.pop %v1620
    %v1622 = vsel %vm214, %v1607, 0.0
    %1623 = vadd.xlane.f32.xlu0 %v1622
    %v1624 = vpop.xlane.xlu0 %1623
    %v1625 = vsel %vm214, %v1609, 0.0
    %1626 = vadd.xlane.f32.xlu0 %v1625
    %v1627 = vpop.xlane.xlu0 %1626
    %v1628 = vsel %vm214, %v1611, 0.0
    %1629 = vadd.xlane.f32.xlu0 %v1628
    %v1630 = vpop.xlane.xlu0 %1629
    %v1631 = vsel %vm214, %v1613, 0.0
    %1632 = vadd.xlane.f32.xlu0 %v1631
    %v1633 = vpop.xlane.xlu0 %1632
    %v1634 = vsel %vm214, %v1615, 0.0
    %1635 = vadd.xlane.f32.xlu0 %v1634
    %v1636 = vpop.xlane.xlu0 %1635
    %v1637 = vsel %vm214, %v1617, 0.0
    %1638 = vadd.xlane.f32.xlu0 %v1637
    %v1639 = vpop.xlane.xlu0 %1638
    %v1640 = vsel %vm214, %v1619, 0.0
    %1641 = vadd.xlane.f32.xlu0 %v1640
    %v1642 = vpop.xlane.xlu0 %1641
    %v1643 = vsel %vm214, %v1621, 0.0
    %1644 = vadd.xlane.f32.xlu0 %v1643
    %v1645 = vpop.xlane.xlu0 %1644
    %v1646 = vrcp.pop %v1624
    %v1647 = vrcp.pop %v1627
    %v1648 = vrcp.pop %v1630
    %v1649 = vrcp.pop %v1633
    %v1650 = vrcp.pop %v1636
    %v1651 = vrcp.pop %v1639
    %v1652 = vrcp.pop %v1642
    %v1653 = vrcp.pop %v1645
    %v1654 = vmul.f32 %v1624, %v1646
    %v1655 = vmul.f32 %v1627, %v1647
    %v1656 = vmul.f32 %v1630, %v1648
    %v1657 = vmul.f32 %v1633, %v1649
    %v1658 = vmul.f32 %v1636, %v1650
    %v1659 = vmul.f32 %v1639, %v1651
    %v1660 = vmul.f32 %v1642, %v1652
    %v1661 = vmul.f32 %v1645, %v1653
    %v1662 = vsub.f32 2.0, %v1654
    %v1663 = vsub.f32 2.0, %v1655
    %v1664 = vsub.f32 2.0, %v1656
    %v1665 = vsub.f32 2.0, %v1657
    %v1666 = vsub.f32 2.0, %v1658
    %v1667 = vsub.f32 2.0, %v1659
    %v1668 = vsub.f32 2.0, %v1660
    %v1669 = vsub.f32 2.0, %v1661
    %v1670 = vmul.f32 %v1646, %v1662
    %v1671 = vmul.f32 %v1647, %v1663
    %v1672 = vmul.f32 %v1648, %v1664
    %v1673 = vmul.f32 %v1649, %v1665
    %v1674 = vmul.f32 %v1650, %v1666
    %v1675 = vmul.f32 %v1651, %v1667
    %v1676 = vmul.f32 %v1652, %v1668
    %v1677 = vmul.f32 %v1653, %v1669
    %v1678 = vmul.f32 %v1607, %v1670
    %v1679 = vmul.f32 %v1609, %v1671
    %v1680 = vmul.f32 %v1611, %v1672
    %v1681 = vmul.f32 %v1613, %v1673
    %v1682 = vmul.f32 %v1615, %v1674
    %v1683 = vmul.f32 %v1617, %v1675
    %v1684 = vmul.f32 %v1619, %v1676
    %v1685 = vmul.f32 %v1621, %v1677
    %v1687 = vsel %vm214, %v1678, 0
    %v1690 = vsel %vm214, %v1679, 0
    %v1693 = vsel %vm214, %v1680, 0
    %v1696 = vsel %vm214, %v1681, 0
    %v1699 = vsel %vm214, %v1682, 0
    %v1702 = vsel %vm214, %v1683, 0
    %v1705 = vsel %vm214, %v1684, 0
    %v1708 = vsel %vm214, %v1685, 0
    %1710 = vmatprep.subr.mxu0 0.0
    %1711 = vmatpush1.msra.mxu0 %v1405
    %1712 = vmatprep.subr.mxu0 0.0
    %1713 = vmatpush1.msra.mxu0 %v1406
    %1714 = vmatprep.subr.mxu0 0.0
    %1715 = vmatpush1.msra.mxu0 %v1407
    %1716 = vmatprep.subr.mxu0 0.0
    %1717 = vmatpush1.msra.mxu0 %v1408
    %1718 = vmatprep.subr.mxu0 0.0
    %1719 = vmatpush1.msra.mxu0 %v1409
    %1720 = vmatprep.subr.mxu0 0.0
    %1721 = vmatpush1.msra.mxu0 %v1410
    %1722 = vmatprep.subr.mxu0 0.0
    %1723 = vmatpush1.msra.mxu0 %v1411
    %1724 = vmatprep.subr.mxu0 0.0
    %1725 = vmatpush1.msra.mxu0 %v1412
    %1726 = vmatprep.subr.mxu0 0.0
    %1727 = vmatpush1.msra.mxu0 0.0
    %1728 = vmatprep.subr.mxu0 0.0
    %1729 = vmatpush1.msra.mxu0 0.0
    %1730 = vmatprep.subr.mxu0 0.0
    %1731 = vmatpush1.msra.mxu0 0.0
    %1732 = vmatprep.subr.mxu0 0.0
    %1733 = vmatpush1.msra.mxu0 0.0
    %1734 = vmatprep.subr.mxu0 0.0
    %1735 = vmatpush1.msra.mxu0 0.0
    %1736 = vmatprep.subr.mxu0 0.0
    %1737 = vmatpush1.msra.mxu0 0.0
    %1738 = vmatprep.subr.mxu0 0.0
    %1739 = vmatpush1.msra.mxu0 0.0
    %1740 = vmatprep.subr.mxu0 0.0
    %1741 = vmatpush1.msra.mxu0 0.0
    %1742 = vmatprep.subr.mxu0 0.0
    %1743 = vmatpush1.msra.mxu0 0.0
    %1744 = vmatprep.subr.mxu0 0.0
    %1745 = vmatpush1.msra.mxu0 0.0
    %1746 = vmatprep.subr.mxu0 0.0
    %1747 = vmatpush1.msra.mxu0 0.0
    %1748 = vmatprep.subr.mxu0 0.0
    %1749 = vmatpush1.msra.mxu0 0.0
    %1750 = vmatprep.subr.mxu0 0.0
    %1751 = vmatpush1.msra.mxu0 0.0
    %1752 = vmatprep.subr.mxu0 0.0
    %1753 = vmatpush1.msra.mxu0 0.0
    %1754 = vmatprep.subr.mxu0 0.0
    %1755 = vmatpush1.msra.mxu0 0.0
    %1756 = vmatprep.subr.mxu0 0.0
    %1757 = vmatpush1.msra.mxu0 0.0
    %1758 = vmatprep.subr.mxu0 0.0
    %1759 = vmatpush1.msra.mxu0 0.0
    %1760 = vmatprep.subr.mxu0 0.0
    %1761 = vmatpush1.msra.mxu0 0.0
    %1762 = vmatprep.subr.mxu0 0.0
    %1763 = vmatpush1.msra.mxu0 0.0
    %1764 = vmatprep.subr.mxu0 0.0
    %1765 = vmatpush1.msra.mxu0 0.0
    %1766 = vmatprep.subr.mxu0 0.0
    %1767 = vmatpush1.msra.mxu0 0.0
    %1768 = vmatprep.subr.mxu0 0.0
    %1769 = vmatpush1.msra.mxu0 0.0
    %1770 = vmatprep.subr.mxu0 0.0
    %1771 = vmatpush1.msra.mxu0 0.0
    %1772 = vmatprep.subr.mxu0 0.0
    %1773 = vmatpush1.msra.mxu0 0.0
    %1774 = vmatprep.mubr.f32.mxu0 0.0
    %1775 = vmatmul.mubr.f32.gmra.mrb[0].mxu0 %v1687
    %v1776 = vpop.f32.mrb[0].mxu0
    %v1777 = vadd.f32 0.0, %v1776
    %v1778 = vpop.f32.mrb[0].mxu0
    %1779 = vmatprep.mubr.f32.mxu0 0.0
    %1780 = vmatmul.mubr.f32.gmra.mrb[0].mxu0 %v1690
    %v1781 = vpop.f32.mrb[0].mxu0
    %v1782 = vadd.f32 0.0, %v1781
    %v1783 = vpop.f32.mrb[0].mxu0
    %1784 = vmatprep.mubr.f32.mxu0 0.0
    %1785 = vmatmul.mubr.f32.gmra.mrb[0].mxu0 %v1693
    %v1786 = vpop.f32.mrb[0].mxu0
    %v1787 = vadd.f32 0.0, %v1786
    %v1788 = vpop.f32.mrb[0].mxu0
    %1789 = vmatprep.mubr.f32.mxu0 0.0
    %1790 = vmatmul.mubr.f32.gmra.mrb[0].mxu0 %v1696
    %v1791 = vpop.f32.mrb[0].mxu0
    %v1792 = vadd.f32 0.0, %v1791
    %v1793 = vpop.f32.mrb[0].mxu0
    %1794 = vmatprep.mubr.f32.mxu0 0.0
    %1795 = vmatmul.mubr.f32.gmra.mrb[0].mxu0 %v1699
    %v1796 = vpop.f32.mrb[0].mxu0
    %v1797 = vadd.f32 0.0, %v1796
    %v1798 = vpop.f32.mrb[0].mxu0
    %1799 = vmatprep.mubr.f32.mxu0 0.0
    %1800 = vmatmul.mubr.f32.gmra.mrb[0].mxu0 %v1702
    %v1801 = vpop.f32.mrb[0].mxu0
    %v1802 = vadd.f32 0.0, %v1801
    %v1803 = vpop.f32.mrb[0].mxu0
    %1804 = vmatprep.mubr.f32.mxu0 0.0
    %1805 = vmatmul.mubr.f32.gmra.mrb[0].mxu0 %v1705
    %v1806 = vpop.f32.mrb[0].mxu0
    %v1807 = vadd.f32 0.0, %v1806
    %v1808 = vpop.f32.mrb[0].mxu0
    %1809 = vmatprep.mubr.f32.mxu0 0.0
    %1810 = vmatmul.mubr.f32.gmra.mrb[0].mxu0 %v1708
    %v1811 = vpop.f32.mrb[0].mxu0
    %v1812 = vadd.f32 0.0, %v1811
    %v1813 = vpop.f32.mrb[0].mxu0
    %1814 = vdwg.mxu0
    %1823 = vrot.lane.b32.xlu0 %v855, 32
    %v1824 = vpop.permute.xlu0 %1823
    %1825 = vrot.lane.b32.xlu0 %v860, 32
    %v1826 = vpop.permute.xlu0 %1825
    %1827 = vrot.lane.b32.xlu0 %v865, 32
    %v1828 = vpop.permute.xlu0 %1827
    %1829 = vrot.lane.b32.xlu0 %v870, 32
    %v1830 = vpop.permute.xlu0 %1829
    %1831 = vrot.lane.b32.xlu0 %v875, 32
    %v1832 = vpop.permute.xlu0 %1831
    %1833 = vrot.lane.b32.xlu0 %v880, 32
    %v1834 = vpop.permute.xlu0 %1833
    %1835 = vrot.lane.b32.xlu0 %v885, 32
    %v1836 = vpop.permute.xlu0 %1835
    %1837 = vrot.lane.b32.xlu0 %v890, 32
    %v1838 = vpop.permute.xlu0 %1837
    %1855 = vrot.lane.b32.xlu0 %v1340, 64
    %v1856 = vpop.permute.xlu0 %1855
    %1857 = vrot.lane.b32.xlu0 %v1345, 64
    %v1858 = vpop.permute.xlu0 %1857
    %1859 = vrot.lane.b32.xlu0 %v1350, 64
    %v1860 = vpop.permute.xlu0 %1859
    %1861 = vrot.lane.b32.xlu0 %v1355, 64
    %v1862 = vpop.permute.xlu0 %1861
    %1863 = vrot.lane.b32.xlu0 %v1360, 64
    %v1864 = vpop.permute.xlu0 %1863
    %1865 = vrot.lane.b32.xlu0 %v1365, 64
    %v1866 = vpop.permute.xlu0 %1865
    %1867 = vrot.lane.b32.xlu0 %v1370, 64
    %v1868 = vpop.permute.xlu0 %1867
    %1869 = vrot.lane.b32.xlu0 %v1375, 64
    %v1870 = vpop.permute.xlu0 %1869
    %1887 = vrot.lane.b32.xlu0 %v1777, 96
    %v1888 = vpop.permute.xlu0 %1887
    %1889 = vrot.lane.b32.xlu0 %v1782, 96
    %v1890 = vpop.permute.xlu0 %1889
    %1891 = vrot.lane.b32.xlu0 %v1787, 96
    %v1892 = vpop.permute.xlu0 %1891
    %1893 = vrot.lane.b32.xlu0 %v1792, 96
    %v1894 = vpop.permute.xlu0 %1893
    %1895 = vrot.lane.b32.xlu0 %v1797, 96
    %v1896 = vpop.permute.xlu0 %1895
    %1897 = vrot.lane.b32.xlu0 %v1802, 96
    %v1898 = vpop.permute.xlu0 %1897
    %1899 = vrot.lane.b32.xlu0 %v1807, 96
    %v1900 = vpop.permute.xlu0 %1899
    %1901 = vrot.lane.b32.xlu0 %v1812, 96
    %v1902 = vpop.permute.xlu0 %1901
    %v1911 = vsel %vm60, %v418, %v1824
    %v1912 = vsel %vm60, %v423, %v1826
    %v1913 = vsel %vm60, %v428, %v1828
    %v1914 = vsel %vm60, %v433, %v1830
    %v1915 = vsel %vm60, %v438, %v1832
    %v1916 = vsel %vm60, %v443, %v1834
    %v1917 = vsel %vm60, %v448, %v1836
    %v1918 = vsel %vm60, %v453, %v1838
    %v1919 = vsel %vm214, %v1911, %v1856
    %v1920 = vsel %vm214, %v1912, %v1858
    %v1921 = vsel %vm214, %v1913, %v1860
    %v1922 = vsel %vm214, %v1914, %v1862
    %v1923 = vsel %vm214, %v1915, %v1864
    %v1924 = vsel %vm214, %v1916, %v1866
    %v1925 = vsel %vm214, %v1917, %v1868
    %v1926 = vsel %vm214, %v1918, %v1870
    %vm1927 = vcmask 785408
    %v1928 = vsel %vm1927, %v1919, %v1888
    %v1929 = vsel %vm1927, %v1920, %v1890
    %v1930 = vsel %vm1927, %v1921, %v1892
    %v1931 = vsel %vm1927, %v1922, %v1894
    %v1932 = vsel %vm1927, %v1923, %v1896
    %v1933 = vsel %vm1927, %v1924, %v1898
    %v1934 = vsel %vm1927, %v1925, %v1900
    %v1935 = vsel %vm1927, %v1926, %v1902
    %1936 = vst [vmem:[#allocation2] sm:$0xff] %v1928
    %1937 = vst [vmem:[#allocation2 + $0x10] sm:$0xff] %v1929
    %1938 = vst [vmem:[#allocation2 + $0x20] sm:$0xff] %v1930
    %1939 = vst [vmem:[#allocation2 + $0x30] sm:$0xff] %v1931
    %1940 = vst [vmem:[#allocation2 + $0x40] sm:$0xff] %v1932
    %1941 = vst [vmem:[#allocation2 + $0x50] sm:$0xff] %v1933
    %1942 = vst [vmem:[#allocation2 + $0x60] sm:$0xff] %v1934
    %1943 = vst [vmem:[#allocation2 + $0x70] sm:$0xff] %v1935
    %1952 = vrot.lane.b32.xlu0 %v1536, 64
    %v1953 = vpop.permute.xlu0 %1952
    %1954 = vrot.lane.b32.xlu0 %v1541, 64
    %v1955 = vpop.permute.xlu0 %1954
    %1956 = vrot.lane.b32.xlu0 %v1546, 64
    %v1957 = vpop.permute.xlu0 %1956
    %1958 = vrot.lane.b32.xlu0 %v1551, 64
    %v1959 = vpop.permute.xlu0 %1958
    %1960 = vrot.lane.b32.xlu0 %v1556, 64
    %v1961 = vpop.permute.xlu0 %1960
    %1962 = vrot.lane.b32.xlu0 %v1561, 64
    %v1963 = vpop.permute.xlu0 %1962
    %1964 = vrot.lane.b32.xlu0 %v1566, 64
    %v1965 = vpop.permute.xlu0 %1964
    %1966 = vrot.lane.b32.xlu0 %v1571, 64
    %v1967 = vpop.permute.xlu0 %1966
    %v1976 = vsel %vm214, %v1099, %v1953
    %v1977 = vsel %vm214, %v1104, %v1955
    %v1978 = vsel %vm214, %v1109, %v1957
    %v1979 = vsel %vm214, %v1114, %v1959
    %v1980 = vsel %vm214, %v1119, %v1961
    %v1981 = vsel %vm214, %v1124, %v1963
    %v1982 = vsel %vm214, %v1129, %v1965
    %v1983 = vsel %vm214, %v1134, %v1967
    %1984 = vst [vmem:[#allocation4 + $0x8] sm:$0xff] %v1976
    %1985 = vst [vmem:[#allocation4 + $0x28] sm:$0xff] %v1977
    %1986 = vst [vmem:[#allocation4 + $0x48] sm:$0xff] %v1978
    %1987 = vst [vmem:[#allocation4 + $0x68] sm:$0xff] %v1979
    %1988 = vst [vmem:[#allocation4 + $0x88] sm:$0xff] %v1980
    %1989 = vst [vmem:[#allocation4 + $0xa8] sm:$0xff] %v1981
    %1990 = vst [vmem:[#allocation4 + $0xc8] sm:$0xff] %v1982
    %1991 = vst [vmem:[#allocation4 + $0xe8] sm:$0xff] %v1983
    %s1992 = scalar_lea.vmem %s0, 256
    %v1993 = vld [vmem:[%s1992] sm:$0xff]
    %v1994 = vld [vmem:[%s1992 + $0x8] sm:$0xff]
    %v1995 = vld [vmem:[%s1992 + $0x10] sm:$0xff]
    %v1996 = vld [vmem:[%s1992 + $0x18] sm:$0xff]
    %v1997 = vld [vmem:[%s1992 + $0x20] sm:$0xff]
    %v1998 = vld [vmem:[%s1992 + $0x28] sm:$0xff]
    %v1999 = vld [vmem:[%s1992 + $0x30] sm:$0xff]
    %v2000 = vld [vmem:[%s1992 + $0x38] sm:$0xff]
    %v2001 = vmul.f32 %v1993, 0.17677669
    %v2002 = vmul.f32 %v1994, 0.17677669
    %v2003 = vmul.f32 %v1995, 0.17677669
    %v2004 = vmul.f32 %v1996, 0.17677669
    %v2005 = vmul.f32 %v1997, 0.17677669
    %v2006 = vmul.f32 %v1998, 0.17677669
    %v2007 = vmul.f32 %v1999, 0.17677669
    %v2008 = vmul.f32 %v2000, 0.17677669
    %s2009 = scalar_lea.vmem %s1, 256
    %v2010 = vld [vmem:[%s2009] sm:$0xff]
    %v2011 = vld [vmem:[%s2009 + $0x8] sm:$0xff]
    %v2012 = vld [vmem:[%s2009 + $0x10] sm:$0xff]
    %v2013 = vld [vmem:[%s2009 + $0x18] sm:$0xff]
    %v2014 = vld [vmem:[%s2009 + $0x20] sm:$0xff]
    %v2015 = vld [vmem:[%s2009 + $0x28] sm:$0xff]
    %v2016 = vld [vmem:[%s2009 + $0x30] sm:$0xff]
    %v2017 = vld [vmem:[%s2009 + $0x38] sm:$0xff]
    %s2018 = scalar_lea.vmem %s2, 256
    %v2019 = vld [vmem:[%s2018] sm:$0xff]
    %v2020 = vld [vmem:[%s2018 + $0x8] sm:$0xff]
    %v2021 = vld [vmem:[%s2018 + $0x10] sm:$0xff]
    %v2022 = vld [vmem:[%s2018 + $0x18] sm:$0xff]
    %v2023 = vld [vmem:[%s2018 + $0x20] sm:$0xff]
    %v2024 = vld [vmem:[%s2018 + $0x28] sm:$0xff]
    %v2025 = vld [vmem:[%s2018 + $0x30] sm:$0xff]
    %v2026 = vld [vmem:[%s2018 + $0x38] sm:$0xff]
    %s2027 = scalar_lea.vmem %s3, 4
    %v2028 = vld [vmem:[%s2027] sm:$0x1]
    %v2030 = vlaneseq
    %v2031 = vshrl.u32 %v2030, 7
    %v2032 = vsub.s32 0, %v2031
    %v2033 = vrot.slane %v2028, %v2032
    %v2036 = vsel %vm60, %v2001, 0
    %v2039 = vsel %vm60, %v2002, 0
    %v2042 = vsel %vm60, %v2003, 0
    %v2045 = vsel %vm60, %v2004, 0
    %v2048 = vsel %vm60, %v2005, 0
    %v2051 = vsel %vm60, %v2006, 0
    %v2054 = vsel %vm60, %v2007, 0
    %v2057 = vsel %vm60, %v2008, 0
    %v2060 = vsel %vm60, %v2010, 0
    %v2063 = vsel %vm60, %v2011, 0
    %v2066 = vsel %vm60, %v2012, 0
    %v2069 = vsel %vm60, %v2013, 0
    %v2072 = vsel %vm60, %v2014, 0
    %v2075 = vsel %vm60, %v2015, 0
    %v2078 = vsel %vm60, %v2016, 0
    %v2081 = vsel %vm60, %v2017, 0
    %2083 = vmatprep.subr.mxu0 0.0
    %2084 = vmatpush1.xpose.msra.mxu0 %v2060
    %2085 = vmatprep.subr.mxu0 0.0
    %2086 = vmatpush1.xpose.msra.mxu0 %v2063
    %2087 = vmatprep.subr.mxu0 0.0
    %2088 = vmatpush1.xpose.msra.mxu0 %v2066
    %2089 = vmatprep.subr.mxu0 0.0
    %2090 = vmatpush1.xpose.msra.mxu0 %v2069
    %2091 = vmatprep.subr.mxu0 0.0
    %2092 = vmatpush1.xpose.msra.mxu0 %v2072
    %2093 = vmatprep.subr.mxu0 0.0
    %2094 = vmatpush1.xpose.msra.mxu0 %v2075
    %2095 = vmatprep.subr.mxu0 0.0
    %2096 = vmatpush1.xpose.msra.mxu0 %v2078
    %2097 = vmatprep.subr.mxu0 0.0
    %2098 = vmatpush1.xpose.msra.mxu0 %v2081
    %2099 = vmatprep.subr.mxu0 0.0
    %2100 = vmatpush1.xpose.msra.mxu0 0.0
    %2101 = vmatprep.subr.mxu0 0.0
    %2102 = vmatpush1.xpose.msra.mxu0 0.0
    %2103 = vmatprep.subr.mxu0 0.0
    %2104 = vmatpush1.xpose.msra.mxu0 0.0
    %2105 = vmatprep.subr.mxu0 0.0
    %2106 = vmatpush1.xpose.msra.mxu0 0.0
    %2107 = vmatprep.subr.mxu0 0.0
    %2108 = vmatpush1.xpose.msra.mxu0 0.0
    %2109 = vmatprep.subr.mxu0 0.0
    %2110 = vmatpush1.xpose.msra.mxu0 0.0
    %2111 = vmatprep.subr.mxu0 0.0
    %2112 = vmatpush1.xpose.msra.mxu0 0.0
    %2113 = vmatprep.subr.mxu0 0.0
    %2114 = vmatpush1.xpose.msra.mxu0 0.0
    %2115 = vmatprep.subr.mxu0 0.0
    %2116 = vmatpush1.xpose.msra.mxu0 0.0
    %2117 = vmatprep.subr.mxu0 0.0
    %2118 = vmatpush1.xpose.msra.mxu0 0.0
    %2119 = vmatprep.subr.mxu0 0.0
    %2120 = vmatpush1.xpose.msra.mxu0 0.0
    %2121 = vmatprep.subr.mxu0 0.0
    %2122 = vmatpush1.xpose.msra.mxu0 0.0
    %2123 = vmatprep.subr.mxu0 0.0
    %2124 = vmatpush1.xpose.msra.mxu0 0.0
    %2125 = vmatprep.subr.mxu0 0.0
    %2126 = vmatpush1.xpose.msra.mxu0 0.0
    %2127 = vmatprep.subr.mxu0 0.0
    %2128 = vmatpush1.xpose.msra.mxu0 0.0
    %2129 = vmatprep.subr.mxu0 0.0
    %2130 = vmatpush1.xpose.msra.mxu0 0.0
    %2131 = vmatprep.subr.mxu0 0.0
    %2132 = vmatpush1.xpose.msra.mxu0 0.0
    %2133 = vmatprep.subr.mxu0 0.0
    %2134 = vmatpush1.xpose.msra.mxu0 0.0
    %2135 = vmatprep.subr.mxu0 0.0
    %2136 = vmatpush1.xpose.msra.mxu0 0.0
    %2137 = vmatprep.subr.mxu0 0.0
    %2138 = vmatpush1.xpose.msra.mxu0 0.0
    %2139 = vmatprep.subr.mxu0 0.0
    %2140 = vmatpush1.xpose.msra.mxu0 0.0
    %2141 = vmatprep.subr.mxu0 0.0
    %2142 = vmatpush1.xpose.msra.mxu0 0.0
    %2143 = vmatprep.subr.mxu0 0.0
    %2144 = vmatpush1.xpose.msra.mxu0 0.0
    %2145 = vmatprep.subr.mxu0 0.0
    %2146 = vmatpush1.xpose.msra.mxu0 0.0
    %2147 = vmatprep.mubr.f32.mxu0 0.0
    %2148 = vmatmul.mubr.f32.gmra.mrb[0].mxu0 %v2036
    %v2149 = vpop.f32.mrb[0].mxu0
    %v2150 = vadd.f32 %v2033, %v2149
    %v2151 = vpop.f32.mrb[0].mxu0
    %2152 = vmatprep.mubr.f32.mxu0 0.0
    %2153 = vmatmul.mubr.f32.gmra.mrb[0].mxu0 %v2039
    %v2154 = vpop.f32.mrb[0].mxu0
    %v2155 = vadd.f32 %v2033, %v2154
    %v2156 = vpop.f32.mrb[0].mxu0
    %2157 = vmatprep.mubr.f32.mxu0 0.0
    %2158 = vmatmul.mubr.f32.gmra.mrb[0].mxu0 %v2042
    %v2159 = vpop.f32.mrb[0].mxu0
    %v2160 = vadd.f32 %v2033, %v2159
    %v2161 = vpop.f32.mrb[0].mxu0
    %2162 = vmatprep.mubr.f32.mxu0 0.0
    %2163 = vmatmul.mubr.f32.gmra.mrb[0].mxu0 %v2045
    %v2164 = vpop.f32.mrb[0].mxu0
    %v2165 = vadd.f32 %v2033, %v2164
    %v2166 = vpop.f32.mrb[0].mxu0
    %2167 = vmatprep.mubr.f32.mxu0 0.0
    %2168 = vmatmul.mubr.f32.gmra.mrb[0].mxu0 %v2048
    %v2169 = vpop.f32.mrb[0].mxu0
    %v2170 = vadd.f32 %v2033, %v2169
    %v2171 = vpop.f32.mrb[0].mxu0
    %2172 = vmatprep.mubr.f32.mxu0 0.0
    %2173 = vmatmul.mubr.f32.gmra.mrb[0].mxu0 %v2051
    %v2174 = vpop.f32.mrb[0].mxu0
    %v2175 = vadd.f32 %v2033, %v2174
    %v2176 = vpop.f32.mrb[0].mxu0
    %2177 = vmatprep.mubr.f32.mxu0 0.0
    %2178 = vmatmul.mubr.f32.gmra.mrb[0].mxu0 %v2054
    %v2179 = vpop.f32.mrb[0].mxu0
    %v2180 = vadd.f32 %v2033, %v2179
    %v2181 = vpop.f32.mrb[0].mxu0
    %2182 = vmatprep.mubr.f32.mxu0 0.0
    %2183 = vmatmul.mubr.f32.gmra.mrb[0].mxu0 %v2057
    %v2184 = vpop.f32.mrb[0].mxu0
    %v2185 = vadd.f32 %v2033, %v2184
    %v2186 = vpop.f32.mrb[0].mxu0
    %2187 = vdwg.mxu0
    %v2188 = vsel %vm214, %v2150, -inf
    %2189 = vmax.xlane.f32.xlu0 %v2188
    %v2190 = vpop.xlane.xlu0 %2189
    %v2191 = vsel %vm214, %v2155, -inf
    %2192 = vmax.xlane.f32.xlu0 %v2191
    %v2193 = vpop.xlane.xlu0 %2192
    %v2194 = vsel %vm214, %v2160, -inf
    %2195 = vmax.xlane.f32.xlu0 %v2194
    %v2196 = vpop.xlane.xlu0 %2195
    %v2197 = vsel %vm214, %v2165, -inf
    %2198 = vmax.xlane.f32.xlu0 %v2197
    %v2199 = vpop.xlane.xlu0 %2198
    %v2200 = vsel %vm214, %v2170, -inf
    %2201 = vmax.xlane.f32.xlu0 %v2200
    %v2202 = vpop.xlane.xlu0 %2201
    %v2203 = vsel %vm214, %v2175, -inf
    %2204 = vmax.xlane.f32.xlu0 %v2203
    %v2205 = vpop.xlane.xlu0 %2204
    %v2206 = vsel %vm214, %v2180, -inf
    %2207 = vmax.xlane.f32.xlu0 %v2206
    %v2208 = vpop.xlane.xlu0 %2207
    %v2209 = vsel %vm214, %v2185, -inf
    %2210 = vmax.xlane.f32.xlu0 %v2209
    %v2211 = vpop.xlane.xlu0 %2210
    %v2212 = vsub.f32 %v2150, %v2190
    %v2213 = vsub.f32 %v2155, %v2193
    %v2214 = vsub.f32 %v2160, %v2196
    %v2215 = vsub.f32 %v2165, %v2199
    %v2216 = vsub.f32 %v2170, %v2202
    %v2217 = vsub.f32 %v2175, %v2205
    %v2218 = vsub.f32 %v2180, %v2208
    %v2219 = vsub.f32 %v2185, %v2211
    %v2220 = vmul.f32 %v2212, 1.442695
    %v2221 = vpow.pop %v2220
    %v2222 = vmul.f32 %v2213, 1.442695
    %v2223 = vpow.pop %v2222
    %v2224 = vmul.f32 %v2214, 1.442695
    %v2225 = vpow.pop %v2224
    %v2226 = vmul.f32 %v2215, 1.442695
    %v2227 = vpow.pop %v2226
    %v2228 = vmul.f32 %v2216, 1.442695
    %v2229 = vpow.pop %v2228
    %v2230 = vmul.f32 %v2217, 1.442695
    %v2231 = vpow.pop %v2230
    %v2232 = vmul.f32 %v2218, 1.442695
    %v2233 = vpow.pop %v2232
    %v2234 = vmul.f32 %v2219, 1.442695
    %v2235 = vpow.pop %v2234
    %v2236 = vsel %vm214, %v2221, 0.0
    %2237 = vadd.xlane.f32.xlu0 %v2236
    %v2238 = vpop.xlane.xlu0 %2237
    %v2239 = vsel %vm214, %v2223, 0.0
    %2240 = vadd.xlane.f32.xlu0 %v2239
    %v2241 = vpop.xlane.xlu0 %2240
    %v2242 = vsel %vm214, %v2225, 0.0
    %2243 = vadd.xlane.f32.xlu0 %v2242
    %v2244 = vpop.xlane.xlu0 %2243
    %v2245 = vsel %vm214, %v2227, 0.0
    %2246 = vadd.xlane.f32.xlu0 %v2245
    %v2247 = vpop.xlane.xlu0 %2246
    %v2248 = vsel %vm214, %v2229, 0.0
    %2249 = vadd.xlane.f32.xlu0 %v2248
    %v2250 = vpop.xlane.xlu0 %2249
    %v2251 = vsel %vm214, %v2231, 0.0
    %2252 = vadd.xlane.f32.xlu0 %v2251
    %v2253 = vpop.xlane.xlu0 %2252
    %v2254 = vsel %vm214, %v2233, 0.0
    %2255 = vadd.xlane.f32.xlu0 %v2254
    %v2256 = vpop.xlane.xlu0 %2255
    %v2257 = vsel %vm214, %v2235, 0.0
    %2258 = vadd.xlane.f32.xlu0 %v2257
    %v2259 = vpop.xlane.xlu0 %2258
    %v2260 = vrcp.pop %v2238
    %v2261 = vrcp.pop %v2241
    %v2262 = vrcp.pop %v2244
    %v2263 = vrcp.pop %v2247
    %v2264 = vrcp.pop %v2250
    %v2265 = vrcp.pop %v2253
    %v2266 = vrcp.pop %v2256
    %v2267 = vrcp.pop %v2259
    %v2268 = vmul.f32 %v2238, %v2260
    %v2269 = vmul.f32 %v2241, %v2261
    %v2270 = vmul.f32 %v2244, %v2262
    %v2271 = vmul.f32 %v2247, %v2263
    %v2272 = vmul.f32 %v2250, %v2264
    %v2273 = vmul.f32 %v2253, %v2265
    %v2274 = vmul.f32 %v2256, %v2266
    %v2275 = vmul.f32 %v2259, %v2267
    %v2276 = vsub.f32 2.0, %v2268
    %v2277 = vsub.f32 2.0, %v2269
    %v2278 = vsub.f32 2.0, %v2270
    %v2279 = vsub.f32 2.0, %v2271
    %v2280 = vsub.f32 2.0, %v2272
    %v2281 = vsub.f32 2.0, %v2273
    %v2282 = vsub.f32 2.0, %v2274
    %v2283 = vsub.f32 2.0, %v2275
    %v2284 = vmul.f32 %v2260, %v2276
    %v2285 = vmul.f32 %v2261, %v2277
    %v2286 = vmul.f32 %v2262, %v2278
    %v2287 = vmul.f32 %v2263, %v2279
    %v2288 = vmul.f32 %v2264, %v2280
    %v2289 = vmul.f32 %v2265, %v2281
    %v2290 = vmul.f32 %v2266, %v2282
    %v2291 = vmul.f32 %v2267, %v2283
    %v2292 = vmul.f32 %v2221, %v2284
    %v2293 = vmul.f32 %v2223, %v2285
    %v2294 = vmul.f32 %v2225, %v2286
    %v2295 = vmul.f32 %v2227, %v2287
    %v2296 = vmul.f32 %v2229, %v2288
    %v2297 = vmul.f32 %v2231, %v2289
    %v2298 = vmul.f32 %v2233, %v2290
    %v2299 = vmul.f32 %v2235, %v2291
    %v2301 = vsel %vm214, %v2292, 0
    %v2304 = vsel %vm214, %v2293, 0
    %v2307 = vsel %vm214, %v2294, 0
    %v2310 = vsel %vm214, %v2295, 0
    %v2313 = vsel %vm214, %v2296, 0
    %v2316 = vsel %vm214, %v2297, 0
    %v2319 = vsel %vm214, %v2298, 0
    %v2322 = vsel %vm214, %v2299, 0
    %2324 = vmatprep.subr.mxu0 0.0
    %2325 = vmatpush1.msra.mxu0 %v2019
    %2326 = vmatprep.subr.mxu0 0.0
    %2327 = vmatpush1.msra.mxu0 %v2020
    %2328 = vmatprep.subr.mxu0 0.0
    %2329 = vmatpush1.msra.mxu0 %v2021
    %2330 = vmatprep.subr.mxu0 0.0
    %2331 = vmatpush1.msra.mxu0 %v2022
    %2332 = vmatprep.subr.mxu0 0.0
    %2333 = vmatpush1.msra.mxu0 %v2023
    %2334 = vmatprep.subr.mxu0 0.0
    %2335 = vmatpush1.msra.mxu0 %v2024
    %2336 = vmatprep.subr.mxu0 0.0
    %2337 = vmatpush1.msra.mxu0 %v2025
    %2338 = vmatprep.subr.mxu0 0.0
    %2339 = vmatpush1.msra.mxu0 %v2026
    %2340 = vmatprep.subr.mxu0 0.0
    %2341 = vmatpush1.msra.mxu0 0.0
    %2342 = vmatprep.subr.mxu0 0.0
    %2343 = vmatpush1.msra.mxu0 0.0
    %2344 = vmatprep.subr.mxu0 0.0
    %2345 = vmatpush1.msra.mxu0 0.0
    %2346 = vmatprep.subr.mxu0 0.0
    %2347 = vmatpush1.msra.mxu0 0.0
    %2348 = vmatprep.subr.mxu0 0.0
    %2349 = vmatpush1.msra.mxu0 0.0
    %2350 = vmatprep.subr.mxu0 0.0
    %2351 = vmatpush1.msra.mxu0 0.0
    %2352 = vmatprep.subr.mxu0 0.0
    %2353 = vmatpush1.msra.mxu0 0.0
    %2354 = vmatprep.subr.mxu0 0.0
    %2355 = vmatpush1.msra.mxu0 0.0
    %2356 = vmatprep.subr.mxu0 0.0
    %2357 = vmatpush1.msra.mxu0 0.0
    %2358 = vmatprep.subr.mxu0 0.0
    %2359 = vmatpush1.msra.mxu0 0.0
    %2360 = vmatprep.subr.mxu0 0.0
    %2361 = vmatpush1.msra.mxu0 0.0
    %2362 = vmatprep.subr.mxu0 0.0
    %2363 = vmatpush1.msra.mxu0 0.0
    %2364 = vmatprep.subr.mxu0 0.0
    %2365 = vmatpush1.msra.mxu0 0.0
    %2366 = vmatprep.subr.mxu0 0.0
    %2367 = vmatpush1.msra.mxu0 0.0
    %2368 = vmatprep.subr.mxu0 0.0
    %2369 = vmatpush1.msra.mxu0 0.0
    %2370 = vmatprep.subr.mxu0 0.0
    %2371 = vmatpush1.msra.mxu0 0.0
    %2372 = vmatprep.subr.mxu0 0.0
    %2373 = vmatpush1.msra.mxu0 0.0
    %2374 = vmatprep.subr.mxu0 0.0
    %2375 = vmatpush1.msra.mxu0 0.0
    %2376 = vmatprep.subr.mxu0 0.0
    %2377 = vmatpush1.msra.mxu0 0.0
    %2378 = vmatprep.subr.mxu0 0.0
    %2379 = vmatpush1.msra.mxu0 0.0
    %2380 = vmatprep.subr.mxu0 0.0
    %2381 = vmatpush1.msra.mxu0 0.0
    %2382 = vmatprep.subr.mxu0 0.0
    %2383 = vmatpush1.msra.mxu0 0.0
    %2384 = vmatprep.subr.mxu0 0.0
    %2385 = vmatpush1.msra.mxu0 0.0
    %2386 = vmatprep.subr.mxu0 0.0
    %2387 = vmatpush1.msra.mxu0 0.0
    %2388 = vmatprep.mubr.f32.mxu0 0.0
    %2389 = vmatmul.mubr.f32.gmra.mrb[0].mxu0 %v2301
    %v2390 = vpop.f32.mrb[0].mxu0
    %v2391 = vadd.f32 0.0, %v2390
    %v2392 = vpop.f32.mrb[0].mxu0
    %2393 = vmatprep.mubr.f32.mxu0 0.0
    %2394 = vmatmul.mubr.f32.gmra.mrb[0].mxu0 %v2304
    %v2395 = vpop.f32.mrb[0].mxu0
    %v2396 = vadd.f32 0.0, %v2395
    %v2397 = vpop.f32.mrb[0].mxu0
    %2398 = vmatprep.mubr.f32.mxu0 0.0
    %2399 = vmatmul.mubr.f32.gmra.mrb[0].mxu0 %v2307
    %v2400 = vpop.f32.mrb[0].mxu0
    %v2401 = vadd.f32 0.0, %v2400
    %v2402 = vpop.f32.mrb[0].mxu0
    %2403 = vmatprep.mubr.f32.mxu0 0.0
    %2404 = vmatmul.mubr.f32.gmra.mrb[0].mxu0 %v2310
    %v2405 = vpop.f32.mrb[0].mxu0
    %v2406 = vadd.f32 0.0, %v2405
    %v2407 = vpop.f32.mrb[0].mxu0
    %2408 = vmatprep.mubr.f32.mxu0 0.0
    %2409 = vmatmul.mubr.f32.gmra.mrb[0].mxu0 %v2313
    %v2410 = vpop.f32.mrb[0].mxu0
    %v2411 = vadd.f32 0.0, %v2410
    %v2412 = vpop.f32.mrb[0].mxu0
    %2413 = vmatprep.mubr.f32.mxu0 0.0
    %2414 = vmatmul.mubr.f32.gmra.mrb[0].mxu0 %v2316
    %v2415 = vpop.f32.mrb[0].mxu0
    %v2416 = vadd.f32 0.0, %v2415
    %v2417 = vpop.f32.mrb[0].mxu0
    %2418 = vmatprep.mubr.f32.mxu0 0.0
    %2419 = vmatmul.mubr.f32.gmra.mrb[0].mxu0 %v2319
    %v2420 = vpop.f32.mrb[0].mxu0
    %v2421 = vadd.f32 0.0, %v2420
    %v2422 = vpop.f32.mrb[0].mxu0
    %2423 = vmatprep.mubr.f32.mxu0 0.0
    %2424 = vmatmul.mubr.f32.gmra.mrb[0].mxu0 %v2322
    %v2425 = vpop.f32.mrb[0].mxu0
    %v2426 = vadd.f32 0.0, %v2425
    %v2427 = vpop.f32.mrb[0].mxu0
    %2428 = vdwg.mxu0
    %s2429 = scalar_lea.vmem %s0, 320
    %v2430 = vld [vmem:[%s2429] sm:$0xff]
    %v2431 = vld [vmem:[%s2429 + $0x8] sm:$0xff]
    %v2432 = vld [vmem:[%s2429 + $0x10] sm:$0xff]
    %v2433 = vld [vmem:[%s2429 + $0x18] sm:$0xff]
    %v2434 = vld [vmem:[%s2429 + $0x20] sm:$0xff]
    %v2435 = vld [vmem:[%s2429 + $0x28] sm:$0xff]
    %v2436 = vld [vmem:[%s2429 + $0x30] sm:$0xff]
    %v2437 = vld [vmem:[%s2429 + $0x38] sm:$0xff]
    %v2438 = vmul.f32 %v2430, 0.17677669
    %v2439 = vmul.f32 %v2431, 0.17677669
    %v2440 = vmul.f32 %v2432, 0.17677669
    %v2441 = vmul.f32 %v2433, 0.17677669
    %v2442 = vmul.f32 %v2434, 0.17677669
    %v2443 = vmul.f32 %v2435, 0.17677669
    %v2444 = vmul.f32 %v2436, 0.17677669
    %v2445 = vmul.f32 %v2437, 0.17677669
    %s2446 = scalar_lea.vmem %s1, 320
    %v2447 = vld [vmem:[%s2446] sm:$0xff]
    %v2448 = vld [vmem:[%s2446 + $0x8] sm:$0xff]
    %v2449 = vld [vmem:[%s2446 + $0x10] sm:$0xff]
    %v2450 = vld [vmem:[%s2446 + $0x18] sm:$0xff]
    %v2451 = vld [vmem:[%s2446 + $0x20] sm:$0xff]
    %v2452 = vld [vmem:[%s2446 + $0x28] sm:$0xff]
    %v2453 = vld [vmem:[%s2446 + $0x30] sm:$0xff]
    %v2454 = vld [vmem:[%s2446 + $0x38] sm:$0xff]
    %s2455 = scalar_lea.vmem %s2, 320
    %v2456 = vld [vmem:[%s2455] sm:$0xff]
    %v2457 = vld [vmem:[%s2455 + $0x8] sm:$0xff]
    %v2458 = vld [vmem:[%s2455 + $0x10] sm:$0xff]
    %v2459 = vld [vmem:[%s2455 + $0x18] sm:$0xff]
    %v2460 = vld [vmem:[%s2455 + $0x20] sm:$0xff]
    %v2461 = vld [vmem:[%s2455 + $0x28] sm:$0xff]
    %v2462 = vld [vmem:[%s2455 + $0x30] sm:$0xff]
    %v2463 = vld [vmem:[%s2455 + $0x38] sm:$0xff]
    %s2464 = scalar_lea.vmem %s3, 5
    %v2465 = vld [vmem:[%s2464] sm:$0x1]
    %v2467 = vlaneseq
    %v2468 = vshrl.u32 %v2467, 7
    %v2469 = vsub.s32 0, %v2468
    %v2470 = vrot.slane %v2465, %v2469
    %v2473 = vsel %vm60, %v2438, 0
    %v2476 = vsel %vm60, %v2439, 0
    %v2479 = vsel %vm60, %v2440, 0
    %v2482 = vsel %vm60, %v2441, 0
    %v2485 = vsel %vm60, %v2442, 0
    %v2488 = vsel %vm60, %v2443, 0
    %v2491 = vsel %vm60, %v2444, 0
    %v2494 = vsel %vm60, %v2445, 0
    %v2497 = vsel %vm60, %v2447, 0
    %v2500 = vsel %vm60, %v2448, 0
    %v2503 = vsel %vm60, %v2449, 0
    %v2506 = vsel %vm60, %v2450, 0
    %v2509 = vsel %vm60, %v2451, 0
    %v2512 = vsel %vm60, %v2452, 0
    %v2515 = vsel %vm60, %v2453, 0
    %v2518 = vsel %vm60, %v2454, 0
    %2520 = vmatprep.subr.mxu0 0.0
    %2521 = vmatpush1.xpose.msra.mxu0 %v2497
    %2522 = vmatprep.subr.mxu0 0.0
    %2523 = vmatpush1.xpose.msra.mxu0 %v2500
    %2524 = vmatprep.subr.mxu0 0.0
    %2525 = vmatpush1.xpose.msra.mxu0 %v2503
    %2526 = vmatprep.subr.mxu0 0.0
    %2527 = vmatpush1.xpose.msra.mxu0 %v2506
    %2528 = vmatprep.subr.mxu0 0.0
    %2529 = vmatpush1.xpose.msra.mxu0 %v2509
    %2530 = vmatprep.subr.mxu0 0.0
    %2531 = vmatpush1.xpose.msra.mxu0 %v2512
    %2532 = vmatprep.subr.mxu0 0.0
    %2533 = vmatpush1.xpose.msra.mxu0 %v2515
    %2534 = vmatprep.subr.mxu0 0.0
    %2535 = vmatpush1.xpose.msra.mxu0 %v2518
    %2536 = vmatprep.subr.mxu0 0.0
    %2537 = vmatpush1.xpose.msra.mxu0 0.0
    %2538 = vmatprep.subr.mxu0 0.0
    %2539 = vmatpush1.xpose.msra.mxu0 0.0
    %2540 = vmatprep.subr.mxu0 0.0
    %2541 = vmatpush1.xpose.msra.mxu0 0.0
    %2542 = vmatprep.subr.mxu0 0.0
    %2543 = vmatpush1.xpose.msra.mxu0 0.0
    %2544 = vmatprep.subr.mxu0 0.0
    %2545 = vmatpush1.xpose.msra.mxu0 0.0
    %2546 = vmatprep.subr.mxu0 0.0
    %2547 = vmatpush1.xpose.msra.mxu0 0.0
    %2548 = vmatprep.subr.mxu0 0.0
    %2549 = vmatpush1.xpose.msra.mxu0 0.0
    %2550 = vmatprep.subr.mxu0 0.0
    %2551 = vmatpush1.xpose.msra.mxu0 0.0
    %2552 = vmatprep.subr.mxu0 0.0
    %2553 = vmatpush1.xpose.msra.mxu0 0.0
    %2554 = vmatprep.subr.mxu0 0.0
    %2555 = vmatpush1.xpose.msra.mxu0 0.0
    %2556 = vmatprep.subr.mxu0 0.0
    %2557 = vmatpush1.xpose.msra.mxu0 0.0
    %2558 = vmatprep.subr.mxu0 0.0
    %2559 = vmatpush1.xpose.msra.mxu0 0.0
    %2560 = vmatprep.subr.mxu0 0.0
    %2561 = vmatpush1.xpose.msra.mxu0 0.0
    %2562 = vmatprep.subr.mxu0 0.0
    %2563 = vmatpush1.xpose.msra.mxu0 0.0
    %2564 = vmatprep.subr.mxu0 0.0
    %2565 = vmatpush1.xpose.msra.mxu0 0.0
    %2566 = vmatprep.subr.mxu0 0.0
    %2567 = vmatpush1.xpose.msra.mxu0 0.0
    %2568 = vmatprep.subr.mxu0 0.0
    %2569 = vmatpush1.xpose.msra.mxu0 0.0
    %2570 = vmatprep.subr.mxu0 0.0
    %2571 = vmatpush1.xpose.msra.mxu0 0.0
    %2572 = vmatprep.subr.mxu0 0.0
    %2573 = vmatpush1.xpose.msra.mxu0 0.0
    %2574 = vmatprep.subr.mxu0 0.0
    %2575 = vmatpush1.xpose.msra.mxu0 0.0
    %2576 = vmatprep.subr.mxu0 0.0
    %2577 = vmatpush1.xpose.msra.mxu0 0.0
    %2578 = vmatprep.subr.mxu0 0.0
    %2579 = vmatpush1.xpose.msra.mxu0 0.0
    %2580 = vmatprep.subr.mxu0 0.0
    %2581 = vmatpush1.xpose.msra.mxu0 0.0
    %2582 = vmatprep.subr.mxu0 0.0
    %2583 = vmatpush1.xpose.msra.mxu0 0.0
    %2584 = vmatprep.mubr.f32.mxu0 0.0
    %2585 = vmatmul.mubr.f32.gmra.mrb[0].mxu0 %v2473
    %v2586 = vpop.f32.mrb[0].mxu0
    %v2587 = vadd.f32 %v2470, %v2586
    %v2588 = vpop.f32.mrb[0].mxu0
    %2589 = vmatprep.mubr.f32.mxu0 0.0
    %2590 = vmatmul.mubr.f32.gmra.mrb[0].mxu0 %v2476
    %v2591 = vpop.f32.mrb[0].mxu0
    %v2592 = vadd.f32 %v2470, %v2591
    %v2593 = vpop.f32.mrb[0].mxu0
    %2594 = vmatprep.mubr.f32.mxu0 0.0
    %2595 = vmatmul.mubr.f32.gmra.mrb[0].mxu0 %v2479
    %v2596 = vpop.f32.mrb[0].mxu0
    %v2597 = vadd.f32 %v2470, %v2596
    %v2598 = vpop.f32.mrb[0].mxu0
    %2599 = vmatprep.mubr.f32.mxu0 0.0
    %2600 = vmatmul.mubr.f32.gmra.mrb[0].mxu0 %v2482
    %v2601 = vpop.f32.mrb[0].mxu0
    %v2602 = vadd.f32 %v2470, %v2601
    %v2603 = vpop.f32.mrb[0].mxu0
    %2604 = vmatprep.mubr.f32.mxu0 0.0
    %2605 = vmatmul.mubr.f32.gmra.mrb[0].mxu0 %v2485
    %v2606 = vpop.f32.mrb[0].mxu0
    %v2607 = vadd.f32 %v2470, %v2606
    %v2608 = vpop.f32.mrb[0].mxu0
    %2609 = vmatprep.mubr.f32.mxu0 0.0
    %2610 = vmatmul.mubr.f32.gmra.mrb[0].mxu0 %v2488
    %v2611 = vpop.f32.mrb[0].mxu0
    %v2612 = vadd.f32 %v2470, %v2611
    %v2613 = vpop.f32.mrb[0].mxu0
    %2614 = vmatprep.mubr.f32.mxu0 0.0
    %2615 = vmatmul.mubr.f32.gmra.mrb[0].mxu0 %v2491
    %v2616 = vpop.f32.mrb[0].mxu0
    %v2617 = vadd.f32 %v2470, %v2616
    %v2618 = vpop.f32.mrb[0].mxu0
    %2619 = vmatprep.mubr.f32.mxu0 0.0
    %2620 = vmatmul.mubr.f32.gmra.mrb[0].mxu0 %v2494
    %v2621 = vpop.f32.mrb[0].mxu0
    %v2622 = vadd.f32 %v2470, %v2621
    %v2623 = vpop.f32.mrb[0].mxu0
    %2624 = vdwg.mxu0
    %v2625 = vsel %vm214, %v2587, -inf
    %2626 = vmax.xlane.f32.xlu0 %v2625
    %v2627 = vpop.xlane.xlu0 %2626
    %v2628 = vsel %vm214, %v2592, -inf
    %2629 = vmax.xlane.f32.xlu0 %v2628
    %v2630 = vpop.xlane.xlu0 %2629
    %v2631 = vsel %vm214, %v2597, -inf
    %2632 = vmax.xlane.f32.xlu0 %v2631
    %v2633 = vpop.xlane.xlu0 %2632
    %v2634 = vsel %vm214, %v2602, -inf
    %2635 = vmax.xlane.f32.xlu0 %v2634
    %v2636 = vpop.xlane.xlu0 %2635
    %v2637 = vsel %vm214, %v2607, -inf
    %2638 = vmax.xlane.f32.xlu0 %v2637
    %v2639 = vpop.xlane.xlu0 %2638
    %v2640 = vsel %vm214, %v2612, -inf
    %2641 = vmax.xlane.f32.xlu0 %v2640
    %v2642 = vpop.xlane.xlu0 %2641
    %v2643 = vsel %vm214, %v2617, -inf
    %2644 = vmax.xlane.f32.xlu0 %v2643
    %v2645 = vpop.xlane.xlu0 %2644
    %v2646 = vsel %vm214, %v2622, -inf
    %2647 = vmax.xlane.f32.xlu0 %v2646
    %v2648 = vpop.xlane.xlu0 %2647
    %v2649 = vsub.f32 %v2587, %v2627
    %v2650 = vsub.f32 %v2592, %v2630
    %v2651 = vsub.f32 %v2597, %v2633
    %v2652 = vsub.f32 %v2602, %v2636
    %v2653 = vsub.f32 %v2607, %v2639
    %v2654 = vsub.f32 %v2612, %v2642
    %v2655 = vsub.f32 %v2617, %v2645
    %v2656 = vsub.f32 %v2622, %v2648
    %v2657 = vmul.f32 %v2649, 1.442695
    %v2658 = vpow.pop %v2657
    %v2659 = vmul.f32 %v2650, 1.442695
    %v2660 = vpow.pop %v2659
    %v2661 = vmul.f32 %v2651, 1.442695
    %v2662 = vpow.pop %v2661
    %v2663 = vmul.f32 %v2652, 1.442695
    %v2664 = vpow.pop %v2663
    %v2665 = vmul.f32 %v2653, 1.442695
    %v2666 = vpow.pop %v2665
    %v2667 = vmul.f32 %v2654, 1.442695
    %v2668 = vpow.pop %v2667
    %v2669 = vmul.f32 %v2655, 1.442695
    %v2670 = vpow.pop %v2669
    %v2671 = vmul.f32 %v2656, 1.442695
    %v2672 = vpow.pop %v2671
    %v2673 = vsel %vm214, %v2658, 0.0
    %2674 = vadd.xlane.f32.xlu0 %v2673
    %v2675 = vpop.xlane.xlu0 %2674
    %v2676 = vsel %vm214, %v2660, 0.0
    %2677 = vadd.xlane.f32.xlu0 %v2676
    %v2678 = vpop.xlane.xlu0 %2677
    %v2679 = vsel %vm214, %v2662, 0.0
    %2680 = vadd.xlane.f32.xlu0 %v2679
    %v2681 = vpop.xlane.xlu0 %2680
    %v2682 = vsel %vm214, %v2664, 0.0
    %2683 = vadd.xlane.f32.xlu0 %v2682
    %v2684 = vpop.xlane.xlu0 %2683
    %v2685 = vsel %vm214, %v2666, 0.0
    %2686 = vadd.xlane.f32.xlu0 %v2685
    %v2687 = vpop.xlane.xlu0 %2686
    %v2688 = vsel %vm214, %v2668, 0.0
    %2689 = vadd.xlane.f32.xlu0 %v2688
    %v2690 = vpop.xlane.xlu0 %2689
    %v2691 = vsel %vm214, %v2670, 0.0
    %2692 = vadd.xlane.f32.xlu0 %v2691
    %v2693 = vpop.xlane.xlu0 %2692
    %v2694 = vsel %vm214, %v2672, 0.0
    %2695 = vadd.xlane.f32.xlu0 %v2694
    %v2696 = vpop.xlane.xlu0 %2695
    %v2697 = vrcp.pop %v2675
    %v2698 = vrcp.pop %v2678
    %v2699 = vrcp.pop %v2681
    %v2700 = vrcp.pop %v2684
    %v2701 = vrcp.pop %v2687
    %v2702 = vrcp.pop %v2690
    %v2703 = vrcp.pop %v2693
    %v2704 = vrcp.pop %v2696
    %v2705 = vmul.f32 %v2675, %v2697
    %v2706 = vmul.f32 %v2678, %v2698
    %v2707 = vmul.f32 %v2681, %v2699
    %v2708 = vmul.f32 %v2684, %v2700
    %v2709 = vmul.f32 %v2687, %v2701
    %v2710 = vmul.f32 %v2690, %v2702
    %v2711 = vmul.f32 %v2693, %v2703
    %v2712 = vmul.f32 %v2696, %v2704
    %v2713 = vsub.f32 2.0, %v2705
    %v2714 = vsub.f32 2.0, %v2706
    %v2715 = vsub.f32 2.0, %v2707
    %v2716 = vsub.f32 2.0, %v2708
    %v2717 = vsub.f32 2.0, %v2709
    %v2718 = vsub.f32 2.0, %v2710
    %v2719 = vsub.f32 2.0, %v2711
    %v2720 = vsub.f32 2.0, %v2712
    %v2721 = vmul.f32 %v2697, %v2713
    %v2722 = vmul.f32 %v2698, %v2714
    %v2723 = vmul.f32 %v2699, %v2715
    %v2724 = vmul.f32 %v2700, %v2716
    %v2725 = vmul.f32 %v2701, %v2717
    %v2726 = vmul.f32 %v2702, %v2718
    %v2727 = vmul.f32 %v2703, %v2719
    %v2728 = vmul.f32 %v2704, %v2720
    %v2729 = vmul.f32 %v2658, %v2721
    %v2730 = vmul.f32 %v2660, %v2722
    %v2731 = vmul.f32 %v2662, %v2723
    %v2732 = vmul.f32 %v2664, %v2724
    %v2733 = vmul.f32 %v2666, %v2725
    %v2734 = vmul.f32 %v2668, %v2726
    %v2735 = vmul.f32 %v2670, %v2727
    %v2736 = vmul.f32 %v2672, %v2728
    %v2738 = vsel %vm214, %v2729, 0
    %v2741 = vsel %vm214, %v2730, 0
    %v2744 = vsel %vm214, %v2731, 0
    %v2747 = vsel %vm214, %v2732, 0
    %v2750 = vsel %vm214, %v2733, 0
    %v2753 = vsel %vm214, %v2734, 0
    %v2756 = vsel %vm214, %v2735, 0
    %v2759 = vsel %vm214, %v2736, 0
    %2761 = vmatprep.subr.mxu0 0.0
    %2762 = vmatpush1.msra.mxu0 %v2456
    %2763 = vmatprep.subr.mxu0 0.0
    %2764 = vmatpush1.msra.mxu0 %v2457
    %2765 = vmatprep.subr.mxu0 0.0
    %2766 = vmatpush1.msra.mxu0 %v2458
    %2767 = vmatprep.subr.mxu0 0.0
    %2768 = vmatpush1.msra.mxu0 %v2459
    %2769 = vmatprep.subr.mxu0 0.0
    %2770 = vmatpush1.msra.mxu0 %v2460
    %2771 = vmatprep.subr.mxu0 0.0
    %2772 = vmatpush1.msra.mxu0 %v2461
    %2773 = vmatprep.subr.mxu0 0.0
    %2774 = vmatpush1.msra.mxu0 %v2462
    %2775 = vmatprep.subr.mxu0 0.0
    %2776 = vmatpush1.msra.mxu0 %v2463
    %2777 = vmatprep.subr.mxu0 0.0
    %2778 = vmatpush1.msra.mxu0 0.0
    %2779 = vmatprep.subr.mxu0 0.0
    %2780 = vmatpush1.msra.mxu0 0.0
    %2781 = vmatprep.subr.mxu0 0.0
    %2782 = vmatpush1.msra.mxu0 0.0
    %2783 = vmatprep.subr.mxu0 0.0
    %2784 = vmatpush1.msra.mxu0 0.0
    %2785 = vmatprep.subr.mxu0 0.0
    %2786 = vmatpush1.msra.mxu0 0.0
    %2787 = vmatprep.subr.mxu0 0.0
    %2788 = vmatpush1.msra.mxu0 0.0
    %2789 = vmatprep.subr.mxu0 0.0
    %2790 = vmatpush1.msra.mxu0 0.0
    %2791 = vmatprep.subr.mxu0 0.0
    %2792 = vmatpush1.msra.mxu0 0.0
    %2793 = vmatprep.subr.mxu0 0.0
    %2794 = vmatpush1.msra.mxu0 0.0
    %2795 = vmatprep.subr.mxu0 0.0
    %2796 = vmatpush1.msra.mxu0 0.0
    %2797 = vmatprep.subr.mxu0 0.0
    %2798 = vmatpush1.msra.mxu0 0.0
    %2799 = vmatprep.subr.mxu0 0.0
    %2800 = vmatpush1.msra.mxu0 0.0
    %2801 = vmatprep.subr.mxu0 0.0
    %2802 = vmatpush1.msra.mxu0 0.0
    %2803 = vmatprep.subr.mxu0 0.0
    %2804 = vmatpush1.msra.mxu0 0.0
    %2805 = vmatprep.subr.mxu0 0.0
    %2806 = vmatpush1.msra.mxu0 0.0
    %2807 = vmatprep.subr.mxu0 0.0
    %2808 = vmatpush1.msra.mxu0 0.0
    %2809 = vmatprep.subr.mxu0 0.0
    %2810 = vmatpush1.msra.mxu0 0.0
    %2811 = vmatprep.subr.mxu0 0.0
    %2812 = vmatpush1.msra.mxu0 0.0
    %2813 = vmatprep.subr.mxu0 0.0
    %2814 = vmatpush1.msra.mxu0 0.0
    %2815 = vmatprep.subr.mxu0 0.0
    %2816 = vmatpush1.msra.mxu0 0.0
    %2817 = vmatprep.subr.mxu0 0.0
    %2818 = vmatpush1.msra.mxu0 0.0
    %2819 = vmatprep.subr.mxu0 0.0
    %2820 = vmatpush1.msra.mxu0 0.0
    %2821 = vmatprep.subr.mxu0 0.0
    %2822 = vmatpush1.msra.mxu0 0.0
    %2823 = vmatprep.subr.mxu0 0.0
    %2824 = vmatpush1.msra.mxu0 0.0
    %2825 = vmatprep.mubr.f32.mxu0 0.0
    %2826 = vmatmul.mubr.f32.gmra.mrb[0].mxu0 %v2738
    %v2827 = vpop.f32.mrb[0].mxu0
    %v2828 = vadd.f32 0.0, %v2827
    %v2829 = vpop.f32.mrb[0].mxu0
    %2830 = vmatprep.mubr.f32.mxu0 0.0
    %2831 = vmatmul.mubr.f32.gmra.mrb[0].mxu0 %v2741
    %v2832 = vpop.f32.mrb[0].mxu0
    %v2833 = vadd.f32 0.0, %v2832
    %v2834 = vpop.f32.mrb[0].mxu0
    %2835 = vmatprep.mubr.f32.mxu0 0.0
    %2836 = vmatmul.mubr.f32.gmra.mrb[0].mxu0 %v2744
    %v2837 = vpop.f32.mrb[0].mxu0
    %v2838 = vadd.f32 0.0, %v2837
    %v2839 = vpop.f32.mrb[0].mxu0
    %2840 = vmatprep.mubr.f32.mxu0 0.0
    %2841 = vmatmul.mubr.f32.gmra.mrb[0].mxu0 %v2747
    %v2842 = vpop.f32.mrb[0].mxu0
    %v2843 = vadd.f32 0.0, %v2842
    %v2844 = vpop.f32.mrb[0].mxu0
    %2845 = vmatprep.mubr.f32.mxu0 0.0
    %2846 = vmatmul.mubr.f32.gmra.mrb[0].mxu0 %v2750
    %v2847 = vpop.f32.mrb[0].mxu0
    %v2848 = vadd.f32 0.0, %v2847
    %v2849 = vpop.f32.mrb[0].mxu0
    %2850 = vmatprep.mubr.f32.mxu0 0.0
    %2851 = vmatmul.mubr.f32.gmra.mrb[0].mxu0 %v2753
    %v2852 = vpop.f32.mrb[0].mxu0
    %v2853 = vadd.f32 0.0, %v2852
    %v2854 = vpop.f32.mrb[0].mxu0
    %2855 = vmatprep.mubr.f32.mxu0 0.0
    %2856 = vmatmul.mubr.f32.gmra.mrb[0].mxu0 %v2756
    %v2857 = vpop.f32.mrb[0].mxu0
    %v2858 = vadd.f32 0.0, %v2857
    %v2859 = vpop.f32.mrb[0].mxu0
    %2860 = vmatprep.mubr.f32.mxu0 0.0
    %2861 = vmatmul.mubr.f32.gmra.mrb[0].mxu0 %v2759
    %v2862 = vpop.f32.mrb[0].mxu0
    %v2863 = vadd.f32 0.0, %v2862
    %v2864 = vpop.f32.mrb[0].mxu0
    %2865 = vdwg.mxu0
    %2874 = vrot.lane.b32.xlu0 %v2587, 64
    %v2875 = vpop.permute.xlu0 %2874
    %2876 = vrot.lane.b32.xlu0 %v2592, 64
    %v2877 = vpop.permute.xlu0 %2876
    %2878 = vrot.lane.b32.xlu0 %v2597, 64
    %v2879 = vpop.permute.xlu0 %2878
    %2880 = vrot.lane.b32.xlu0 %v2602, 64
    %v2881 = vpop.permute.xlu0 %2880
    %2882 = vrot.lane.b32.xlu0 %v2607, 64
    %v2883 = vpop.permute.xlu0 %2882
    %2884 = vrot.lane.b32.xlu0 %v2612, 64
    %v2885 = vpop.permute.xlu0 %2884
    %2886 = vrot.lane.b32.xlu0 %v2617, 64
    %v2887 = vpop.permute.xlu0 %2886
    %2888 = vrot.lane.b32.xlu0 %v2622, 64
    %v2889 = vpop.permute.xlu0 %2888
    %v2898 = vsel %vm214, %v2150, %v2875
    %v2899 = vsel %vm214, %v2155, %v2877
    %v2900 = vsel %vm214, %v2160, %v2879
    %v2901 = vsel %vm214, %v2165, %v2881
    %v2902 = vsel %vm214, %v2170, %v2883
    %v2903 = vsel %vm214, %v2175, %v2885
    %v2904 = vsel %vm214, %v2180, %v2887
    %v2905 = vsel %vm214, %v2185, %v2889
    %2906 = vst [vmem:[#allocation4 + $0x10] sm:$0xff] %v2898
    %2907 = vst [vmem:[#allocation4 + $0x30] sm:$0xff] %v2899
    %2908 = vst [vmem:[#allocation4 + $0x50] sm:$0xff] %v2900
    %2909 = vst [vmem:[#allocation4 + $0x70] sm:$0xff] %v2901
    %2910 = vst [vmem:[#allocation4 + $0x90] sm:$0xff] %v2902
    %2911 = vst [vmem:[#allocation4 + $0xb0] sm:$0xff] %v2903
    %2912 = vst [vmem:[#allocation4 + $0xd0] sm:$0xff] %v2904
    %2913 = vst [vmem:[#allocation4 + $0xf0] sm:$0xff] %v2905
    %s2914 = scalar_lea.vmem %s0, 384
    %v2915 = vld [vmem:[%s2914] sm:$0xff]
    %v2916 = vld [vmem:[%s2914 + $0x8] sm:$0xff]
    %v2917 = vld [vmem:[%s2914 + $0x10] sm:$0xff]
    %v2918 = vld [vmem:[%s2914 + $0x18] sm:$0xff]
    %v2919 = vld [vmem:[%s2914 + $0x20] sm:$0xff]
    %v2920 = vld [vmem:[%s2914 + $0x28] sm:$0xff]
    %v2921 = vld [vmem:[%s2914 + $0x30] sm:$0xff]
    %v2922 = vld [vmem:[%s2914 + $0x38] sm:$0xff]
    %v2923 = vmul.f32 %v2915, 0.17677669
    %v2924 = vmul.f32 %v2916, 0.17677669
    %v2925 = vmul.f32 %v2917, 0.17677669
    %v2926 = vmul.f32 %v2918, 0.17677669
    %v2927 = vmul.f32 %v2919, 0.17677669
    %v2928 = vmul.f32 %v2920, 0.17677669
    %v2929 = vmul.f32 %v2921, 0.17677669
    %v2930 = vmul.f32 %v2922, 0.17677669
    %s2931 = scalar_lea.vmem %s1, 384
    %v2932 = vld [vmem:[%s2931] sm:$0xff]
    %v2933 = vld [vmem:[%s2931 + $0x8] sm:$0xff]
    %v2934 = vld [vmem:[%s2931 + $0x10] sm:$0xff]
    %v2935 = vld [vmem:[%s2931 + $0x18] sm:$0xff]
    %v2936 = vld [vmem:[%s2931 + $0x20] sm:$0xff]
    %v2937 = vld [vmem:[%s2931 + $0x28] sm:$0xff]
    %v2938 = vld [vmem:[%s2931 + $0x30] sm:$0xff]
    %v2939 = vld [vmem:[%s2931 + $0x38] sm:$0xff]
    %s2940 = scalar_lea.vmem %s2, 384
    %v2941 = vld [vmem:[%s2940] sm:$0xff]
    %v2942 = vld [vmem:[%s2940 + $0x8] sm:$0xff]
    %v2943 = vld [vmem:[%s2940 + $0x10] sm:$0xff]
    %v2944 = vld [vmem:[%s2940 + $0x18] sm:$0xff]
    %v2945 = vld [vmem:[%s2940 + $0x20] sm:$0xff]
    %v2946 = vld [vmem:[%s2940 + $0x28] sm:$0xff]
    %v2947 = vld [vmem:[%s2940 + $0x30] sm:$0xff]
    %v2948 = vld [vmem:[%s2940 + $0x38] sm:$0xff]
    %s2949 = scalar_lea.vmem %s3, 6
    %v2950 = vld [vmem:[%s2949] sm:$0x1]
    %v2952 = vlaneseq
    %v2953 = vshrl.u32 %v2952, 7
    %v2954 = vsub.s32 0, %v2953
    %v2955 = vrot.slane %v2950, %v2954
    %v2958 = vsel %vm60, %v2923, 0
    %v2961 = vsel %vm60, %v2924, 0
    %v2964 = vsel %vm60, %v2925, 0
    %v2967 = vsel %vm60, %v2926, 0
    %v2970 = vsel %vm60, %v2927, 0
    %v2973 = vsel %vm60, %v2928, 0
    %v2976 = vsel %vm60, %v2929, 0
    %v2979 = vsel %vm60, %v2930, 0
    %v2982 = vsel %vm60, %v2932, 0
    %v2985 = vsel %vm60, %v2933, 0
    %v2988 = vsel %vm60, %v2934, 0
    %v2991 = vsel %vm60, %v2935, 0
    %v2994 = vsel %vm60, %v2936, 0
    %v2997 = vsel %vm60, %v2937, 0
    %v3000 = vsel %vm60, %v2938, 0
    %v3003 = vsel %vm60, %v2939, 0
    %3005 = vmatprep.subr.mxu0 0.0
    %3006 = vmatpush1.xpose.msra.mxu0 %v2982
    %3007 = vmatprep.subr.mxu0 0.0
    %3008 = vmatpush1.xpose.msra.mxu0 %v2985
    %3009 = vmatprep.subr.mxu0 0.0
    %3010 = vmatpush1.xpose.msra.mxu0 %v2988
    %3011 = vmatprep.subr.mxu0 0.0
    %3012 = vmatpush1.xpose.msra.mxu0 %v2991
    %3013 = vmatprep.subr.mxu0 0.0
    %3014 = vmatpush1.xpose.msra.mxu0 %v2994
    %3015 = vmatprep.subr.mxu0 0.0
    %3016 = vmatpush1.xpose.msra.mxu0 %v2997
    %3017 = vmatprep.subr.mxu0 0.0
    %3018 = vmatpush1.xpose.msra.mxu0 %v3000
    %3019 = vmatprep.subr.mxu0 0.0
    %3020 = vmatpush1.xpose.msra.mxu0 %v3003
    %3021 = vmatprep.subr.mxu0 0.0
    %3022 = vmatpush1.xpose.msra.mxu0 0.0
    %3023 = vmatprep.subr.mxu0 0.0
    %3024 = vmatpush1.xpose.msra.mxu0 0.0
    %3025 = vmatprep.subr.mxu0 0.0
    %3026 = vmatpush1.xpose.msra.mxu0 0.0
    %3027 = vmatprep.subr.mxu0 0.0
    %3028 = vmatpush1.xpose.msra.mxu0 0.0
    %3029 = vmatprep.subr.mxu0 0.0
    %3030 = vmatpush1.xpose.msra.mxu0 0.0
    %3031 = vmatprep.subr.mxu0 0.0
    %3032 = vmatpush1.xpose.msra.mxu0 0.0
    %3033 = vmatprep.subr.mxu0 0.0
    %3034 = vmatpush1.xpose.msra.mxu0 0.0
    %3035 = vmatprep.subr.mxu0 0.0
    %3036 = vmatpush1.xpose.msra.mxu0 0.0
    %3037 = vmatprep.subr.mxu0 0.0
    %3038 = vmatpush1.xpose.msra.mxu0 0.0
    %3039 = vmatprep.subr.mxu0 0.0
    %3040 = vmatpush1.xpose.msra.mxu0 0.0
    %3041 = vmatprep.subr.mxu0 0.0
    %3042 = vmatpush1.xpose.msra.mxu0 0.0
    %3043 = vmatprep.subr.mxu0 0.0
    %3044 = vmatpush1.xpose.msra.mxu0 0.0
    %3045 = vmatprep.subr.mxu0 0.0
    %3046 = vmatpush1.xpose.msra.mxu0 0.0
    %3047 = vmatprep.subr.mxu0 0.0
    %3048 = vmatpush1.xpose.msra.mxu0 0.0
    %3049 = vmatprep.subr.mxu0 0.0
    %3050 = vmatpush1.xpose.msra.mxu0 0.0
    %3051 = vmatprep.subr.mxu0 0.0
    %3052 = vmatpush1.xpose.msra.mxu0 0.0
    %3053 = vmatprep.subr.mxu0 0.0
    %3054 = vmatpush1.xpose.msra.mxu0 0.0
    %3055 = vmatprep.subr.mxu0 0.0
    %3056 = vmatpush1.xpose.msra.mxu0 0.0
    %3057 = vmatprep.subr.mxu0 0.0
    %3058 = vmatpush1.xpose.msra.mxu0 0.0
    %3059 = vmatprep.subr.mxu0 0.0
    %3060 = vmatpush1.xpose.msra.mxu0 0.0
    %3061 = vmatprep.subr.mxu0 0.0
    %3062 = vmatpush1.xpose.msra.mxu0 0.0
    %3063 = vmatprep.subr.mxu0 0.0
    %3064 = vmatpush1.xpose.msra.mxu0 0.0
    %3065 = vmatprep.subr.mxu0 0.0
    %3066 = vmatpush1.xpose.msra.mxu0 0.0
    %3067 = vmatprep.subr.mxu0 0.0
    %3068 = vmatpush1.xpose.msra.mxu0 0.0
    %3069 = vmatprep.mubr.f32.mxu0 0.0
    %3070 = vmatmul.mubr.f32.gmra.mrb[0].mxu0 %v2958
    %v3071 = vpop.f32.mrb[0].mxu0
    %v3072 = vadd.f32 %v2955, %v3071
    %v3073 = vpop.f32.mrb[0].mxu0
    %3074 = vmatprep.mubr.f32.mxu0 0.0
    %3075 = vmatmul.mubr.f32.gmra.mrb[0].mxu0 %v2961
    %v3076 = vpop.f32.mrb[0].mxu0
    %v3077 = vadd.f32 %v2955, %v3076
    %v3078 = vpop.f32.mrb[0].mxu0
    %3079 = vmatprep.mubr.f32.mxu0 0.0
    %3080 = vmatmul.mubr.f32.gmra.mrb[0].mxu0 %v2964
    %v3081 = vpop.f32.mrb[0].mxu0
    %v3082 = vadd.f32 %v2955, %v3081
    %v3083 = vpop.f32.mrb[0].mxu0
    %3084 = vmatprep.mubr.f32.mxu0 0.0
    %3085 = vmatmul.mubr.f32.gmra.mrb[0].mxu0 %v2967
    %v3086 = vpop.f32.mrb[0].mxu0
    %v3087 = vadd.f32 %v2955, %v3086
    %v3088 = vpop.f32.mrb[0].mxu0
    %3089 = vmatprep.mubr.f32.mxu0 0.0
    %3090 = vmatmul.mubr.f32.gmra.mrb[0].mxu0 %v2970
    %v3091 = vpop.f32.mrb[0].mxu0
    %v3092 = vadd.f32 %v2955, %v3091
    %v3093 = vpop.f32.mrb[0].mxu0
    %3094 = vmatprep.mubr.f32.mxu0 0.0
    %3095 = vmatmul.mubr.f32.gmra.mrb[0].mxu0 %v2973
    %v3096 = vpop.f32.mrb[0].mxu0
    %v3097 = vadd.f32 %v2955, %v3096
    %v3098 = vpop.f32.mrb[0].mxu0
    %3099 = vmatprep.mubr.f32.mxu0 0.0
    %3100 = vmatmul.mubr.f32.gmra.mrb[0].mxu0 %v2976
    %v3101 = vpop.f32.mrb[0].mxu0
    %v3102 = vadd.f32 %v2955, %v3101
    %v3103 = vpop.f32.mrb[0].mxu0
    %3104 = vmatprep.mubr.f32.mxu0 0.0
    %3105 = vmatmul.mubr.f32.gmra.mrb[0].mxu0 %v2979
    %v3106 = vpop.f32.mrb[0].mxu0
    %v3107 = vadd.f32 %v2955, %v3106
    %v3108 = vpop.f32.mrb[0].mxu0
    %3109 = vdwg.mxu0
    %v3110 = vsel %vm214, %v3072, -inf
    %3111 = vmax.xlane.f32.xlu0 %v3110
    %v3112 = vpop.xlane.xlu0 %3111
    %v3113 = vsel %vm214, %v3077, -inf
    %3114 = vmax.xlane.f32.xlu0 %v3113
    %v3115 = vpop.xlane.xlu0 %3114
    %v3116 = vsel %vm214, %v3082, -inf
    %3117 = vmax.xlane.f32.xlu0 %v3116
    %v3118 = vpop.xlane.xlu0 %3117
    %v3119 = vsel %vm214, %v3087, -inf
    %3120 = vmax.xlane.f32.xlu0 %v3119
    %v3121 = vpop.xlane.xlu0 %3120
    %v3122 = vsel %vm214, %v3092, -inf
    %3123 = vmax.xlane.f32.xlu0 %v3122
    %v3124 = vpop.xlane.xlu0 %3123
    %v3125 = vsel %vm214, %v3097, -inf
    %3126 = vmax.xlane.f32.xlu0 %v3125
    %v3127 = vpop.xlane.xlu0 %3126
    %v3128 = vsel %vm214, %v3102, -inf
    %3129 = vmax.xlane.f32.xlu0 %v3128
    %v3130 = vpop.xlane.xlu0 %3129
    %v3131 = vsel %vm214, %v3107, -inf
    %3132 = vmax.xlane.f32.xlu0 %v3131
    %v3133 = vpop.xlane.xlu0 %3132
    %v3134 = vsub.f32 %v3072, %v3112
    %v3135 = vsub.f32 %v3077, %v3115
    %v3136 = vsub.f32 %v3082, %v3118
    %v3137 = vsub.f32 %v3087, %v3121
    %v3138 = vsub.f32 %v3092, %v3124
    %v3139 = vsub.f32 %v3097, %v3127
    %v3140 = vsub.f32 %v3102, %v3130
    %v3141 = vsub.f32 %v3107, %v3133
    %v3142 = vmul.f32 %v3134, 1.442695
    %v3143 = vpow.pop %v3142
    %v3144 = vmul.f32 %v3135, 1.442695
    %v3145 = vpow.pop %v3144
    %v3146 = vmul.f32 %v3136, 1.442695
    %v3147 = vpow.pop %v3146
    %v3148 = vmul.f32 %v3137, 1.442695
    %v3149 = vpow.pop %v3148
    %v3150 = vmul.f32 %v3138, 1.442695
    %v3151 = vpow.pop %v3150
    %v3152 = vmul.f32 %v3139, 1.442695
    %v3153 = vpow.pop %v3152
    %v3154 = vmul.f32 %v3140, 1.442695
    %v3155 = vpow.pop %v3154
    %v3156 = vmul.f32 %v3141, 1.442695
    %v3157 = vpow.pop %v3156
    %v3158 = vsel %vm214, %v3143, 0.0
    %3159 = vadd.xlane.f32.xlu0 %v3158
    %v3160 = vpop.xlane.xlu0 %3159
    %v3161 = vsel %vm214, %v3145, 0.0
    %3162 = vadd.xlane.f32.xlu0 %v3161
    %v3163 = vpop.xlane.xlu0 %3162
    %v3164 = vsel %vm214, %v3147, 0.0
    %3165 = vadd.xlane.f32.xlu0 %v3164
    %v3166 = vpop.xlane.xlu0 %3165
    %v3167 = vsel %vm214, %v3149, 0.0
    %3168 = vadd.xlane.f32.xlu0 %v3167
    %v3169 = vpop.xlane.xlu0 %3168
    %v3170 = vsel %vm214, %v3151, 0.0
    %3171 = vadd.xlane.f32.xlu0 %v3170
    %v3172 = vpop.xlane.xlu0 %3171
    %v3173 = vsel %vm214, %v3153, 0.0
    %3174 = vadd.xlane.f32.xlu0 %v3173
    %v3175 = vpop.xlane.xlu0 %3174
    %v3176 = vsel %vm214, %v3155, 0.0
    %3177 = vadd.xlane.f32.xlu0 %v3176
    %v3178 = vpop.xlane.xlu0 %3177
    %v3179 = vsel %vm214, %v3157, 0.0
    %3180 = vadd.xlane.f32.xlu0 %v3179
    %v3181 = vpop.xlane.xlu0 %3180
    %v3182 = vrcp.pop %v3160
    %v3183 = vrcp.pop %v3163
    %v3184 = vrcp.pop %v3166
    %v3185 = vrcp.pop %v3169
    %v3186 = vrcp.pop %v3172
    %v3187 = vrcp.pop %v3175
    %v3188 = vrcp.pop %v3178
    %v3189 = vrcp.pop %v3181
    %v3190 = vmul.f32 %v3160, %v3182
    %v3191 = vmul.f32 %v3163, %v3183
    %v3192 = vmul.f32 %v3166, %v3184
    %v3193 = vmul.f32 %v3169, %v3185
    %v3194 = vmul.f32 %v3172, %v3186
    %v3195 = vmul.f32 %v3175, %v3187
    %v3196 = vmul.f32 %v3178, %v3188
    %v3197 = vmul.f32 %v3181, %v3189
    %v3198 = vsub.f32 2.0, %v3190
    %v3199 = vsub.f32 2.0, %v3191
    %v3200 = vsub.f32 2.0, %v3192
    %v3201 = vsub.f32 2.0, %v3193
    %v3202 = vsub.f32 2.0, %v3194
    %v3203 = vsub.f32 2.0, %v3195
    %v3204 = vsub.f32 2.0, %v3196
    %v3205 = vsub.f32 2.0, %v3197
    %v3206 = vmul.f32 %v3182, %v3198
    %v3207 = vmul.f32 %v3183, %v3199
    %v3208 = vmul.f32 %v3184, %v3200
    %v3209 = vmul.f32 %v3185, %v3201
    %v3210 = vmul.f32 %v3186, %v3202
    %v3211 = vmul.f32 %v3187, %v3203
    %v3212 = vmul.f32 %v3188, %v3204
    %v3213 = vmul.f32 %v3189, %v3205
    %v3214 = vmul.f32 %v3143, %v3206
    %v3215 = vmul.f32 %v3145, %v3207
    %v3216 = vmul.f32 %v3147, %v3208
    %v3217 = vmul.f32 %v3149, %v3209
    %v3218 = vmul.f32 %v3151, %v3210
    %v3219 = vmul.f32 %v3153, %v3211
    %v3220 = vmul.f32 %v3155, %v3212
    %v3221 = vmul.f32 %v3157, %v3213
    %v3223 = vsel %vm214, %v3214, 0
    %v3226 = vsel %vm214, %v3215, 0
    %v3229 = vsel %vm214, %v3216, 0
    %v3232 = vsel %vm214, %v3217, 0
    %v3235 = vsel %vm214, %v3218, 0
    %v3238 = vsel %vm214, %v3219, 0
    %v3241 = vsel %vm214, %v3220, 0
    %v3244 = vsel %vm214, %v3221, 0
    %3246 = vmatprep.subr.mxu0 0.0
    %3247 = vmatpush1.msra.mxu0 %v2941
    %3248 = vmatprep.subr.mxu0 0.0
    %3249 = vmatpush1.msra.mxu0 %v2942
    %3250 = vmatprep.subr.mxu0 0.0
    %3251 = vmatpush1.msra.mxu0 %v2943
    %3252 = vmatprep.subr.mxu0 0.0
    %3253 = vmatpush1.msra.mxu0 %v2944
    %3254 = vmatprep.subr.mxu0 0.0
    %3255 = vmatpush1.msra.mxu0 %v2945
    %3256 = vmatprep.subr.mxu0 0.0
    %3257 = vmatpush1.msra.mxu0 %v2946
    %3258 = vmatprep.subr.mxu0 0.0
    %3259 = vmatpush1.msra.mxu0 %v2947
    %3260 = vmatprep.subr.mxu0 0.0
    %3261 = vmatpush1.msra.mxu0 %v2948
    %3262 = vmatprep.subr.mxu0 0.0
    %3263 = vmatpush1.msra.mxu0 0.0
    %3264 = vmatprep.subr.mxu0 0.0
    %3265 = vmatpush1.msra.mxu0 0.0
    %3266 = vmatprep.subr.mxu0 0.0
    %3267 = vmatpush1.msra.mxu0 0.0
    %3268 = vmatprep.subr.mxu0 0.0
    %3269 = vmatpush1.msra.mxu0 0.0
    %3270 = vmatprep.subr.mxu0 0.0
    %3271 = vmatpush1.msra.mxu0 0.0
    %3272 = vmatprep.subr.mxu0 0.0
    %3273 = vmatpush1.msra.mxu0 0.0
    %3274 = vmatprep.subr.mxu0 0.0
    %3275 = vmatpush1.msra.mxu0 0.0
    %3276 = vmatprep.subr.mxu0 0.0
    %3277 = vmatpush1.msra.mxu0 0.0
    %3278 = vmatprep.subr.mxu0 0.0
    %3279 = vmatpush1.msra.mxu0 0.0
    %3280 = vmatprep.subr.mxu0 0.0
    %3281 = vmatpush1.msra.mxu0 0.0
    %3282 = vmatprep.subr.mxu0 0.0
    %3283 = vmatpush1.msra.mxu0 0.0
    %3284 = vmatprep.subr.mxu0 0.0
    %3285 = vmatpush1.msra.mxu0 0.0
    %3286 = vmatprep.subr.mxu0 0.0
    %3287 = vmatpush1.msra.mxu0 0.0
    %3288 = vmatprep.subr.mxu0 0.0
    %3289 = vmatpush1.msra.mxu0 0.0
    %3290 = vmatprep.subr.mxu0 0.0
    %3291 = vmatpush1.msra.mxu0 0.0
    %3292 = vmatprep.subr.mxu0 0.0
    %3293 = vmatpush1.msra.mxu0 0.0
    %3294 = vmatprep.subr.mxu0 0.0
    %3295 = vmatpush1.msra.mxu0 0.0
    %3296 = vmatprep.subr.mxu0 0.0
    %3297 = vmatpush1.msra.mxu0 0.0
    %3298 = vmatprep.subr.mxu0 0.0
    %3299 = vmatpush1.msra.mxu0 0.0
    %3300 = vmatprep.subr.mxu0 0.0
    %3301 = vmatpush1.msra.mxu0 0.0
    %3302 = vmatprep.subr.mxu0 0.0
    %3303 = vmatpush1.msra.mxu0 0.0
    %3304 = vmatprep.subr.mxu0 0.0
    %3305 = vmatpush1.msra.mxu0 0.0
    %3306 = vmatprep.subr.mxu0 0.0
    %3307 = vmatpush1.msra.mxu0 0.0
    %3308 = vmatprep.subr.mxu0 0.0
    %3309 = vmatpush1.msra.mxu0 0.0
    %3310 = vmatprep.mubr.f32.mxu0 0.0
    %3311 = vmatmul.mubr.f32.gmra.mrb[0].mxu0 %v3223
    %v3312 = vpop.f32.mrb[0].mxu0
    %v3313 = vadd.f32 0.0, %v3312
    %v3314 = vpop.f32.mrb[0].mxu0
    %3315 = vmatprep.mubr.f32.mxu0 0.0
    %3316 = vmatmul.mubr.f32.gmra.mrb[0].mxu0 %v3226
    %v3317 = vpop.f32.mrb[0].mxu0
    %v3318 = vadd.f32 0.0, %v3317
    %v3319 = vpop.f32.mrb[0].mxu0
    %3320 = vmatprep.mubr.f32.mxu0 0.0
    %3321 = vmatmul.mubr.f32.gmra.mrb[0].mxu0 %v3229
    %v3322 = vpop.f32.mrb[0].mxu0
    %v3323 = vadd.f32 0.0, %v3322
    %v3324 = vpop.f32.mrb[0].mxu0
    %3325 = vmatprep.mubr.f32.mxu0 0.0
    %3326 = vmatmul.mubr.f32.gmra.mrb[0].mxu0 %v3232
    %v3327 = vpop.f32.mrb[0].mxu0
    %v3328 = vadd.f32 0.0, %v3327
    %v3329 = vpop.f32.mrb[0].mxu0
    %3330 = vmatprep.mubr.f32.mxu0 0.0
    %3331 = vmatmul.mubr.f32.gmra.mrb[0].mxu0 %v3235
    %v3332 = vpop.f32.mrb[0].mxu0
    %v3333 = vadd.f32 0.0, %v3332
    %v3334 = vpop.f32.mrb[0].mxu0
    %3335 = vmatprep.mubr.f32.mxu0 0.0
    %3336 = vmatmul.mubr.f32.gmra.mrb[0].mxu0 %v3238
    %v3337 = vpop.f32.mrb[0].mxu0
    %v3338 = vadd.f32 0.0, %v3337
    %v3339 = vpop.f32.mrb[0].mxu0
    %3340 = vmatprep.mubr.f32.mxu0 0.0
    %3341 = vmatmul.mubr.f32.gmra.mrb[0].mxu0 %v3241
    %v3342 = vpop.f32.mrb[0].mxu0
    %v3343 = vadd.f32 0.0, %v3342
    %v3344 = vpop.f32.mrb[0].mxu0
    %3345 = vmatprep.mubr.f32.mxu0 0.0
    %3346 = vmatmul.mubr.f32.gmra.mrb[0].mxu0 %v3244
    %v3347 = vpop.f32.mrb[0].mxu0
    %v3348 = vadd.f32 0.0, %v3347
    %v3349 = vpop.f32.mrb[0].mxu0
    %3350 = vdwg.mxu0
    %s3351 = scalar_lea.vmem %s0, 448
    %v3352 = vld [vmem:[%s3351] sm:$0xff]
    %v3353 = vld [vmem:[%s3351 + $0x8] sm:$0xff]
    %v3354 = vld [vmem:[%s3351 + $0x10] sm:$0xff]
    %v3355 = vld [vmem:[%s3351 + $0x18] sm:$0xff]
    %v3356 = vld [vmem:[%s3351 + $0x20] sm:$0xff]
    %v3357 = vld [vmem:[%s3351 + $0x28] sm:$0xff]
    %v3358 = vld [vmem:[%s3351 + $0x30] sm:$0xff]
    %v3359 = vld [vmem:[%s3351 + $0x38] sm:$0xff]
    %v3360 = vmul.f32 %v3352, 0.17677669
    %v3361 = vmul.f32 %v3353, 0.17677669
    %v3362 = vmul.f32 %v3354, 0.17677669
    %v3363 = vmul.f32 %v3355, 0.17677669
    %v3364 = vmul.f32 %v3356, 0.17677669
    %v3365 = vmul.f32 %v3357, 0.17677669
    %v3366 = vmul.f32 %v3358, 0.17677669
    %v3367 = vmul.f32 %v3359, 0.17677669
    %s3368 = scalar_lea.vmem %s1, 448
    %v3369 = vld [vmem:[%s3368] sm:$0xff]
    %v3370 = vld [vmem:[%s3368 + $0x8] sm:$0xff]
    %v3371 = vld [vmem:[%s3368 + $0x10] sm:$0xff]
    %v3372 = vld [vmem:[%s3368 + $0x18] sm:$0xff]
    %v3373 = vld [vmem:[%s3368 + $0x20] sm:$0xff]
    %v3374 = vld [vmem:[%s3368 + $0x28] sm:$0xff]
    %v3375 = vld [vmem:[%s3368 + $0x30] sm:$0xff]
    %v3376 = vld [vmem:[%s3368 + $0x38] sm:$0xff]
    %s3377 = scalar_lea.vmem %s2, 448
    %v3378 = vld [vmem:[%s3377] sm:$0xff]
    %v3379 = vld [vmem:[%s3377 + $0x8] sm:$0xff]
    %v3380 = vld [vmem:[%s3377 + $0x10] sm:$0xff]
    %v3381 = vld [vmem:[%s3377 + $0x18] sm:$0xff]
    %v3382 = vld [vmem:[%s3377 + $0x20] sm:$0xff]
    %v3383 = vld [vmem:[%s3377 + $0x28] sm:$0xff]
    %v3384 = vld [vmem:[%s3377 + $0x30] sm:$0xff]
    %v3385 = vld [vmem:[%s3377 + $0x38] sm:$0xff]
    %s3386 = scalar_lea.vmem %s3, 7
    %v3387 = vld [vmem:[%s3386] sm:$0x1]
    %v3389 = vlaneseq
    %v3390 = vshrl.u32 %v3389, 7
    %v3391 = vsub.s32 0, %v3390
    %v3392 = vrot.slane %v3387, %v3391
    %v3395 = vsel %vm60, %v3360, 0
    %v3398 = vsel %vm60, %v3361, 0
    %v3401 = vsel %vm60, %v3362, 0
    %v3404 = vsel %vm60, %v3363, 0
    %v3407 = vsel %vm60, %v3364, 0
    %v3410 = vsel %vm60, %v3365, 0
    %v3413 = vsel %vm60, %v3366, 0
    %v3416 = vsel %vm60, %v3367, 0
    %v3419 = vsel %vm60, %v3369, 0
    %v3422 = vsel %vm60, %v3370, 0
    %v3425 = vsel %vm60, %v3371, 0
    %v3428 = vsel %vm60, %v3372, 0
    %v3431 = vsel %vm60, %v3373, 0
    %v3434 = vsel %vm60, %v3374, 0
    %v3437 = vsel %vm60, %v3375, 0
    %v3440 = vsel %vm60, %v3376, 0
    %3442 = vmatprep.subr.mxu0 0.0
    %3443 = vmatpush1.xpose.msra.mxu0 %v3419
    %3444 = vmatprep.subr.mxu0 0.0
    %3445 = vmatpush1.xpose.msra.mxu0 %v3422
    %3446 = vmatprep.subr.mxu0 0.0
    %3447 = vmatpush1.xpose.msra.mxu0 %v3425
    %3448 = vmatprep.subr.mxu0 0.0
    %3449 = vmatpush1.xpose.msra.mxu0 %v3428
    %3450 = vmatprep.subr.mxu0 0.0
    %3451 = vmatpush1.xpose.msra.mxu0 %v3431
    %3452 = vmatprep.subr.mxu0 0.0
    %3453 = vmatpush1.xpose.msra.mxu0 %v3434
    %3454 = vmatprep.subr.mxu0 0.0
    %3455 = vmatpush1.xpose.msra.mxu0 %v3437
    %3456 = vmatprep.subr.mxu0 0.0
    %3457 = vmatpush1.xpose.msra.mxu0 %v3440
    %3458 = vmatprep.subr.mxu0 0.0
    %3459 = vmatpush1.xpose.msra.mxu0 0.0
    %3460 = vmatprep.subr.mxu0 0.0
    %3461 = vmatpush1.xpose.msra.mxu0 0.0
    %3462 = vmatprep.subr.mxu0 0.0
    %3463 = vmatpush1.xpose.msra.mxu0 0.0
    %3464 = vmatprep.subr.mxu0 0.0
    %3465 = vmatpush1.xpose.msra.mxu0 0.0
    %3466 = vmatprep.subr.mxu0 0.0
    %3467 = vmatpush1.xpose.msra.mxu0 0.0
    %3468 = vmatprep.subr.mxu0 0.0
    %3469 = vmatpush1.xpose.msra.mxu0 0.0
    %3470 = vmatprep.subr.mxu0 0.0
    %3471 = vmatpush1.xpose.msra.mxu0 0.0
    %3472 = vmatprep.subr.mxu0 0.0
    %3473 = vmatpush1.xpose.msra.mxu0 0.0
    %3474 = vmatprep.subr.mxu0 0.0
    %3475 = vmatpush1.xpose.msra.mxu0 0.0
    %3476 = vmatprep.subr.mxu0 0.0
    %3477 = vmatpush1.xpose.msra.mxu0 0.0
    %3478 = vmatprep.subr.mxu0 0.0
    %3479 = vmatpush1.xpose.msra.mxu0 0.0
    %3480 = vmatprep.subr.mxu0 0.0
    %3481 = vmatpush1.xpose.msra.mxu0 0.0
    %3482 = vmatprep.subr.mxu0 0.0
    %3483 = vmatpush1.xpose.msra.mxu0 0.0
    %3484 = vmatprep.subr.mxu0 0.0
    %3485 = vmatpush1.xpose.msra.mxu0 0.0
    %3486 = vmatprep.subr.mxu0 0.0
    %3487 = vmatpush1.xpose.msra.mxu0 0.0
    %3488 = vmatprep.subr.mxu0 0.0
    %3489 = vmatpush1.xpose.msra.mxu0 0.0
    %3490 = vmatprep.subr.mxu0 0.0
    %3491 = vmatpush1.xpose.msra.mxu0 0.0
    %3492 = vmatprep.subr.mxu0 0.0
    %3493 = vmatpush1.xpose.msra.mxu0 0.0
    %3494 = vmatprep.subr.mxu0 0.0
    %3495 = vmatpush1.xpose.msra.mxu0 0.0
    %3496 = vmatprep.subr.mxu0 0.0
    %3497 = vmatpush1.xpose.msra.mxu0 0.0
    %3498 = vmatprep.subr.mxu0 0.0
    %3499 = vmatpush1.xpose.msra.mxu0 0.0
    %3500 = vmatprep.subr.mxu0 0.0
    %3501 = vmatpush1.xpose.msra.mxu0 0.0
    %3502 = vmatprep.subr.mxu0 0.0
    %3503 = vmatpush1.xpose.msra.mxu0 0.0
    %3504 = vmatprep.subr.mxu0 0.0
    %3505 = vmatpush1.xpose.msra.mxu0 0.0
    %3506 = vmatprep.mubr.f32.mxu0 0.0
    %3507 = vmatmul.mubr.f32.gmra.mrb[0].mxu0 %v3395
    %v3508 = vpop.f32.mrb[0].mxu0
    %v3509 = vadd.f32 %v3392, %v3508
    %v3510 = vpop.f32.mrb[0].mxu0
    %3511 = vmatprep.mubr.f32.mxu0 0.0
    %3512 = vmatmul.mubr.f32.gmra.mrb[0].mxu0 %v3398
    %v3513 = vpop.f32.mrb[0].mxu0
    %v3514 = vadd.f32 %v3392, %v3513
    %v3515 = vpop.f32.mrb[0].mxu0
    %3516 = vmatprep.mubr.f32.mxu0 0.0
    %3517 = vmatmul.mubr.f32.gmra.mrb[0].mxu0 %v3401
    %v3518 = vpop.f32.mrb[0].mxu0
    %v3519 = vadd.f32 %v3392, %v3518
    %v3520 = vpop.f32.mrb[0].mxu0
    %3521 = vmatprep.mubr.f32.mxu0 0.0
    %3522 = vmatmul.mubr.f32.gmra.mrb[0].mxu0 %v3404
    %v3523 = vpop.f32.mrb[0].mxu0
    %v3524 = vadd.f32 %v3392, %v3523
    %v3525 = vpop.f32.mrb[0].mxu0
    %3526 = vmatprep.mubr.f32.mxu0 0.0
    %3527 = vmatmul.mubr.f32.gmra.mrb[0].mxu0 %v3407
    %v3528 = vpop.f32.mrb[0].mxu0
    %v3529 = vadd.f32 %v3392, %v3528
    %v3530 = vpop.f32.mrb[0].mxu0
    %3531 = vmatprep.mubr.f32.mxu0 0.0
    %3532 = vmatmul.mubr.f32.gmra.mrb[0].mxu0 %v3410
    %v3533 = vpop.f32.mrb[0].mxu0
    %v3534 = vadd.f32 %v3392, %v3533
    %v3535 = vpop.f32.mrb[0].mxu0
    %3536 = vmatprep.mubr.f32.mxu0 0.0
    %3537 = vmatmul.mubr.f32.gmra.mrb[0].mxu0 %v3413
    %v3538 = vpop.f32.mrb[0].mxu0
    %v3539 = vadd.f32 %v3392, %v3538
    %v3540 = vpop.f32.mrb[0].mxu0
    %3541 = vmatprep.mubr.f32.mxu0 0.0
    %3542 = vmatmul.mubr.f32.gmra.mrb[0].mxu0 %v3416
    %v3543 = vpop.f32.mrb[0].mxu0
    %v3544 = vadd.f32 %v3392, %v3543
    %v3545 = vpop.f32.mrb[0].mxu0
    %3546 = vdwg.mxu0
    %v3547 = vsel %vm214, %v3509, -inf
    %3548 = vmax.xlane.f32.xlu0 %v3547
    %v3549 = vpop.xlane.xlu0 %3548
    %v3550 = vsel %vm214, %v3514, -inf
    %3551 = vmax.xlane.f32.xlu0 %v3550
    %v3552 = vpop.xlane.xlu0 %3551
    %v3553 = vsel %vm214, %v3519, -inf
    %3554 = vmax.xlane.f32.xlu0 %v3553
    %v3555 = vpop.xlane.xlu0 %3554
    %v3556 = vsel %vm214, %v3524, -inf
    %3557 = vmax.xlane.f32.xlu0 %v3556
    %v3558 = vpop.xlane.xlu0 %3557
    %v3559 = vsel %vm214, %v3529, -inf
    %3560 = vmax.xlane.f32.xlu0 %v3559
    %v3561 = vpop.xlane.xlu0 %3560
    %v3562 = vsel %vm214, %v3534, -inf
    %3563 = vmax.xlane.f32.xlu0 %v3562
    %v3564 = vpop.xlane.xlu0 %3563
    %v3565 = vsel %vm214, %v3539, -inf
    %3566 = vmax.xlane.f32.xlu0 %v3565
    %v3567 = vpop.xlane.xlu0 %3566
    %v3568 = vsel %vm214, %v3544, -inf
    %3569 = vmax.xlane.f32.xlu0 %v3568
    %v3570 = vpop.xlane.xlu0 %3569
    %v3571 = vsub.f32 %v3509, %v3549
    %v3572 = vsub.f32 %v3514, %v3552
    %v3573 = vsub.f32 %v3519, %v3555
    %v3574 = vsub.f32 %v3524, %v3558
    %v3575 = vsub.f32 %v3529, %v3561
    %v3576 = vsub.f32 %v3534, %v3564
    %v3577 = vsub.f32 %v3539, %v3567
    %v3578 = vsub.f32 %v3544, %v3570
    %v3579 = vmul.f32 %v3571, 1.442695
    %v3580 = vpow.pop %v3579
    %v3581 = vmul.f32 %v3572, 1.442695
    %v3582 = vpow.pop %v3581
    %v3583 = vmul.f32 %v3573, 1.442695
    %v3584 = vpow.pop %v3583
    %v3585 = vmul.f32 %v3574, 1.442695
    %v3586 = vpow.pop %v3585
    %v3587 = vmul.f32 %v3575, 1.442695
    %v3588 = vpow.pop %v3587
    %v3589 = vmul.f32 %v3576, 1.442695
    %v3590 = vpow.pop %v3589
    %v3591 = vmul.f32 %v3577, 1.442695
    %v3592 = vpow.pop %v3591
    %v3593 = vmul.f32 %v3578, 1.442695
    %v3594 = vpow.pop %v3593
    %v3595 = vsel %vm214, %v3580, 0.0
    %3596 = vadd.xlane.f32.xlu0 %v3595
    %v3597 = vpop.xlane.xlu0 %3596
    %v3598 = vsel %vm214, %v3582, 0.0
    %3599 = vadd.xlane.f32.xlu0 %v3598
    %v3600 = vpop.xlane.xlu0 %3599
    %v3601 = vsel %vm214, %v3584, 0.0
    %3602 = vadd.xlane.f32.xlu0 %v3601
    %v3603 = vpop.xlane.xlu0 %3602
    %v3604 = vsel %vm214, %v3586, 0.0
    %3605 = vadd.xlane.f32.xlu0 %v3604
    %v3606 = vpop.xlane.xlu0 %3605
    %v3607 = vsel %vm214, %v3588, 0.0
    %3608 = vadd.xlane.f32.xlu0 %v3607
    %v3609 = vpop.xlane.xlu0 %3608
    %v3610 = vsel %vm214, %v3590, 0.0
    %3611 = vadd.xlane.f32.xlu0 %v3610
    %v3612 = vpop.xlane.xlu0 %3611
    %v3613 = vsel %vm214, %v3592, 0.0
    %3614 = vadd.xlane.f32.xlu0 %v3613
    %v3615 = vpop.xlane.xlu0 %3614
    %v3616 = vsel %vm214, %v3594, 0.0
    %3617 = vadd.xlane.f32.xlu0 %v3616
    %v3618 = vpop.xlane.xlu0 %3617
    %v3619 = vrcp.pop %v3597
    %v3620 = vrcp.pop %v3600
    %v3621 = vrcp.pop %v3603
    %v3622 = vrcp.pop %v3606
    %v3623 = vrcp.pop %v3609
    %v3624 = vrcp.pop %v3612
    %v3625 = vrcp.pop %v3615
    %v3626 = vrcp.pop %v3618
    %v3627 = vmul.f32 %v3597, %v3619
    %v3628 = vmul.f32 %v3600, %v3620
    %v3629 = vmul.f32 %v3603, %v3621
    %v3630 = vmul.f32 %v3606, %v3622
    %v3631 = vmul.f32 %v3609, %v3623
    %v3632 = vmul.f32 %v3612, %v3624
    %v3633 = vmul.f32 %v3615, %v3625
    %v3634 = vmul.f32 %v3618, %v3626
    %v3635 = vsub.f32 2.0, %v3627
    %v3636 = vsub.f32 2.0, %v3628
    %v3637 = vsub.f32 2.0, %v3629
    %v3638 = vsub.f32 2.0, %v3630
    %v3639 = vsub.f32 2.0, %v3631
    %v3640 = vsub.f32 2.0, %v3632
    %v3641 = vsub.f32 2.0, %v3633
    %v3642 = vsub.f32 2.0, %v3634
    %v3643 = vmul.f32 %v3619, %v3635
    %v3644 = vmul.f32 %v3620, %v3636
    %v3645 = vmul.f32 %v3621, %v3637
    %v3646 = vmul.f32 %v3622, %v3638
    %v3647 = vmul.f32 %v3623, %v3639
    %v3648 = vmul.f32 %v3624, %v3640
    %v3649 = vmul.f32 %v3625, %v3641
    %v3650 = vmul.f32 %v3626, %v3642
    %v3651 = vmul.f32 %v3580, %v3643
    %v3652 = vmul.f32 %v3582, %v3644
    %v3653 = vmul.f32 %v3584, %v3645
    %v3654 = vmul.f32 %v3586, %v3646
    %v3655 = vmul.f32 %v3588, %v3647
    %v3656 = vmul.f32 %v3590, %v3648
    %v3657 = vmul.f32 %v3592, %v3649
    %v3658 = vmul.f32 %v3594, %v3650
    %v3660 = vsel %vm214, %v3651, 0
    %v3663 = vsel %vm214, %v3652, 0
    %v3666 = vsel %vm214, %v3653, 0
    %v3669 = vsel %vm214, %v3654, 0
    %v3672 = vsel %vm214, %v3655, 0
    %v3675 = vsel %vm214, %v3656, 0
    %v3678 = vsel %vm214, %v3657, 0
    %v3681 = vsel %vm214, %v3658, 0
    %3683 = vmatprep.subr.mxu0 0.0
    %3684 = vmatpush1.msra.mxu0 %v3378
    %3685 = vmatprep.subr.mxu0 0.0
    %3686 = vmatpush1.msra.mxu0 %v3379
    %3687 = vmatprep.subr.mxu0 0.0
    %3688 = vmatpush1.msra.mxu0 %v3380
    %3689 = vmatprep.subr.mxu0 0.0
    %3690 = vmatpush1.msra.mxu0 %v3381
    %3691 = vmatprep.subr.mxu0 0.0
    %3692 = vmatpush1.msra.mxu0 %v3382
    %3693 = vmatprep.subr.mxu0 0.0
    %3694 = vmatpush1.msra.mxu0 %v3383
    %3695 = vmatprep.subr.mxu0 0.0
    %3696 = vmatpush1.msra.mxu0 %v3384
    %3697 = vmatprep.subr.mxu0 0.0
    %3698 = vmatpush1.msra.mxu0 %v3385
    %3699 = vmatprep.subr.mxu0 0.0
    %3700 = vmatpush1.msra.mxu0 0.0
    %3701 = vmatprep.subr.mxu0 0.0
    %3702 = vmatpush1.msra.mxu0 0.0
    %3703 = vmatprep.subr.mxu0 0.0
    %3704 = vmatpush1.msra.mxu0 0.0
    %3705 = vmatprep.subr.mxu0 0.0
    %3706 = vmatpush1.msra.mxu0 0.0
    %3707 = vmatprep.subr.mxu0 0.0
    %3708 = vmatpush1.msra.mxu0 0.0
    %3709 = vmatprep.subr.mxu0 0.0
    %3710 = vmatpush1.msra.mxu0 0.0
    %3711 = vmatprep.subr.mxu0 0.0
    %3712 = vmatpush1.msra.mxu0 0.0
    %3713 = vmatprep.subr.mxu0 0.0
    %3714 = vmatpush1.msra.mxu0 0.0
    %3715 = vmatprep.subr.mxu0 0.0
    %3716 = vmatpush1.msra.mxu0 0.0
    %3717 = vmatprep.subr.mxu0 0.0
    %3718 = vmatpush1.msra.mxu0 0.0
    %3719 = vmatprep.subr.mxu0 0.0
    %3720 = vmatpush1.msra.mxu0 0.0
    %3721 = vmatprep.subr.mxu0 0.0
    %3722 = vmatpush1.msra.mxu0 0.0
    %3723 = vmatprep.subr.mxu0 0.0
    %3724 = vmatpush1.msra.mxu0 0.0
    %3725 = vmatprep.subr.mxu0 0.0
    %3726 = vmatpush1.msra.mxu0 0.0
    %3727 = vmatprep.subr.mxu0 0.0
    %3728 = vmatpush1.msra.mxu0 0.0
    %3729 = vmatprep.subr.mxu0 0.0
    %3730 = vmatpush1.msra.mxu0 0.0
    %3731 = vmatprep.subr.mxu0 0.0
    %3732 = vmatpush1.msra.mxu0 0.0
    %3733 = vmatprep.subr.mxu0 0.0
    %3734 = vmatpush1.msra.mxu0 0.0
    %3735 = vmatprep.subr.mxu0 0.0
    %3736 = vmatpush1.msra.mxu0 0.0
    %3737 = vmatprep.subr.mxu0 0.0
    %3738 = vmatpush1.msra.mxu0 0.0
    %3739 = vmatprep.subr.mxu0 0.0
    %3740 = vmatpush1.msra.mxu0 0.0
    %3741 = vmatprep.subr.mxu0 0.0
    %3742 = vmatpush1.msra.mxu0 0.0
    %3743 = vmatprep.subr.mxu0 0.0
    %3744 = vmatpush1.msra.mxu0 0.0
    %3745 = vmatprep.subr.mxu0 0.0
    %3746 = vmatpush1.msra.mxu0 0.0
    %3747 = vmatprep.mubr.f32.mxu0 0.0
    %3748 = vmatmul.mubr.f32.gmra.mrb[0].mxu0 %v3660
    %v3749 = vpop.f32.mrb[0].mxu0
    %v3750 = vadd.f32 0.0, %v3749
    %v3751 = vpop.f32.mrb[0].mxu0
    %3752 = vmatprep.mubr.f32.mxu0 0.0
    %3753 = vmatmul.mubr.f32.gmra.mrb[0].mxu0 %v3663
    %v3754 = vpop.f32.mrb[0].mxu0
    %v3755 = vadd.f32 0.0, %v3754
    %v3756 = vpop.f32.mrb[0].mxu0
    %3757 = vmatprep.mubr.f32.mxu0 0.0
    %3758 = vmatmul.mubr.f32.gmra.mrb[0].mxu0 %v3666
    %v3759 = vpop.f32.mrb[0].mxu0
    %v3760 = vadd.f32 0.0, %v3759
    %v3761 = vpop.f32.mrb[0].mxu0
    %3762 = vmatprep.mubr.f32.mxu0 0.0
    %3763 = vmatmul.mubr.f32.gmra.mrb[0].mxu0 %v3669
    %v3764 = vpop.f32.mrb[0].mxu0
    %v3765 = vadd.f32 0.0, %v3764
    %v3766 = vpop.f32.mrb[0].mxu0
    %3767 = vmatprep.mubr.f32.mxu0 0.0
    %3768 = vmatmul.mubr.f32.gmra.mrb[0].mxu0 %v3672
    %v3769 = vpop.f32.mrb[0].mxu0
    %v3770 = vadd.f32 0.0, %v3769
    %v3771 = vpop.f32.mrb[0].mxu0
    %3772 = vmatprep.mubr.f32.mxu0 0.0
    %3773 = vmatmul.mubr.f32.gmra.mrb[0].mxu0 %v3675
    %v3774 = vpop.f32.mrb[0].mxu0
    %v3775 = vadd.f32 0.0, %v3774
    %v3776 = vpop.f32.mrb[0].mxu0
    %3777 = vmatprep.mubr.f32.mxu0 0.0
    %3778 = vmatmul.mubr.f32.gmra.mrb[0].mxu0 %v3678
    %v3779 = vpop.f32.mrb[0].mxu0
    %v3780 = vadd.f32 0.0, %v3779
    %v3781 = vpop.f32.mrb[0].mxu0
    %3782 = vmatprep.mubr.f32.mxu0 0.0
    %3783 = vmatmul.mubr.f32.gmra.mrb[0].mxu0 %v3681
    %v3784 = vpop.f32.mrb[0].mxu0
    %v3785 = vadd.f32 0.0, %v3784
    %v3786 = vpop.f32.mrb[0].mxu0
    %3787 = vdwg.mxu0
    %3796 = vrot.lane.b32.xlu0 %v2828, 32
    %v3797 = vpop.permute.xlu0 %3796
    %3798 = vrot.lane.b32.xlu0 %v2833, 32
    %v3799 = vpop.permute.xlu0 %3798
    %3800 = vrot.lane.b32.xlu0 %v2838, 32
    %v3801 = vpop.permute.xlu0 %3800
    %3802 = vrot.lane.b32.xlu0 %v2843, 32
    %v3803 = vpop.permute.xlu0 %3802
    %3804 = vrot.lane.b32.xlu0 %v2848, 32
    %v3805 = vpop.permute.xlu0 %3804
    %3806 = vrot.lane.b32.xlu0 %v2853, 32
    %v3807 = vpop.permute.xlu0 %3806
    %3808 = vrot.lane.b32.xlu0 %v2858, 32
    %v3809 = vpop.permute.xlu0 %3808
    %3810 = vrot.lane.b32.xlu0 %v2863, 32
    %v3811 = vpop.permute.xlu0 %3810
    %3828 = vrot.lane.b32.xlu0 %v3313, 64
    %v3829 = vpop.permute.xlu0 %3828
    %3830 = vrot.lane.b32.xlu0 %v3318, 64
    %v3831 = vpop.permute.xlu0 %3830
    %3832 = vrot.lane.b32.xlu0 %v3323, 64
    %v3833 = vpop.permute.xlu0 %3832
    %3834 = vrot.lane.b32.xlu0 %v3328, 64
    %v3835 = vpop.permute.xlu0 %3834
    %3836 = vrot.lane.b32.xlu0 %v3333, 64
    %v3837 = vpop.permute.xlu0 %3836
    %3838 = vrot.lane.b32.xlu0 %v3338, 64
    %v3839 = vpop.permute.xlu0 %3838
    %3840 = vrot.lane.b32.xlu0 %v3343, 64
    %v3841 = vpop.permute.xlu0 %3840
    %3842 = vrot.lane.b32.xlu0 %v3348, 64
    %v3843 = vpop.permute.xlu0 %3842
    %3860 = vrot.lane.b32.xlu0 %v3750, 96
    %v3861 = vpop.permute.xlu0 %3860
    %3862 = vrot.lane.b32.xlu0 %v3755, 96
    %v3863 = vpop.permute.xlu0 %3862
    %3864 = vrot.lane.b32.xlu0 %v3760, 96
    %v3865 = vpop.permute.xlu0 %3864
    %3866 = vrot.lane.b32.xlu0 %v3765, 96
    %v3867 = vpop.permute.xlu0 %3866
    %3868 = vrot.lane.b32.xlu0 %v3770, 96
    %v3869 = vpop.permute.xlu0 %3868
    %3870 = vrot.lane.b32.xlu0 %v3775, 96
    %v3871 = vpop.permute.xlu0 %3870
    %3872 = vrot.lane.b32.xlu0 %v3780, 96
    %v3873 = vpop.permute.xlu0 %3872
    %3874 = vrot.lane.b32.xlu0 %v3785, 96
    %v3875 = vpop.permute.xlu0 %3874
    %v3884 = vsel %vm60, %v2391, %v3797
    %v3885 = vsel %vm60, %v2396, %v3799
    %v3886 = vsel %vm60, %v2401, %v3801
    %v3887 = vsel %vm60, %v2406, %v3803
    %v3888 = vsel %vm60, %v2411, %v3805
    %v3889 = vsel %vm60, %v2416, %v3807
    %v3890 = vsel %vm60, %v2421, %v3809
    %v3891 = vsel %vm60, %v2426, %v3811
    %v3892 = vsel %vm214, %v3884, %v3829
    %v3893 = vsel %vm214, %v3885, %v3831
    %v3894 = vsel %vm214, %v3886, %v3833
    %v3895 = vsel %vm214, %v3887, %v3835
    %v3896 = vsel %vm214, %v3888, %v3837
    %v3897 = vsel %vm214, %v3889, %v3839
    %v3898 = vsel %vm214, %v3890, %v3841
    %v3899 = vsel %vm214, %v3891, %v3843
    %v3900 = vsel %vm1927, %v3892, %v3861
    %v3901 = vsel %vm1927, %v3893, %v3863
    %v3902 = vsel %vm1927, %v3894, %v3865
    %v3903 = vsel %vm1927, %v3895, %v3867
    %v3904 = vsel %vm1927, %v3896, %v3869
    %v3905 = vsel %vm1927, %v3897, %v3871
    %v3906 = vsel %vm1927, %v3898, %v3873
    %v3907 = vsel %vm1927, %v3899, %v3875
    %3908 = vst [vmem:[#allocation2 + $0x8] sm:$0xff] %v3900
    %3909 = vst [vmem:[#allocation2 + $0x18] sm:$0xff] %v3901
    %3910 = vst [vmem:[#allocation2 + $0x28] sm:$0xff] %v3902
    %3911 = vst [vmem:[#allocation2 + $0x38] sm:$0xff] %v3903
    %3912 = vst [vmem:[#allocation2 + $0x48] sm:$0xff] %v3904
    %3913 = vst [vmem:[#allocation2 + $0x58] sm:$0xff] %v3905
    %3914 = vst [vmem:[#allocation2 + $0x68] sm:$0xff] %v3906
    %3915 = vst [vmem:[#allocation2 + $0x78] sm:$0xff] %v3907
    %3924 = vrot.lane.b32.xlu0 %v3509, 64
    %v3925 = vpop.permute.xlu0 %3924
    %3926 = vrot.lane.b32.xlu0 %v3514, 64
    %v3927 = vpop.permute.xlu0 %3926
    %3928 = vrot.lane.b32.xlu0 %v3519, 64
    %v3929 = vpop.permute.xlu0 %3928
    %3930 = vrot.lane.b32.xlu0 %v3524, 64
    %v3931 = vpop.permute.xlu0 %3930
    %3932 = vrot.lane.b32.xlu0 %v3529, 64
    %v3933 = vpop.permute.xlu0 %3932
    %3934 = vrot.lane.b32.xlu0 %v3534, 64
    %v3935 = vpop.permute.xlu0 %3934
    %3936 = vrot.lane.b32.xlu0 %v3539, 64
    %v3937 = vpop.permute.xlu0 %3936
    %3938 = vrot.lane.b32.xlu0 %v3544, 64
    %v3939 = vpop.permute.xlu0 %3938
    %v3948 = vsel %vm214, %v3072, %v3925
    %v3949 = vsel %vm214, %v3077, %v3927
    %v3950 = vsel %vm214, %v3082, %v3929
    %v3951 = vsel %vm214, %v3087, %v3931
    %v3952 = vsel %vm214, %v3092, %v3933
    %v3953 = vsel %vm214, %v3097, %v3935
    %v3954 = vsel %vm214, %v3102, %v3937
    %v3955 = vsel %vm214, %v3107, %v3939
    %3956 = vst [vmem:[#allocation4 + $0x18] sm:$0xff] %v3948
    %3957 = vst [vmem:[#allocation4 + $0x38] sm:$0xff] %v3949
    %3958 = vst [vmem:[#allocation4 + $0x58] sm:$0xff] %v3950
    %3959 = vst [vmem:[#allocation4 + $0x78] sm:$0xff] %v3951
    %3960 = vst [vmem:[#allocation4 + $0x98] sm:$0xff] %v3952
    %3961 = vst [vmem:[#allocation4 + $0xb8] sm:$0xff] %v3953
    %3962 = vst [vmem:[#allocation4 + $0xd8] sm:$0xff] %v3954
    %3963 = vst [vmem:[#allocation4 + $0xf8] sm:$0xff] %v3955
    // Predicated region
    $region18: #{tpu_custom_call.1} parent=1 // pred_check
      _
    $region19: #{tpu_custom_call.1} parent=1 // pred_check_branch
      %3965 = sbr.rel (0) target = $region21
    $region20: #{tpu_custom_call.1} parent=1 // pred_region
      %s3967 = ssub.s32 2048, 2048
      %3968 = vsyncadd [#allocation3], %s3967
      %s3969 = sshll.u32 [#allocation2], 4
      %s3970 = int_to_ptr.vmem [resolvable:$true] %s3969
      %3975 = dma.vmem_to_hbm [thread:$0]  %s3970, 2048, %s4, [#allocation3], 256, 256, 16
    $region21: #{tpu_custom_call.1} parent=1 // pred_fallthru
      _
    // Predicated region
    $region22: #{tpu_custom_call.1} parent=1 // pred_check
      _
    $region23: #{tpu_custom_call.1} parent=1 // pred_check_branch
      %3977 = sbr.rel (0) target = $region25
    $region24: #{tpu_custom_call.1} parent=1 // pred_region
      %s3979 = ssub.s32 4096, 4096
      %3980 = vsyncadd [#allocation5], %s3979
      %s3981 = sshll.u32 [#allocation4], 4
      %s3982 = int_to_ptr.vmem [resolvable:$true] %s3981
      %3987 = dma.vmem_to_hbm [thread:$0]  %s3982, 4096, %s5, [#allocation5], 512, 512, 32
    $region25: #{tpu_custom_call.1} parent=1 // pred_fallthru
      _
    // Predicated region
    $region26: #{tpu_custom_call.1} parent=1 // pred_check
      _
    $region27: #{tpu_custom_call.1} parent=1 // pred_check_branch
      %3989 = sbr.rel (0) target = $region29
    $region28: #{tpu_custom_call.1} parent=1 // pred_region
      %3990 = dma.done [#allocation3], 2048
    $region29: #{tpu_custom_call.1} parent=1 // pred_fallthru
      _
    // Predicated region
    $region30: #{tpu_custom_call.1} parent=1 // pred_check
      _
    $region31: #{tpu_custom_call.1} parent=1 // pred_check_branch
      %3992 = sbr.rel (0) target = $region33
    $region32: #{tpu_custom_call.1} parent=1 // pred_region
      %3993 = dma.done [#allocation5], 4096
    $region33: #{tpu_custom_call.1} parent=1 // pred_fallthru
      _
    %3994 = vsyncpa [#allocation3], 1
    %3995 = vsyncpa [#allocation5], 1

</llo_original>
